<compile_context>
chip_gen: v6e
topology: v6e:2x2x1
jax: 0.10.0
libtpu: 0.0.40
codegen_flags: <defaults>
</compile_context>

<pallas_src>
import functools

import jax
import jax.numpy as jnp
from jax.experimental import pallas as pl
from jax.experimental.pallas import tpu as pltpu


# ----------------------------------------------------------------------------
# Pallas kernels (one grid step == one encoder layer)
# ----------------------------------------------------------------------------
def _qkv_kernel(x_ref, w_ref, b_ref, o_ref):
    # Fused K|V|Q projection: o = x @ [Wk|Wv|Wq] + [bk|bv|bq]
    o_ref[0] = (
        jnp.dot(x_ref[...], w_ref[0], preferred_element_type=jnp.float32)
        + b_ref[0]
    )


def _attention_kernel(q_ref, k_ref, v_ref, ctx_ref, attn_ref, *, scale):
    # All heads of one layer at once: q,k,v are (BH, L, d) blocks.
    q = q_ref[0]
    k = k_ref[0]
    v = v_ref[0]
    s = jnp.einsum("bqd,bkd->bqk", q, k,
                   preferred_element_type=jnp.float32) * scale
    m = jnp.max(s, axis=-1, keepdims=True)
    e = jnp.exp(s - m)
    p = e * pl.reciprocal(jnp.sum(e, axis=-1, keepdims=True))
    ctx_ref[0] = jnp.einsum("bqk,bkd->bqd", p, v,
                            preferred_element_type=jnp.float32)
    attn_ref[0] = p


def _ln(z, g, b):
    # LayerNorm over last dim, eps=1e-5, biased variance (PyTorch semantics).
    mu = jnp.mean(z, axis=-1, keepdims=True)
    var = jnp.mean((z - mu) * (z - mu), axis=-1, keepdims=True)
    return (z - mu) * jax.lax.rsqrt(var + 1e-5) * g + b


def _post_attn_kernel(ctx_ref, x_ref, wo_ref, bo_ref, g1_ref, be1_ref,
                      w1_ref, b1_ref, w2_ref, b2_ref, g2_ref, be2_ref, o_ref):
    # output-proj + residual + LN + FFN (two 1x1 convs) + residual + LN, fused.
    ctx = ctx_ref[0]          # (B*L, D)
    resid = x_ref[...]        # (B*L, D)  -- original inputs
    proj = jnp.dot(ctx, wo_ref[0], preferred_element_type=jnp.float32) + bo_ref[0]
    a = _ln(resid + proj, g1_ref[0], be1_ref[0])
    h = jnp.maximum(
        jnp.dot(a, w1_ref[0], preferred_element_type=jnp.float32) + b1_ref[0], 0.0)
    f = jnp.dot(h, w2_ref[0], preferred_element_type=jnp.float32) + b2_ref[0]
    o_ref[0] = _ln(a + f, g2_ref[0], be2_ref[0])


# ----------------------------------------------------------------------------
# Encoder forward (Pallas-backed, 3 pallas_calls for the whole model)
# ----------------------------------------------------------------------------
def encoder_forward(inputs, stacked, num_heads):
    B, L, D = inputs.shape
    num_layers = stacked["wqkv"].shape[0]
    d = D // num_heads
    BH = B * num_heads
    Lp = (B * L * D) // (BH * d)          # raw .view() sequence length (== L)
    F = stacked["w1"].shape[2]
    N = B * L
    scale = float((d // num_heads) ** (-0.5))   # faithful PyTorch quirk

    x2d = inputs.reshape(N, D)
    par = pltpu.CompilerParams(dimension_semantics=("parallel",))

    # ---- 1) fused K|V|Q projection, all layers in one call ------------------
    qkv = pl.pallas_call(
        _qkv_kernel,
        out_shape=jax.ShapeDtypeStruct((num_layers, N, 3 * D), jnp.float32),
        grid=(num_layers,),
        in_specs=[
            pl.BlockSpec((N, D), lambda l: (0, 0)),
            pl.BlockSpec((1, D, 3 * D), lambda l: (l, 0, 0)),
            pl.BlockSpec((1, 1, 3 * D), lambda l: (l, 0, 0)),
        ],
        out_specs=pl.BlockSpec((1, N, 3 * D), lambda l: (l, 0, 0)),
        compiler_params=par,
    )(x2d, stacked["wqkv"], stacked["bqkv"])

    # Raw .view() head split (pure contiguous reinterpretation), as in PyTorch.
    k = qkv[:, :, 0 * D:1 * D].reshape(num_layers, BH, Lp, d)
    v = qkv[:, :, 1 * D:2 * D].reshape(num_layers, BH, Lp, d)
    q = qkv[:, :, 2 * D:3 * D].reshape(num_layers, BH, Lp, d)

    # ---- 2) batched attention: all heads per layer, layers on the grid ------
    ctx, attn = pl.pallas_call(
        functools.partial(_attention_kernel, scale=scale),
        out_shape=(
            jax.ShapeDtypeStruct((num_layers, BH, Lp, d), jnp.float32),
            jax.ShapeDtypeStruct((num_layers, BH, Lp, Lp), jnp.float32),
        ),
        grid=(num_layers,),
        in_specs=[
            pl.BlockSpec((1, BH, Lp, d), lambda l: (l, 0, 0, 0)),
            pl.BlockSpec((1, BH, Lp, d), lambda l: (l, 0, 0, 0)),
            pl.BlockSpec((1, BH, Lp, d), lambda l: (l, 0, 0, 0)),
        ],
        out_specs=(
            pl.BlockSpec((1, BH, Lp, d), lambda l: (l, 0, 0, 0)),
            pl.BlockSpec((1, BH, Lp, Lp), lambda l: (l, 0, 0, 0)),
        ),
        compiler_params=par,
    )(q, k, v)

    # Raw .view() head merge back to [B*L, D] per layer.
    ctx2d = ctx.reshape(num_layers, N, D)

    # ---- 3) output-proj + add&LN + FFN + add&LN, fused per layer ------------
    out_all = pl.pallas_call(
        _post_attn_kernel,
        out_shape=jax.ShapeDtypeStruct((num_layers, N, D), jnp.float32),
        grid=(num_layers,),
        in_specs=[
            pl.BlockSpec((1, N, D), lambda l: (l, 0, 0)),   # ctx
            pl.BlockSpec((N, D), lambda l: (0, 0)),         # residual = inputs
            pl.BlockSpec((1, D, D), lambda l: (l, 0, 0)),   # Wo
            pl.BlockSpec((1, 1, D), lambda l: (l, 0, 0)),   # bo
            pl.BlockSpec((1, 1, D), lambda l: (l, 0, 0)),   # ln1 gamma
            pl.BlockSpec((1, 1, D), lambda l: (l, 0, 0)),   # ln1 beta
            pl.BlockSpec((1, D, F), lambda l: (l, 0, 0)),   # W1 (1x1 conv)
            pl.BlockSpec((1, 1, F), lambda l: (l, 0, 0)),   # b1
            pl.BlockSpec((1, F, D), lambda l: (l, 0, 0)),   # W2 (1x1 conv)
            pl.BlockSpec((1, 1, D), lambda l: (l, 0, 0)),   # b2
            pl.BlockSpec((1, 1, D), lambda l: (l, 0, 0)),   # ln2 gamma
            pl.BlockSpec((1, 1, D), lambda l: (l, 0, 0)),   # ln2 beta
        ],
        out_specs=pl.BlockSpec((1, N, D), lambda l: (l, 0, 0)),
        compiler_params=par,
    )(ctx2d, x2d, stacked["wo"], stacked["bo"],
      stacked["ln1_g"], stacked["ln1_b"],
      stacked["w1"], stacked["b1"], stacked["w2"], stacked["b2"],
      stacked["ln2_g"], stacked["ln2_b"])

    # Encoder returns the output of the last loop iteration + all attentions.
    output = out_all[-1].reshape(B, L, D)
    attentions = [attn[l] for l in range(num_layers)]
    return output, attentions


# ----------------------------------------------------------------------------
# Parameter init (deterministic, mimics nn.Linear / nn.Conv1d default ranges)
# ----------------------------------------------------------------------------
def _init_linear(key, din, dout):
    bound = 1.0 / (din ** 0.5)
    kw, kb = jax.random.split(key)
    w = jax.random.uniform(kw, (din, dout), jnp.float32, -bound, bound)
    b = jax.random.uniform(kb, (dout,), jnp.float32, -bound, bound)
    return w, b


def init_encoder_params(key, num_layers, model_dim, ffn_dim):
    params = []
    for l in range(num_layers):
        lk = jax.random.fold_in(key, l)
        ks = jax.random.split(lk, 6)
        params.append(
            dict(
                wk=_init_linear(ks[0], model_dim, model_dim),
                wv=_init_linear(ks[1], model_dim, model_dim),
                wq=_init_linear(ks[2], model_dim, model_dim),
                wo=_init_linear(ks[3], model_dim, model_dim),
                ln1=(jnp.ones((model_dim,), jnp.float32),
                     jnp.zeros((model_dim,), jnp.float32)),
                w1=_init_linear(ks[4], model_dim, ffn_dim),
                w2=_init_linear(ks[5], ffn_dim, model_dim),
                ln2=(jnp.ones((model_dim,), jnp.float32),
                     jnp.zeros((model_dim,), jnp.float32)),
            )
        )
    return params


def stack_params(params):
    """Stack per-layer params along a leading layer axis for the Pallas path."""
    def st(fn):
        return jnp.stack([fn(p) for p in params])
    return dict(
        wqkv=st(lambda p: jnp.concatenate(
            [p["wk"][0], p["wv"][0], p["wq"][0]], axis=1)),
        bqkv=st(lambda p: jnp.concatenate(
            [p["wk"][1], p["wv"][1], p["wq"][1]])[None, :]),
        wo=st(lambda p: p["wo"][0]),
        bo=st(lambda p: p["wo"][1][None, :]),
        ln1_g=st(lambda p: p["ln1"][0][None, :]),
        ln1_b=st(lambda p: p["ln1"][1][None, :]),
        w1=st(lambda p: p["w1"][0]),
        b1=st(lambda p: p["w1"][1][None, :]),
        w2=st(lambda p: p["w2"][0]),
        b2=st(lambda p: p["w2"][1][None, :]),
        ln2_g=st(lambda p: p["ln2"][0][None, :]),
        ln2_b=st(lambda p: p["ln2"][1][None, :]),
    )


# ----------------------------------------------------------------------------
# Pure-JAX reference (for correctness check)
# ----------------------------------------------------------------------------
def encoder_forward_ref(inputs, params, num_heads):
    B, L, D = inputs.shape
    d = D // num_heads
    scale = (d // num_heads) ** (-0.5)

    def ln(z, g, b):
        mu = jnp.mean(z, axis=-1, keepdims=True)
        var = jnp.mean((z - mu) ** 2, axis=-1, keepdims=True)
        return (z - mu) / jnp.sqrt(var + 1e-5) * g + b

    attentions = []
    output = None
    for p in params:
        x = inputs
        k = (x.reshape(B * L, D) @ p["wk"][0] + p["wk"][1]).reshape(B * num_heads, -1, d)
        v = (x.reshape(B * L, D) @ p["wv"][0] + p["wv"][1]).reshape(B * num_heads, -1, d)
        q = (x.reshape(B * L, D) @ p["wq"][0] + p["wq"][1]).reshape(B * num_heads, -1, d)
        s = jnp.einsum("bqd,bkd->bqk", q, k) * scale
        attn = jax.nn.softmax(s, axis=2)
        ctx = jnp.einsum("bqk,bkd->bqd", attn, v).reshape(B, -1, D)
        proj = ctx.reshape(B * L, D) @ p["wo"][0] + p["wo"][1]
        a_out = ln(x.reshape(B * L, D) + proj, p["ln1"][0], p["ln1"][1])
        h = jnp.maximum(a_out @ p["w1"][0] + p["w1"][1], 0.0)
        f_out = h @ p["w2"][0] + p["w2"][1]
        output = ln(a_out + f_out, p["ln2"][0], p["ln2"][1]).reshape(B, L, D)
        attentions.append(attn)
    return output, attentions


# ----------------------------------------------------------------------------
if __name__ == "__main__":
    B, L = 2, 8
    model_dim, num_heads, ffn_dim, num_layers = 32, 4, 64, 2

    key = jax.random.PRNGKey(0)
    kx, kp = jax.random.split(key)
    x = jax.random.normal(kx, (B, L, model_dim), jnp.float32)
    params = init_encoder_params(kp, num_layers, model_dim, ffn_dim)
    stacked = stack_params(params)

    fwd = jax.jit(functools.partial(encoder_forward, num_heads=num_heads))
    out, attns = fwd(x, stacked)
    out = jax.block_until_ready(out)
    attns = [jax.block_until_ready(a) for a in attns]

    ref_out, ref_attns = encoder_forward_ref(x, params, num_heads)
    assert jnp.allclose(out, ref_out, atol=2e-5, rtol=2e-5), "output mismatch"
    for a, ra in zip(attns, ref_attns):
        assert jnp.allclose(a, ra, atol=2e-5, rtol=2e-5), "attention mismatch"

    print("KERNEL_OK")
</pallas_src>

<mosaic_0001>
module attributes {stable_mosaic.version = 11 : i64} {
  func.func @_qkv_kernel(%arg0: i32, %arg1: memref<16x32xf32, #tpu.memory_space<vmem>>, %arg2: memref<1x32x96xf32, #tpu.memory_space<vmem>>, %arg3: memref<1x1x96xf32, #tpu.memory_space<vmem>>, %arg4: memref<1x16x96xf32, #tpu.memory_space<vmem>>) attributes {dimension_semantics = [#tpu.dimension_semantics<parallel>], iteration_bounds = array<i64: 2>, scalar_prefetch = 0 : i64, scratch_operands = 0 : i64, tpu.core_type = #tpu.core_type<tc>, window_params = [{pipeline_mode = #tpu.pipeline_mode<synchronous>, transform_indices = @transform_0, window_bounds = array<i64: 16, 32>}, {transform_indices = @transform_1, window_bounds = array<i64: 1, 32, 96>}, {transform_indices = @transform_2, window_bounds = array<i64: 1, 1, 96>}, {transform_indices = @transform_3, window_bounds = array<i64: 1, 16, 96>}]} {
    %c0 = arith.constant 0 : index
    %c0_0 = arith.constant 0 : index
    %0 = vector.load %arg1[%c0, %c0_0] : memref<16x32xf32, #tpu.memory_space<vmem>>, vector<16x32xf32>
    %c0_1 = arith.constant 0 : index
    %c0_2 = arith.constant 0 : index
    %c0_3 = arith.constant 0 : index
    %1 = vector.load %arg2[%c0_1, %c0_2, %c0_3] : memref<1x32x96xf32, #tpu.memory_space<vmem>>, vector<1x32x96xf32>
    %2 = vector.shape_cast %1 : vector<1x32x96xf32> to vector<32x96xf32>
    %cst = arith.constant dense<0.000000e+00> : vector<16x96xf32>
    %3 = tpu.matmul %0, %2, %cst {dimension_numbers = #tpu.dot_dimension_numbers<[1], [0], [0], [1], [0, 0, 1, 1], [], []>} : vector<16x32xf32>, vector<32x96xf32>, vector<16x96xf32> -> vector<16x96xf32>
    %c0_4 = arith.constant 0 : index
    %c0_5 = arith.constant 0 : index
    %c0_6 = arith.constant 0 : index
    %4 = vector.load %arg3[%c0_4, %c0_5, %c0_6] : memref<1x1x96xf32, #tpu.memory_space<vmem>>, vector<1x1x96xf32>
    %5 = vector.shape_cast %4 : vector<1x1x96xf32> to vector<1x96xf32>
    %6 = vector.broadcast %5 : vector<1x96xf32> to vector<16x96xf32>
    %7 = arith.addf %3, %6 : vector<16x96xf32>
    %c0_7 = arith.constant 0 : index
    %c0_8 = arith.constant 0 : index
    %c0_9 = arith.constant 0 : index
    %8 = vector.load %arg4[%c0_7, %c0_8, %c0_9] : memref<1x16x96xf32, #tpu.memory_space<vmem>>, vector<1x16x96xf32>
    %9 = vector.shape_cast %8 : vector<1x16x96xf32> to vector<16x96xf32>
    %10 = vector.shape_cast %7 : vector<16x96xf32> to vector<1x16x96xf32>
    tpu.vector_store %arg4[%c0_7, %c0_8, %c0_9], %10 {strides = array<i32>} : memref<1x16x96xf32, #tpu.memory_space<vmem>>, vector<1x16x96xf32>,
    return
  }
  func.func @transform_0(%arg0: i32) -> (i32, i32) {
    %c0_i32 = arith.constant 0 : i32
    %c0_i32_0 = arith.constant 0 : i32
    %c0_i32_1 = arith.constant 0 : i32
    return %c0_i32, %c0_i32_0 : i32, i32
  }
  func.func @transform_1(%arg0: i32) -> (i32, i32, i32) {
    %c0_i32 = arith.constant 0 : i32
    %c0_i32_0 = arith.constant 0 : i32
    %c0_i32_1 = arith.constant 0 : i32
    return %arg0, %c0_i32, %c0_i32_0 : i32, i32, i32
  }
  func.func @transform_2(%arg0: i32) -> (i32, i32, i32) {
    %c0_i32 = arith.constant 0 : i32
    %c0_i32_0 = arith.constant 0 : i32
    %c0_i32_1 = arith.constant 0 : i32
    return %arg0, %c0_i32, %c0_i32_0 : i32, i32, i32
  }
  func.func @transform_3(%arg0: i32) -> (i32, i32, i32) {
    %c0_i32 = arith.constant 0 : i32
    %c0_i32_0 = arith.constant 0 : i32
    %c0_i32_1 = arith.constant 0 : i32
    return %arg0, %c0_i32, %c0_i32_0 : i32, i32, i32
  }
}

module attributes {stable_mosaic.version = 11 : i64} {
  func.func @_attention_kernel(%arg0: i32, %arg1: memref<1x8x8x8xf32, #tpu.memory_space<vmem>>, %arg2: memref<1x8x8x8xf32, #tpu.memory_space<vmem>>, %arg3: memref<1x8x8x8xf32, #tpu.memory_space<vmem>>, %arg4: memref<1x8x8x8xf32, #tpu.memory_space<vmem>>, %arg5: memref<1x8x8x8xf32, #tpu.memory_space<vmem>>) attributes {dimension_semantics = [#tpu.dimension_semantics<parallel>], iteration_bounds = array<i64: 2>, scalar_prefetch = 0 : i64, scratch_operands = 0 : i64, tpu.core_type = #tpu.core_type<tc>, window_params = [{transform_indices = @transform_0, window_bounds = array<i64: 1, 8, 8, 8>}, {transform_indices = @transform_1, window_bounds = array<i64: 1, 8, 8, 8>}, {transform_indices = @transform_2, window_bounds = array<i64: 1, 8, 8, 8>}, {transform_indices = @transform_3, window_bounds = array<i64: 1, 8, 8, 8>}, {transform_indices = @transform_4, window_bounds = array<i64: 1, 8, 8, 8>}]} {
    %c0 = arith.constant 0 : index
    %c0_0 = arith.constant 0 : index
    %c0_1 = arith.constant 0 : index
    %c0_2 = arith.constant 0 : index
    %0 = vector.load %arg1[%c0, %c0_0, %c0_1, %c0_2] : memref<1x8x8x8xf32, #tpu.memory_space<vmem>>, vector<1x8x8x8xf32>
    %1 = vector.shape_cast %0 : vector<1x8x8x8xf32> to vector<8x8x8xf32>
    %c0_3 = arith.constant 0 : index
    %c0_4 = arith.constant 0 : index
    %c0_5 = arith.constant 0 : index
    %c0_6 = arith.constant 0 : index
    %2 = vector.load %arg2[%c0_3, %c0_4, %c0_5, %c0_6] : memref<1x8x8x8xf32, #tpu.memory_space<vmem>>, vector<1x8x8x8xf32>
    %3 = vector.shape_cast %2 : vector<1x8x8x8xf32> to vector<8x8x8xf32>
    %c0_7 = arith.constant 0 : index
    %c0_8 = arith.constant 0 : index
    %c0_9 = arith.constant 0 : index
    %c0_10 = arith.constant 0 : index
    %4 = vector.load %arg3[%c0_7, %c0_8, %c0_9, %c0_10] : memref<1x8x8x8xf32, #tpu.memory_space<vmem>>, vector<1x8x8x8xf32>
    %5 = vector.shape_cast %4 : vector<1x8x8x8xf32> to vector<8x8x8xf32>
    "tpu.trace_start"() <{level = 10 : i32, message = "bqd,bkd->bqk"}> : () -> ()
    %cst = arith.constant dense<0.000000e+00> : vector<8x8x8xf32>
    %6 = tpu.matmul %1, %3, %cst {dimension_numbers = #tpu.dot_dimension_numbers<[2], [2], [1], [1], [0, 0, 0, 1, 1, 1], [0], [0]>} : vector<8x8x8xf32>, vector<8x8x8xf32>, vector<8x8x8xf32> -> vector<8x8x8xf32>
    "tpu.trace_stop"() : () -> ()
    %cst_11 = arith.constant 0.707106769 : f32
    %7 = vector.broadcast %cst_11 : f32 to vector<8x8x8xf32>
    %8 = arith.mulf %6, %7 : vector<8x8x8xf32>
    %cst_12 = arith.constant dense<0xFF800000> : vector<8x8xf32>
    %9 = vector.multi_reduction <maximumf>, %8, %cst_12 [2] : vector<8x8x8xf32> to vector<8x8xf32>
    %10 = vector.shape_cast %9 : vector<8x8xf32> to vector<8x8x1xf32>
    %11 = vector.broadcast %10 : vector<8x8x1xf32> to vector<8x8x8xf32>
    %12 = arith.subf %8, %11 : vector<8x8x8xf32>
    %13 = math.exp %12 : vector<8x8x8xf32>
    %cst_13 = arith.constant dense<0.000000e+00> : vector<8x8xf32>
    %14 = vector.multi_reduction <add>, %13, %cst_13 [2] : vector<8x8x8xf32> to vector<8x8xf32>
    %15 = vector.shape_cast %14 : vector<8x8xf32> to vector<8x8x1xf32>
    %16 = tpu.reciprocal %15 : vector<8x8x1xf32> -> vector<8x8x1xf32>
    %17 = vector.broadcast %16 : vector<8x8x1xf32> to vector<8x8x8xf32>
    %18 = arith.mulf %13, %17 : vector<8x8x8xf32>
    "tpu.trace_start"() <{level = 10 : i32, message = "bqk,bkd->bqd"}> : () -> ()
    %cst_14 = arith.constant dense<0.000000e+00> : vector<8x8x8xf32>
    %19 = tpu.matmul %18, %5, %cst_14 {dimension_numbers = #tpu.dot_dimension_numbers<[2], [1], [1], [2], [0, 0, 0, 1, 1, 2], [0], [0]>} : vector<8x8x8xf32>, vector<8x8x8xf32>, vector<8x8x8xf32> -> vector<8x8x8xf32>
    "tpu.trace_stop"() : () -> ()
    %c0_15 = arith.constant 0 : index
    %c0_16 = arith.constant 0 : index
    %c0_17 = arith.constant 0 : index
    %c0_18 = arith.constant 0 : index
    %20 = vector.load %arg4[%c0_15, %c0_16, %c0_17, %c0_18] : memref<1x8x8x8xf32, #tpu.memory_space<vmem>>, vector<1x8x8x8xf32>
    %21 = vector.shape_cast %20 : vector<1x8x8x8xf32> to vector<8x8x8xf32>
    %22 = vector.shape_cast %19 : vector<8x8x8xf32> to vector<1x8x8x8xf32>
    tpu.vector_store %arg4[%c0_15, %c0_16, %c0_17, %c0_18], %22 {strides = array<i32>} : memref<1x8x8x8xf32, #tpu.memory_space<vmem>>, vector<1x8x8x8xf32>,
    %c0_19 = arith.constant 0 : index
    %c0_20 = arith.constant 0 : index
    %c0_21 = arith.constant 0 : index
    %c0_22 = arith.constant 0 : index
    %23 = vector.load %arg5[%c0_19, %c0_20, %c0_21, %c0_22] : memref<1x8x8x8xf32, #tpu.memory_space<vmem>>, vector<1x8x8x8xf32>
    %24 = vector.shape_cast %23 : vector<1x8x8x8xf32> to vector<8x8x8xf32>
    %25 = vector.shape_cast %18 : vector<8x8x8xf32> to vector<1x8x8x8xf32>
    tpu.vector_store %arg5[%c0_19, %c0_20, %c0_21, %c0_22], %25 {strides = array<i32>} : memref<1x8x8x8xf32, #tpu.memory_space<vmem>>, vector<1x8x8x8xf32>,
    return
  }
  func.func @transform_0(%arg0: i32) -> (i32, i32, i32, i32) {
    %c0_i32 = arith.constant 0 : i32
    %c0_i32_0 = arith.constant 0 : i32
    %c0_i32_1 = arith.constant 0 : i32
    %c0_i32_2 = arith.constant 0 : i32
    return %arg0, %c0_i32, %c0_i32_0, %c0_i32_1 : i32, i32, i32, i32
  }
  func.func @transform_1(%arg0: i32) -> (i32, i32, i32, i32) {
    %c0_i32 = arith.constant 0 : i32
    %c0_i32_0 = arith.constant 0 : i32
    %c0_i32_1 = arith.constant 0 : i32
    %c0_i32_2 = arith.constant 0 : i32
    return %arg0, %c0_i32, %c0_i32_0, %c0_i32_1 : i32, i32, i32, i32
  }
  func.func @transform_2(%arg0: i32) -> (i32, i32, i32, i32) {
    %c0_i32 = arith.constant 0 : i32
    %c0_i32_0 = arith.constant 0 : i32
    %c0_i32_1 = arith.constant 0 : i32
    %c0_i32_2 = arith.constant 0 : i32
    return %arg0, %c0_i32, %c0_i32_0, %c0_i32_1 : i32, i32, i32, i32
  }
  func.func @transform_3(%arg0: i32) -> (i32, i32, i32, i32) {
    %c0_i32 = arith.constant 0 : i32
    %c0_i32_0 = arith.constant 0 : i32
    %c0_i32_1 = arith.constant 0 : i32
    %c0_i32_2 = arith.constant 0 : i32
    return %arg0, %c0_i32, %c0_i32_0, %c0_i32_1 : i32, i32, i32, i32
  }
  func.func @transform_4(%arg0: i32) -> (i32, i32, i32, i32) {
    %c0_i32 = arith.constant 0 : i32
    %c0_i32_0 = arith.constant 0 : i32
    %c0_i32_1 = arith.constant 0 : i32
    %c0_i32_2 = arith.constant 0 : i32
    return %arg0, %c0_i32, %c0_i32_0, %c0_i32_1 : i32, i32, i32, i32
  }
}

module attributes {stable_mosaic.version = 11 : i64} {
  func.func @_post_attn_kernel(%arg0: i32, %arg1: memref<1x16x32xf32, #tpu.memory_space<vmem>>, %arg2: memref<16x32xf32, #tpu.memory_space<vmem>>, %arg3: memref<1x32x32xf32, #tpu.memory_space<vmem>>, %arg4: memref<1x1x32xf32, #tpu.memory_space<vmem>>, %arg5: memref<1x1x32xf32, #tpu.memory_space<vmem>>, %arg6: memref<1x1x32xf32, #tpu.memory_space<vmem>>, %arg7: memref<1x32x64xf32, #tpu.memory_space<vmem>>, %arg8: memref<1x1x64xf32, #tpu.memory_space<vmem>>, %arg9: memref<1x64x32xf32, #tpu.memory_space<vmem>>, %arg10: memref<1x1x32xf32, #tpu.memory_space<vmem>>, %arg11: memref<1x1x32xf32, #tpu.memory_space<vmem>>, %arg12: memref<1x1x32xf32, #tpu.memory_space<vmem>>, %arg13: memref<1x16x32xf32, #tpu.memory_space<vmem>>) attributes {dimension_semantics = [#tpu.dimension_semantics<parallel>], iteration_bounds = array<i64: 2>, scalar_prefetch = 0 : i64, scratch_operands = 0 : i64, tpu.core_type = #tpu.core_type<tc>, window_params = [{transform_indices = @transform_0, window_bounds = array<i64: 1, 16, 32>}, {pipeline_mode = #tpu.pipeline_mode<synchronous>, transform_indices = @transform_1, window_bounds = array<i64: 16, 32>}, {transform_indices = @transform_2, window_bounds = array<i64: 1, 32, 32>}, {transform_indices = @transform_3, window_bounds = array<i64: 1, 1, 32>}, {transform_indices = @transform_4, window_bounds = array<i64: 1, 1, 32>}, {transform_indices = @transform_5, window_bounds = array<i64: 1, 1, 32>}, {transform_indices = @transform_6, window_bounds = array<i64: 1, 32, 64>}, {transform_indices = @transform_7, window_bounds = array<i64: 1, 1, 64>}, {transform_indices = @transform_8, window_bounds = array<i64: 1, 64, 32>}, {transform_indices = @transform_9, window_bounds = array<i64: 1, 1, 32>}, {transform_indices = @transform_10, window_bounds = array<i64: 1, 1, 32>}, {transform_indices = @transform_11, window_bounds = array<i64: 1, 1, 32>}, {transform_indices = @transform_12, window_bounds = array<i64: 1, 16, 32>}]} {
    %c0 = arith.constant 0 : index
    %c0_0 = arith.constant 0 : index
    %c0_1 = arith.constant 0 : index
    %0 = vector.load %arg1[%c0, %c0_0, %c0_1] : memref<1x16x32xf32, #tpu.memory_space<vmem>>, vector<1x16x32xf32>
    %1 = vector.shape_cast %0 : vector<1x16x32xf32> to vector<16x32xf32>
    %c0_2 = arith.constant 0 : index
    %c0_3 = arith.constant 0 : index
    %2 = vector.load %arg2[%c0_2, %c0_3] : memref<16x32xf32, #tpu.memory_space<vmem>>, vector<16x32xf32>
    %c0_4 = arith.constant 0 : index
    %c0_5 = arith.constant 0 : index
    %c0_6 = arith.constant 0 : index
    %3 = vector.load %arg3[%c0_4, %c0_5, %c0_6] : memref<1x32x32xf32, #tpu.memory_space<vmem>>, vector<1x32x32xf32>
    %4 = vector.shape_cast %3 : vector<1x32x32xf32> to vector<32x32xf32>
    %cst = arith.constant dense<0.000000e+00> : vector<16x32xf32>
    %5 = tpu.matmul %1, %4, %cst {dimension_numbers = #tpu.dot_dimension_numbers<[1], [0], [0], [1], [0, 0, 1, 1], [], []>} : vector<16x32xf32>, vector<32x32xf32>, vector<16x32xf32> -> vector<16x32xf32>
    %c0_7 = arith.constant 0 : index
    %c0_8 = arith.constant 0 : index
    %c0_9 = arith.constant 0 : index
    %6 = vector.load %arg4[%c0_7, %c0_8, %c0_9] : memref<1x1x32xf32, #tpu.memory_space<vmem>>, vector<1x1x32xf32>
    %7 = vector.shape_cast %6 : vector<1x1x32xf32> to vector<1x32xf32>
    %8 = vector.broadcast %7 : vector<1x32xf32> to vector<16x32xf32>
    %9 = arith.addf %5, %8 : vector<16x32xf32>
    %10 = arith.addf %2, %9 : vector<16x32xf32>
    %c0_10 = arith.constant 0 : index
    %c0_11 = arith.constant 0 : index
    %c0_12 = arith.constant 0 : index
    %11 = vector.load %arg5[%c0_10, %c0_11, %c0_12] : memref<1x1x32xf32, #tpu.memory_space<vmem>>, vector<1x1x32xf32>
    %12 = vector.shape_cast %11 : vector<1x1x32xf32> to vector<1x32xf32>
    %c0_13 = arith.constant 0 : index
    %c0_14 = arith.constant 0 : index
    %c0_15 = arith.constant 0 : index
    %13 = vector.load %arg6[%c0_13, %c0_14, %c0_15] : memref<1x1x32xf32, #tpu.memory_space<vmem>>, vector<1x1x32xf32>
    %14 = vector.shape_cast %13 : vector<1x1x32xf32> to vector<1x32xf32>
    %cst_16 = arith.constant dense<0.000000e+00> : vector<16xf32>
    %15 = vector.multi_reduction <add>, %10, %cst_16 [1] : vector<16x32xf32> to vector<16xf32>
    %16 = vector.shape_cast %15 : vector<16xf32> to vector<16x1xf32>
    %cst_17 = arith.constant 3.200000e+01 : f32
    %17 = vector.broadcast %cst_17 : f32 to vector<16x1xf32>
    %18 = arith.divf %16, %17 : vector<16x1xf32>
    %19 = vector.broadcast %18 : vector<16x1xf32> to vector<16x32xf32>
    %20 = arith.subf %10, %19 : vector<16x32xf32>
    %21 = vector.broadcast %18 : vector<16x1xf32> to vector<16x32xf32>
    %22 = arith.subf %10, %21 : vector<16x32xf32>
    %23 = arith.mulf %20, %22 : vector<16x32xf32>
    %cst_18 = arith.constant dense<0.000000e+00> : vector<16xf32>
    %24 = vector.multi_reduction <add>, %23, %cst_18 [1] : vector<16x32xf32> to vector<16xf32>
    %25 = vector.shape_cast %24 : vector<16xf32> to vector<16x1xf32>
    %cst_19 = arith.constant 3.200000e+01 : f32
    %26 = vector.broadcast %cst_19 : f32 to vector<16x1xf32>
    %27 = arith.divf %25, %26 : vector<16x1xf32>
    %28 = vector.broadcast %18 : vector<16x1xf32> to vector<16x32xf32>
    %29 = arith.subf %10, %28 : vector<16x32xf32>
    %cst_20 = arith.constant 9.99999974E-6 : f32
    %30 = vector.broadcast %cst_20 : f32 to vector<16x1xf32>
    %31 = arith.addf %27, %30 : vector<16x1xf32>
    %32 = math.rsqrt %31 : vector<16x1xf32>
    %33 = vector.broadcast %32 : vector<16x1xf32> to vector<16x32xf32>
    %34 = arith.mulf %29, %33 : vector<16x32xf32>
    %35 = vector.broadcast %12 : vector<1x32xf32> to vector<16x32xf32>
    %36 = arith.mulf %34, %35 : vector<16x32xf32>
    %37 = vector.broadcast %14 : vector<1x32xf32> to vector<16x32xf32>
    %38 = arith.addf %36, %37 : vector<16x32xf32>
    %c0_21 = arith.constant 0 : index
    %c0_22 = arith.constant 0 : index
    %c0_23 = arith.constant 0 : index
    %39 = vector.load %arg7[%c0_21, %c0_22, %c0_23] : memref<1x32x64xf32, #tpu.memory_space<vmem>>, vector<1x32x64xf32>
    %40 = vector.shape_cast %39 : vector<1x32x64xf32> to vector<32x64xf32>
    %cst_24 = arith.constant dense<0.000000e+00> : vector<16x64xf32>
    %41 = tpu.matmul %38, %40, %cst_24 {dimension_numbers = #tpu.dot_dimension_numbers<[1], [0], [0], [1], [0, 0, 1, 1], [], []>} : vector<16x32xf32>, vector<32x64xf32>, vector<16x64xf32> -> vector<16x64xf32>
    %c0_25 = arith.constant 0 : index
    %c0_26 = arith.constant 0 : index
    %c0_27 = arith.constant 0 : index
    %42 = vector.load %arg8[%c0_25, %c0_26, %c0_27] : memref<1x1x64xf32, #tpu.memory_space<vmem>>, vector<1x1x64xf32>
    %43 = vector.shape_cast %42 : vector<1x1x64xf32> to vector<1x64xf32>
    %44 = vector.broadcast %43 : vector<1x64xf32> to vector<16x64xf32>
    %45 = arith.addf %41, %44 : vector<16x64xf32>
    %cst_28 = arith.constant 0.000000e+00 : f32
    %46 = vector.broadcast %cst_28 : f32 to vector<16x64xf32>
    %47 = arith.maximumf %45, %46 : vector<16x64xf32>
    %c0_29 = arith.constant 0 : index
    %c0_30 = arith.constant 0 : index
    %c0_31 = arith.constant 0 : index
    %48 = vector.load %arg9[%c0_29, %c0_30, %c0_31] : memref<1x64x32xf32, #tpu.memory_space<vmem>>, vector<1x64x32xf32>
    %49 = vector.shape_cast %48 : vector<1x64x32xf32> to vector<64x32xf32>
    %cst_32 = arith.constant dense<0.000000e+00> : vector<16x32xf32>
    %50 = tpu.matmul %47, %49, %cst_32 {dimension_numbers = #tpu.dot_dimension_numbers<[1], [0], [0], [1], [0, 0, 1, 1], [], []>} : vector<16x64xf32>, vector<64x32xf32>, vector<16x32xf32> -> vector<16x32xf32>
    %c0_33 = arith.constant 0 : index
    %c0_34 = arith.constant 0 : index
    %c0_35 = arith.constant 0 : index
    %51 = vector.load %arg10[%c0_33, %c0_34, %c0_35] : memref<1x1x32xf32, #tpu.memory_space<vmem>>, vector<1x1x32xf32>
    %52 = vector.shape_cast %51 : vector<1x1x32xf32> to vector<1x32xf32>
    %53 = vector.broadcast %52 : vector<1x32xf32> to vector<16x32xf32>
    %54 = arith.addf %50, %53 : vector<16x32xf32>
    %55 = arith.addf %38, %54 : vector<16x32xf32>
    %c0_36 = arith.constant 0 : index
    %c0_37 = arith.constant 0 : index
    %c0_38 = arith.constant 0 : index
    %56 = vector.load %arg11[%c0_36, %c0_37, %c0_38] : memref<1x1x32xf32, #tpu.memory_space<vmem>>, vector<1x1x32xf32>
    %57 = vector.shape_cast %56 : vector<1x1x32xf32> to vector<1x32xf32>
    %c0_39 = arith.constant 0 : index
    %c0_40 = arith.constant 0 : index
    %c0_41 = arith.constant 0 : index
    %58 = vector.load %arg12[%c0_39, %c0_40, %c0_41] : memref<1x1x32xf32, #tpu.memory_space<vmem>>, vector<1x1x32xf32>
    %59 = vector.shape_cast %58 : vector<1x1x32xf32> to vector<1x32xf32>
    %cst_42 = arith.constant dense<0.000000e+00> : vector<16xf32>
    %60 = vector.multi_reduction <add>, %55, %cst_42 [1] : vector<16x32xf32> to vector<16xf32>
    %61 = vector.shape_cast %60 : vector<16xf32> to vector<16x1xf32>
    %cst_43 = arith.constant 3.200000e+01 : f32
    %62 = vector.broadcast %cst_43 : f32 to vector<16x1xf32>
    %63 = arith.divf %61, %62 : vector<16x1xf32>
    %64 = vector.broadcast %63 : vector<16x1xf32> to vector<16x32xf32>
    %65 = arith.subf %55, %64 : vector<16x32xf32>
    %66 = vector.broadcast %63 : vector<16x1xf32> to vector<16x32xf32>
    %67 = arith.subf %55, %66 : vector<16x32xf32>
    %68 = arith.mulf %65, %67 : vector<16x32xf32>
    %cst_44 = arith.constant dense<0.000000e+00> : vector<16xf32>
    %69 = vector.multi_reduction <add>, %68, %cst_44 [1] : vector<16x32xf32> to vector<16xf32>
    %70 = vector.shape_cast %69 : vector<16xf32> to vector<16x1xf32>
    %cst_45 = arith.constant 3.200000e+01 : f32
    %71 = vector.broadcast %cst_45 : f32 to vector<16x1xf32>
    %72 = arith.divf %70, %71 : vector<16x1xf32>
    %73 = vector.broadcast %63 : vector<16x1xf32> to vector<16x32xf32>
    %74 = arith.subf %55, %73 : vector<16x32xf32>
    %cst_46 = arith.constant 9.99999974E-6 : f32
    %75 = vector.broadcast %cst_46 : f32 to vector<16x1xf32>
    %76 = arith.addf %72, %75 : vector<16x1xf32>
    %77 = math.rsqrt %76 : vector<16x1xf32>
    %78 = vector.broadcast %77 : vector<16x1xf32> to vector<16x32xf32>
    %79 = arith.mulf %74, %78 : vector<16x32xf32>
    %80 = vector.broadcast %57 : vector<1x32xf32> to vector<16x32xf32>
    %81 = arith.mulf %79, %80 : vector<16x32xf32>
    %82 = vector.broadcast %59 : vector<1x32xf32> to vector<16x32xf32>
    %83 = arith.addf %81, %82 : vector<16x32xf32>
    %c0_47 = arith.constant 0 : index
    %c0_48 = arith.constant 0 : index
    %c0_49 = arith.constant 0 : index
    %84 = vector.load %arg13[%c0_47, %c0_48, %c0_49] : memref<1x16x32xf32, #tpu.memory_space<vmem>>, vector<1x16x32xf32>
    %85 = vector.shape_cast %84 : vector<1x16x32xf32> to vector<16x32xf32>
    %86 = vector.shape_cast %83 : vector<16x32xf32> to vector<1x16x32xf32>
    tpu.vector_store %arg13[%c0_47, %c0_48, %c0_49], %86 {strides = array<i32>} : memref<1x16x32xf32, #tpu.memory_space<vmem>>, vector<1x16x32xf32>,
    return
  }
  func.func @transform_0(%arg0: i32) -> (i32, i32, i32) {
    %c0_i32 = arith.constant 0 : i32
    %c0_i32_0 = arith.constant 0 : i32
    %c0_i32_1 = arith.constant 0 : i32
    return %arg0, %c0_i32, %c0_i32_0 : i32, i32, i32
  }
  func.func @transform_1(%arg0: i32) -> (i32, i32) {
    %c0_i32 = arith.constant 0 : i32
    %c0_i32_0 = arith.constant 0 : i32
    %c0_i32_1 = arith.constant 0 : i32
    return %c0_i32, %c0_i32_0 : i32, i32
  }
  func.func @transform_2(%arg0: i32) -> (i32, i32, i32) {
    %c0_i32 = arith.constant 0 : i32
    %c0_i32_0 = arith.constant 0 : i32
    %c0_i32_1 = arith.constant 0 : i32
    return %arg0, %c0_i32, %c0_i32_0 : i32, i32, i32
  }
  func.func @transform_3(%arg0: i32) -> (i32, i32, i32) {
    %c0_i32 = arith.constant 0 : i32
    %c0_i32_0 = arith.constant 0 : i32
    %c0_i32_1 = arith.constant 0 : i32
    return %arg0, %c0_i32, %c0_i32_0 : i32, i32, i32
  }
  func.func @transform_4(%arg0: i32) -> (i32, i32, i32) {
    %c0_i32 = arith.constant 0 : i32
    %c0_i32_0 = arith.constant 0 : i32
    %c0_i32_1 = arith.constant 0 : i32
    return %arg0, %c0_i32, %c0_i32_0 : i32, i32, i32
  }
  func.func @transform_5(%arg0: i32) -> (i32, i32, i32) {
    %c0_i32 = arith.constant 0 : i32
    %c0_i32_0 = arith.constant 0 : i32
    %c0_i32_1 = arith.constant 0 : i32
    return %arg0, %c0_i32, %c0_i32_0 : i32, i32, i32
  }
  func.func @transform_6(%arg0: i32) -> (i32, i32, i32) {
    %c0_i32 = arith.constant 0 : i32
    %c0_i32_0 = arith.constant 0 : i32
    %c0_i32_1 = arith.constant 0 : i32
    return %arg0, %c0_i32, %c0_i32_0 : i32, i32, i32
  }
  func.func @transform_7(%arg0: i32) -> (i32, i32, i32) {
    %c0_i32 = arith.constant 0 : i32
    %c0_i32_0 = arith.constant 0 : i32
    %c0_i32_1 = arith.constant 0 : i32
    return %arg0, %c0_i32, %c0_i32_0 : i32, i32, i32
  }
  func.func @transform_8(%arg0: i32) -> (i32, i32, i32) {
    %c0_i32 = arith.constant 0 : i32
    %c0_i32_0 = arith.constant 0 : i32
    %c0_i32_1 = arith.constant 0 : i32
    return %arg0, %c0_i32, %c0_i32_0 : i32, i32, i32
  }
  func.func @transform_9(%arg0: i32) -> (i32, i32, i32) {
    %c0_i32 = arith.constant 0 : i32
    %c0_i32_0 = arith.constant 0 : i32
    %c0_i32_1 = arith.constant 0 : i32
    return %arg0, %c0_i32, %c0_i32_0 : i32, i32, i32
  }
  func.func @transform_10(%arg0: i32) -> (i32, i32, i32) {
    %c0_i32 = arith.constant 0 : i32
    %c0_i32_0 = arith.constant 0 : i32
    %c0_i32_1 = arith.constant 0 : i32
    return %arg0, %c0_i32, %c0_i32_0 : i32, i32, i32
  }
  func.func @transform_11(%arg0: i32) -> (i32, i32, i32) {
    %c0_i32 = arith.constant 0 : i32
    %c0_i32_0 = arith.constant 0 : i32
    %c0_i32_1 = arith.constant 0 : i32
    return %arg0, %c0_i32, %c0_i32_0 : i32, i32, i32
  }
  func.func @transform_12(%arg0: i32) -> (i32, i32, i32) {
    %c0_i32 = arith.constant 0 : i32
    %c0_i32_0 = arith.constant 0 : i32
    %c0_i32_1 = arith.constant 0 : i32
    return %arg0, %c0_i32, %c0_i32_0 : i32, i32, i32
  }
}

</mosaic_0001>

<llo_original>
// kernel: encoder_forward.3
$region0: #{encoder_forward.3}
  #allocation0 [shape = 'u32[]', space=smem, size = 0x4, offset = 0x4, fixed_abs, tag = 'smem constant byte address 0x4 - core index']
  #allocation1 [shape = 'u32[144,128]{1,0:T(1,128)}', space=vmem, size = 0x12000, scoped, tag = 'internal scratch']
  %s0 = inlined_call_operand.hbm [shape: f32[16,32], index: 0, kind: input, shape index: {}]
  %s1 = inlined_call_operand.hbm [shape: f32[2,32,96], index: 1, kind: input, shape index: {}]
  %s2 = inlined_call_operand.vmem [shape: f32[2,1,96], index: 2, kind: input, shape index: {}]
  %s3 = inlined_call_operand.vmem [shape: f32[2,16,96], index: 3, kind: output, shape index: {}]
  %s4 = sld [smem:[#allocation0]]
  $region53: #{encoder_forward.3} parent=0
    _
  %s6 = ssub.s32 1, %s4
  %s7 = scalar_select 0, %s6, %s4
  $region1: #{encoder_forward.3} parent=0
    #allocation2 [shape = 'u8[8192]{0}', space=vmem, size = 0x2000, scoped, tag = 'input window, operand 0, single buffered']
    #allocation3 [shape = 's32[2]{0}', space=sflag, size = 0x8, scoped, tag = 'scoped memory for encoder_forward.3']
    #allocation4 [shape = 'u8[32768]{0}', space=vmem, size = 0x8000, scoped, tag = 'input window, operand 1']
    #allocation5 [shape = 's32[2]{0}', space=sflag, size = 0x8, scoped, tag = 'scoped memory for encoder_forward.3']
    %8 = vsyncpa [#allocation3], 0
    %9 = vsyncpa [#allocation5], 0
    %s10 = scalar_lea.sflag [#allocation5], 1
    %11 = vsyncpa %s10, 0
    loop: start=0, step=1, limit=4
    $region2: #{encoder_forward.3} parent=1 // loop_pre_header
      _
    $region3: #{encoder_forward.3} parent=1 // loop_header
      %s13 = sphi 0, %s17
      %p14 = scmp.ge.s32.totalorder %s13, 4
      %s21 = sphi 0, %s21
      %s23 = sphi 0, %s21
      %s24 = sphi 0, %s23
      %s38 = sphi 0, %s24
      %s44 = sphi 0, %s46
      %s47 = sphi 0, %s44
      %s48 = sphi 0, %s47
      %s64 = sphi 0, %s48
      %s70 = sphi 0, %s72
      %s73 = sphi 0, %s70
      %s74 = sphi 0, %s73
      %s90 = sphi 0, %s74
      %s96 = sphi 0, %s98
      %s99 = sphi 0, %s96
      %s100 = sphi 0, %s99
      %s116 = sphi 0, %s100
    $region4: #{encoder_forward.3} parent=1 // loop_header_branch
      %16 = sbr.rel (%p14) target = $region8
    $region5: #{encoder_forward.3} parent=1 // loop_body
      %s18 = ssub.s32 %s13, 1
      %s19 = ssub.s32 %s13, 2
      %s20 = sadd.s32 %s13, 1
      %s22 = sadd.s32 %s21, 1
      %p25 = scmp.eq.s32.totalorder %s13, 1
      %p26 = scmp.ne.s32.totalorder %s21, %s23
      %p27 = scmp.eq.s32.totalorder %s13, 0
      %p28 = por %p26, %p27
      %p29 = scmp.ne.s32.totalorder %s21, %s23
      %p30 = scmp.eq.s32.totalorder %s18, 1
      %p31 = por %p29, %p30
      %p32 = scmp.ne.s32.totalorder %s23, %s24
      %p33 = scmp.eq.s32.totalorder %s18, 0
      %p34 = por %p32, %p33
      %p35 = scmp.ne.s32.totalorder %s23, %s24
      %p36 = scmp.eq.s32.totalorder %s19, 1
      %p37 = por %p35, %p36
      %p39 = scmp.ne.s32.totalorder %s24, %s38
      %p40 = scmp.eq.s32.totalorder %s19, 0
      %p41 = por %p39, %p40
      %s42 = ssub.s32 %s13, %s20
      %p43 = scmp.eq.s32.totalorder %s42, 0
      %s45 = sadd.s32 %s44, 1
      %s46 = scalar_select %p43, %s44, %s45
      %p49 = pneg %p43
      %p50 = scmp.eq.s32.totalorder %s13, 1
      %p51 = por %p49, %p50
      %p52 = scmp.ne.s32.totalorder %s44, %s47
      %p53 = scmp.eq.s32.totalorder %s13, 0
      %p54 = por %p52, %p53
      %p55 = scmp.ne.s32.totalorder %s44, %s47
      %p56 = scmp.eq.s32.totalorder %s18, 1
      %p57 = por %p55, %p56
      %p58 = scmp.ne.s32.totalorder %s47, %s48
      %p59 = scmp.eq.s32.totalorder %s18, 0
      %p60 = por %p58, %p59
      %p61 = scmp.ne.s32.totalorder %s47, %s48
      %p62 = scmp.eq.s32.totalorder %s19, 1
      %p63 = por %p61, %p62
      %p65 = scmp.ne.s32.totalorder %s48, %s64
      %p66 = scmp.eq.s32.totalorder %s19, 0
      %p67 = por %p65, %p66
      %s68 = ssub.s32 %s13, %s20
      %p69 = scmp.eq.s32.totalorder %s68, 0
      %s71 = sadd.s32 %s70, 1
      %s72 = scalar_select %p69, %s70, %s71
      %p75 = pneg %p69
      %p76 = scmp.eq.s32.totalorder %s13, 1
      %p77 = por %p75, %p76
      %p78 = scmp.ne.s32.totalorder %s70, %s73
      %p79 = scmp.eq.s32.totalorder %s13, 0
      %p80 = por %p78, %p79
      %p81 = scmp.ne.s32.totalorder %s70, %s73
      %p82 = scmp.eq.s32.totalorder %s18, 1
      %p83 = por %p81, %p82
      %p84 = scmp.ne.s32.totalorder %s73, %s74
      %p85 = scmp.eq.s32.totalorder %s18, 0
      %p86 = por %p84, %p85
      %p87 = scmp.ne.s32.totalorder %s73, %s74
      %p88 = scmp.eq.s32.totalorder %s19, 1
      %p89 = por %p87, %p88
      %p91 = scmp.ne.s32.totalorder %s74, %s90
      %p92 = scmp.eq.s32.totalorder %s19, 0
      %p93 = por %p91, %p92
      %s94 = ssub.s32 %s13, %s20
      %p95 = scmp.eq.s32.totalorder %s94, 0
      %s97 = sadd.s32 %s96, 1
      %s98 = scalar_select %p95, %s96, %s97
      %p101 = pneg %p95
      %p102 = scmp.eq.s32.totalorder %s13, 1
      %p103 = por %p101, %p102
      %p104 = scmp.ne.s32.totalorder %s96, %s99
      %p105 = scmp.eq.s32.totalorder %s13, 0
      %p106 = por %p104, %p105
      %p107 = scmp.ne.s32.totalorder %s96, %s99
      %p108 = scmp.eq.s32.totalorder %s18, 1
      %p109 = por %p107, %p108
      %p110 = scmp.ne.s32.totalorder %s99, %s100
      %p111 = scmp.eq.s32.totalorder %s18, 0
      %p112 = por %p110, %p111
      %p113 = scmp.ne.s32.totalorder %s99, %s100
      %p114 = scmp.eq.s32.totalorder %s19, 1
      %p115 = por %p113, %p114
      %p117 = scmp.ne.s32.totalorder %s100, %s116
      %p118 = scmp.eq.s32.totalorder %s19, 0
      %p119 = por %p117, %p118
      %p120 = scmp.le.s32.totalorder 1, %s13
      %p121 = scmp.lt.s32.totalorder %s13, 3
      %p122 = pnand %p120, %p121
      %p123 = pneg %p122
      // Predicated region
      $region9: #{encoder_forward.3} parent=5 // pred_check
        _
      $region10: #{encoder_forward.3} parent=5 // pred_check_branch
        %125 = sbr.rel (%p122) target = $region12
      $region11: #{encoder_forward.3} parent=5 // pred_region
        %s126 = ssub.s32 %s13, 1
        // Predicated region
        $region13: #{encoder_forward.3} parent=11 // pred_check
          %p127 = pneg %p34
        $region14: #{encoder_forward.3} parent=11 // pred_check_branch
          %129 = sbr.rel (%p127) target = $region16
        $region15: #{encoder_forward.3} parent=11 // pred_region
          %s131 = ssub.s32 256, 256
          %132 = vsyncadd [#allocation3], %s131
          %s133 = sshll.u32 [#allocation2], 4
          %s134 = int_to_ptr.vmem [resolvable:$true] %s133
          %139 = dma.hbm_to_vmem [thread:$0]  %s0, 256, %s134, [#allocation3], 128, 128, 8
        $region16: #{encoder_forward.3} parent=11 // pred_fallthru
          _
      $region12: #{encoder_forward.3} parent=5 // pred_fallthru
        _
      %p140 = scmp.lt.s32.totalorder %s13, 2
      // Predicated region
      $region17: #{encoder_forward.3} parent=5 // pred_check
        %p141 = pneg %p140
      $region18: #{encoder_forward.3} parent=5 // pred_check_branch
        %143 = sbr.rel (%p141) target = $region20
      $region19: #{encoder_forward.3} parent=5 // pred_region
        // Predicated region
        $region21: #{encoder_forward.3} parent=19 // pred_check
          %p144 = pneg %p54
        $region22: #{encoder_forward.3} parent=19 // pred_check_branch
          %146 = sbr.rel (%p144) target = $region24
        $region23: #{encoder_forward.3} parent=19 // pred_region
          %s147 = sand.u32 %s44, 1
          %s148 = scalar_lea.sflag [#allocation5], %s147
          %s149 = sand.u32 %s44, 1
          %s150 = smul.addr %s149, 32
          %s151 = scalar_lea.vmem [#allocation4], %s150
          %s153 = ssub.s32 512, 512
          %154 = vsyncadd %s148, %s153
          %s155 = smul.addr %s13, 4
          %s156 = smul.addr %s155, 128
          %s157 = scalar_lea.hbm %s1, %s156
          %s158 = sshll.u32 %s151, 4
          %s159 = int_to_ptr.vmem [resolvable:$true] %s158
          %164 = dma.hbm_to_vmem [thread:$0]  %s157, 512, %s159, %s148, 128, 128, 8
        $region24: #{encoder_forward.3} parent=19 // pred_fallthru
          _
        // Predicated region
        $region25: #{encoder_forward.3} parent=19 // pred_check
          %p165 = pneg %p80
        $region26: #{encoder_forward.3} parent=19 // pred_check_branch
          %167 = sbr.rel (%p165) target = $region28
        $region27: #{encoder_forward.3} parent=19 // pred_region
          %p168 = scmp.lt.s32.totalorder %s13, 1
          %s169 = scalar_select %p168, %s13, 1
          %s170 = scalar_lea.vmem %s2, %s169
        $region28: #{encoder_forward.3} parent=19 // pred_fallthru
          _
      $region20: #{encoder_forward.3} parent=5 // pred_fallthru
        _
      %p171 = scmp.le.s32.totalorder 1, %s13
      %p172 = scmp.lt.s32.totalorder %s13, 3
      %p173 = pnand %p171, %p172
      %p174 = pneg %p173
      // Predicated region
      $region29: #{encoder_forward.3} parent=5 // pred_check
        _
      $region30: #{encoder_forward.3} parent=5 // pred_check_branch
        %176 = sbr.rel (%p173) target = $region32
      $region31: #{encoder_forward.3} parent=5 // pred_region
        %s177 = ssub.s32 %s13, 1
        // Predicated region
        $region33: #{encoder_forward.3} parent=31 // pred_check
          %p178 = pneg %p34
        $region34: #{encoder_forward.3} parent=31 // pred_check_branch
          %180 = sbr.rel (%p178) target = $region36
        $region35: #{encoder_forward.3} parent=31 // pred_region
          %181 = dma.done [#allocation3], 256
        $region36: #{encoder_forward.3} parent=31 // pred_fallthru
          _
        %s182 = sand.u32 %s47, 1
        %s183 = scalar_lea.sflag [#allocation5], %s182
        %s184 = sand.u32 %s47, 1
        %s185 = smul.addr %s184, 32
        %s186 = scalar_lea.vmem [#allocation4], %s185
        // Predicated region
        $region37: #{encoder_forward.3} parent=31 // pred_check
          %p187 = pneg %p60
        $region38: #{encoder_forward.3} parent=31 // pred_check_branch
          %189 = sbr.rel (%p187) target = $region40
        $region39: #{encoder_forward.3} parent=31 // pred_region
          %190 = dma.done %s183, 512
        $region40: #{encoder_forward.3} parent=31 // pred_fallthru
          _
        %p191 = pneg %p34
        %p192 = pneg %p31
        %s193 = sand.u32 %s47, 1
        %s194 = scalar_lea.sflag [#allocation5], %s193
        %s195 = sand.u32 %s47, 1
        %s196 = smul.addr %s195, 32
        %s197 = scalar_lea.vmem [#allocation4], %s196
        %p198 = pneg %p60
        %p199 = pneg %p57
        %p200 = scmp.lt.s32.totalorder %s18, 1
        %s201 = scalar_select %p200, %s18, 1
        %s202 = scalar_lea.vmem %s2, %s201
        %p203 = pneg %p86
        %p204 = pneg %p83
        %p205 = pneg %p112
        %p206 = pneg %p109
        %p207 = scmp.lt.s32.totalorder %s18, 1
        %s208 = scalar_select %p207, %s18, 1
        %s209 = smul.addr %s208, 2
        %s210 = smul.addr %s209, 8
        %s211 = scalar_lea.vmem %s3, %s210
        %p212 = scmp.lt.s32.totalorder %s18, 1
        %s213 = scalar_select %p212, %s18, 1
        %s214 = scalar_lea.vmem %s2, %s213
        %p215 = scmp.lt.s32.totalorder %s18, 1
        %s216 = scalar_select %p215, %s18, 1
        %s217 = smul.addr %s216, 2
        %s218 = smul.addr %s217, 8
        %s219 = scalar_lea.vmem %s3, %s218
        %v220 = vld [vmem:[#allocation2] sm:$0xff]
        %v221 = vld [vmem:[#allocation2 + $0x8] sm:$0xff]
        %v222 = vld [vmem:[%s186] sm:$0xff]
        %v223 = vld [vmem:[%s186 + $0x8] sm:$0xff]
        %v224 = vld [vmem:[%s186 + $0x10] sm:$0xff]
        %v225 = vld [vmem:[%s186 + $0x18] sm:$0xff]
        %v226 = vld [vmem:[%s214] sm:$0x1]
        %v228 = vlaneseq
        %v229 = vshrl.u32 %v228, 7
        %v230 = vsub.s32 0, %v229
        %v231 = vrot.slane %v226, %v230
        %vm233 = vcmask 261120
        %v235 = vsel %vm233, %v220, 0
        %v238 = vsel %vm233, %v221, 0
        %240 = vmatprep.subr.mxu0 0.0
        %241 = vmatpush1.msra.mxu0 0.0
        %242 = vmatprep.subr.mxu0 0.0
        %243 = vmatpush1.msra.mxu0 0.0
        %244 = vmatprep.subr.mxu0 0.0
        %245 = vmatpush1.msra.mxu0 0.0
        %246 = vmatprep.subr.mxu0 0.0
        %247 = vmatpush1.msra.mxu0 0.0
        %248 = vmatprep.subr.mxu0 0.0
        %249 = vmatpush1.msra.mxu0 0.0
        %250 = vmatprep.subr.mxu0 0.0
        %251 = vmatpush1.msra.mxu0 0.0
        %252 = vmatprep.subr.mxu0 0.0
        %253 = vmatpush1.msra.mxu0 0.0
        %254 = vmatprep.subr.mxu0 0.0
        %255 = vmatpush1.msra.mxu0 0.0
        %256 = vmatprep.subr.mxu0 0.0
        %257 = vmatpush1.msra.mxu0 0.0
        %258 = vmatprep.subr.mxu0 0.0
        %259 = vmatpush1.msra.mxu0 0.0
        %260 = vmatprep.subr.mxu0 0.0
        %261 = vmatpush1.msra.mxu0 0.0
        %262 = vmatprep.subr.mxu0 0.0
        %263 = vmatpush1.msra.mxu0 0.0
        %264 = vmatprep.subr.mxu0 0.0
        %265 = vmatpush1.msra.mxu0 %v225
        %266 = vmatprep.subr.mxu0 0.0
        %267 = vmatpush1.msra.mxu0 %v224
        %268 = vmatprep.subr.mxu0 0.0
        %269 = vmatpush1.msra.mxu0 %v223
        %270 = vmatprep.subr.mxu0 0.0
        %271 = vmatpush1.msra.mxu0 %v222
        %272 = vmatprep.subr.mxu0 0.0
        %273 = vmatpush2.msra.mxu0 0.0
        %274 = vmatprep.subr.mxu0 0.0
        %275 = vmatpush2.msra.mxu0 0.0
        %276 = vmatprep.subr.mxu0 0.0
        %277 = vmatpush2.msra.mxu0 0.0
        %278 = vmatprep.subr.mxu0 0.0
        %279 = vmatpush2.msra.mxu0 0.0
        %280 = vmatprep.subr.mxu0 0.0
        %281 = vmatpush2.msra.mxu0 0.0
        %282 = vmatprep.subr.mxu0 0.0
        %283 = vmatpush2.msra.mxu0 0.0
        %284 = vmatprep.subr.mxu0 0.0
        %285 = vmatpush2.msra.mxu0 0.0
        %286 = vmatprep.subr.mxu0 0.0
        %287 = vmatpush2.msra.mxu0 0.0
        %288 = vmatprep.subr.mxu0 0.0
        %289 = vmatpush2.msra.mxu0 0.0
        %290 = vmatprep.subr.mxu0 0.0
        %291 = vmatpush2.msra.mxu0 0.0
        %292 = vmatprep.subr.mxu0 0.0
        %293 = vmatpush2.msra.mxu0 0.0
        %294 = vmatprep.subr.mxu0 0.0
        %295 = vmatpush2.msra.mxu0 0.0
        %296 = vmatprep.subr.mxu0 0.0
        %297 = vmatpush2.msra.mxu0 0.0
        %298 = vmatprep.subr.mxu0 0.0
        %299 = vmatpush2.msra.mxu0 0.0
        %300 = vmatprep.subr.mxu0 0.0
        %301 = vmatpush2.msra.mxu0 0.0
        %302 = vmatprep.subr.mxu0 0.0
        %303 = vmatpush2.msra.mxu0 0.0
        %304 = vmatprep.mubr.f32.mxu0 0.0
        %305 = vmatmul.mubr.f32.gmra.mxu0 %v235
        %v306 = vpop.f32.mrf.mxu0
        %v307 = vadd.f32 %v231, %v306
        %v308 = vpop.f32.mrf.mxu0
        %309 = vmatprep.mubr.f32.mxu0 0.0
        %310 = vmatmul.mubr.f32.gmra.mxu0 %v238
        %v311 = vpop.f32.mrf.mxu0
        %v312 = vadd.f32 %v231, %v311
        %v313 = vpop.f32.mrf.mxu0
        %314 = vdwg.mxu0
        %vm315 = vcmask 785408
        %316 = vst.msk [vmem:[%s219] sm:$0xff] %vm315, %v307
        %317 = vst.msk [vmem:[%s219 + $0x8] sm:$0xff] %vm315, %v312
        %p318 = scmp.lt.s32.totalorder %s18, 1
        %s319 = scalar_select %p318, %s18, 1
        %s320 = smul.addr %s319, 2
        %s321 = smul.addr %s320, 8
        %s322 = scalar_lea.vmem %s3, %s321
        // Predicated region
        $region41: #{encoder_forward.3} parent=31 // pred_check
          %p323 = pneg %p109
        $region42: #{encoder_forward.3} parent=31 // pred_check_branch
          %325 = sbr.rel (%p323) target = $region44
        $region43: #{encoder_forward.3} parent=31 // pred_region
          _
        $region44: #{encoder_forward.3} parent=31 // pred_fallthru
          _
      $region32: #{encoder_forward.3} parent=5 // pred_fallthru
        _
      %p326 = scmp.le.s32.totalorder 2, %s13
      // Predicated region
      $region45: #{encoder_forward.3} parent=5 // pred_check
        %p327 = pneg %p326
      $region46: #{encoder_forward.3} parent=5 // pred_check_branch
        %329 = sbr.rel (%p327) target = $region48
      $region47: #{encoder_forward.3} parent=5 // pred_region
        %s330 = ssub.s32 %s13, 2
        // Predicated region
        $region49: #{encoder_forward.3} parent=47 // pred_check
          %p331 = pneg %p115
        $region50: #{encoder_forward.3} parent=47 // pred_check_branch
          %333 = sbr.rel (%p331) target = $region52
        $region51: #{encoder_forward.3} parent=47 // pred_region
          %p334 = scmp.lt.s32.totalorder %s19, 1
          %s335 = scalar_select %p334, %s19, 1
          %s336 = smul.addr %s335, 2
          %s337 = smul.addr %s336, 8
          %s338 = scalar_lea.vmem %s3, %s337
        $region52: #{encoder_forward.3} parent=47 // pred_fallthru
          _
      $region48: #{encoder_forward.3} parent=5 // pred_fallthru
        _
    $region6: #{encoder_forward.3} parent=1 // loop_footer
      %s17 = sadd.s32 1, %s13
    $region7: #{encoder_forward.3} parent=1 // loop_footer_branch
      %12 = sbr.rel target = $region3
    $region8: #{encoder_forward.3} parent=1 // loop_exit
      _
    %339 = vsyncpa [#allocation3], 1
    %s340 = scalar_lea.sflag [#allocation3], 1
    %341 = vsyncpa %s340, 1
    %342 = vsyncpa [#allocation5], 1
    %s343 = scalar_lea.sflag [#allocation5], 1
    %344 = vsyncpa %s343, 1

// kernel: encoder_forward.5
$region0: #{encoder_forward.5}
  #allocation0 [shape = 'u32[]', space=smem, size = 0x4, offset = 0x4, fixed_abs, tag = 'smem constant byte address 0x4 - core index']
  #allocation1 [shape = 'u32[144,128]{1,0:T(1,128)}', space=vmem, size = 0x12000, scoped, tag = 'internal scratch']
  %s0 = inlined_call_operand.vmem [shape: f32[2,16,32], index: 0, kind: input, shape index: {}]
  %s1 = inlined_call_operand.vmem [shape: f32[16,32], index: 1, kind: input, shape index: {}]
  %s2 = inlined_call_operand.vmem [shape: f32[2,32,32], index: 2, kind: input, shape index: {}]
  %s3 = inlined_call_operand.vmem [shape: f32[2,1,32], index: 3, kind: input, shape index: {}]
  %s4 = inlined_call_operand.vmem [shape: f32[2,1,32], index: 4, kind: input, shape index: {}]
  %s5 = inlined_call_operand.vmem [shape: f32[2,1,32], index: 5, kind: input, shape index: {}]
  %s6 = inlined_call_operand.vmem [shape: f32[2,32,64], index: 6, kind: input, shape index: {}]
  %s7 = inlined_call_operand.vmem [shape: f32[2,1,64], index: 7, kind: input, shape index: {}]
  %s8 = inlined_call_operand.vmem [shape: f32[2,64,32], index: 8, kind: input, shape index: {}]
  %s9 = inlined_call_operand.vmem [shape: f32[2,1,32], index: 9, kind: input, shape index: {}]
  %s10 = inlined_call_operand.vmem [shape: f32[2,1,32], index: 10, kind: input, shape index: {}]
  %s11 = inlined_call_operand.vmem [shape: f32[2,1,32], index: 11, kind: input, shape index: {}]
  %s12 = inlined_call_operand.vmem [shape: f32[2,16,32], index: 12, kind: output, shape index: {}]
  %s13 = sld [smem:[#allocation0]]
  $region81: #{encoder_forward.5} parent=0
    _
  %s15 = ssub.s32 1, %s13
  %s16 = scalar_select 0, %s15, %s13
  loop: start=0, step=1, limit=4
  $region2: #{encoder_forward.5} parent=0 // loop_pre_header
    _
  $region3: #{encoder_forward.5} parent=0 // loop_header
    %s18 = sphi 0, %s22
    %p19 = scmp.ge.s32.totalorder %s18, 4
    %s28 = sphi 0, %s30
    %s31 = sphi 0, %s28
    %s32 = sphi 0, %s31
    %s48 = sphi 0, %s32
    %s52 = sphi 0, %s52
    %s54 = sphi 0, %s52
    %s55 = sphi 0, %s54
    %s69 = sphi 0, %s55
    %s75 = sphi 0, %s77
    %s78 = sphi 0, %s75
    %s79 = sphi 0, %s78
    %s95 = sphi 0, %s79
    %s101 = sphi 0, %s103
    %s104 = sphi 0, %s101
    %s105 = sphi 0, %s104
    %s121 = sphi 0, %s105
    %s127 = sphi 0, %s129
    %s130 = sphi 0, %s127
    %s131 = sphi 0, %s130
    %s147 = sphi 0, %s131
    %s153 = sphi 0, %s155
    %s156 = sphi 0, %s153
    %s157 = sphi 0, %s156
    %s173 = sphi 0, %s157
    %s179 = sphi 0, %s181
    %s182 = sphi 0, %s179
    %s183 = sphi 0, %s182
    %s199 = sphi 0, %s183
    %s205 = sphi 0, %s207
    %s208 = sphi 0, %s205
    %s209 = sphi 0, %s208
    %s225 = sphi 0, %s209
    %s231 = sphi 0, %s233
    %s234 = sphi 0, %s231
    %s235 = sphi 0, %s234
    %s251 = sphi 0, %s235
    %s257 = sphi 0, %s259
    %s260 = sphi 0, %s257
    %s261 = sphi 0, %s260
    %s277 = sphi 0, %s261
    %s283 = sphi 0, %s285
    %s286 = sphi 0, %s283
    %s287 = sphi 0, %s286
    %s303 = sphi 0, %s287
    %s309 = sphi 0, %s311
    %s312 = sphi 0, %s309
    %s313 = sphi 0, %s312
    %s329 = sphi 0, %s313
    %s335 = sphi 0, %s337
    %s338 = sphi 0, %s335
    %s339 = sphi 0, %s338
    %s355 = sphi 0, %s339
  $region4: #{encoder_forward.5} parent=0 // loop_header_branch
    %21 = sbr.rel (%p19) target = $region8
  $region5: #{encoder_forward.5} parent=0 // loop_body
    %s23 = ssub.s32 %s18, 1
    %s24 = ssub.s32 %s18, 2
    %s25 = sadd.s32 %s18, 1
    %s26 = ssub.s32 %s18, %s25
    %p27 = scmp.eq.s32.totalorder %s26, 0
    %s29 = sadd.s32 %s28, 1
    %s30 = scalar_select %p27, %s28, %s29
    %p33 = pneg %p27
    %p34 = scmp.eq.s32.totalorder %s18, 1
    %p35 = por %p33, %p34
    %p36 = scmp.ne.s32.totalorder %s28, %s31
    %p37 = scmp.eq.s32.totalorder %s18, 0
    %p38 = por %p36, %p37
    %p39 = scmp.ne.s32.totalorder %s28, %s31
    %p40 = scmp.eq.s32.totalorder %s23, 1
    %p41 = por %p39, %p40
    %p42 = scmp.ne.s32.totalorder %s31, %s32
    %p43 = scmp.eq.s32.totalorder %s23, 0
    %p44 = por %p42, %p43
    %p45 = scmp.ne.s32.totalorder %s31, %s32
    %p46 = scmp.eq.s32.totalorder %s24, 1
    %p47 = por %p45, %p46
    %p49 = scmp.ne.s32.totalorder %s32, %s48
    %p50 = scmp.eq.s32.totalorder %s24, 0
    %p51 = por %p49, %p50
    %s53 = sadd.s32 %s52, 1
    %p56 = scmp.eq.s32.totalorder %s18, 1
    %p57 = scmp.ne.s32.totalorder %s52, %s54
    %p58 = scmp.eq.s32.totalorder %s18, 0
    %p59 = por %p57, %p58
    %p60 = scmp.ne.s32.totalorder %s52, %s54
    %p61 = scmp.eq.s32.totalorder %s23, 1
    %p62 = por %p60, %p61
    %p63 = scmp.ne.s32.totalorder %s54, %s55
    %p64 = scmp.eq.s32.totalorder %s23, 0
    %p65 = por %p63, %p64
    %p66 = scmp.ne.s32.totalorder %s54, %s55
    %p67 = scmp.eq.s32.totalorder %s24, 1
    %p68 = por %p66, %p67
    %p70 = scmp.ne.s32.totalorder %s55, %s69
    %p71 = scmp.eq.s32.totalorder %s24, 0
    %p72 = por %p70, %p71
    %s73 = ssub.s32 %s18, %s25
    %p74 = scmp.eq.s32.totalorder %s73, 0
    %s76 = sadd.s32 %s75, 1
    %s77 = scalar_select %p74, %s75, %s76
    %p80 = pneg %p74
    %p81 = scmp.eq.s32.totalorder %s18, 1
    %p82 = por %p80, %p81
    %p83 = scmp.ne.s32.totalorder %s75, %s78
    %p84 = scmp.eq.s32.totalorder %s18, 0
    %p85 = por %p83, %p84
    %p86 = scmp.ne.s32.totalorder %s75, %s78
    %p87 = scmp.eq.s32.totalorder %s23, 1
    %p88 = por %p86, %p87
    %p89 = scmp.ne.s32.totalorder %s78, %s79
    %p90 = scmp.eq.s32.totalorder %s23, 0
    %p91 = por %p89, %p90
    %p92 = scmp.ne.s32.totalorder %s78, %s79
    %p93 = scmp.eq.s32.totalorder %s24, 1
    %p94 = por %p92, %p93
    %p96 = scmp.ne.s32.totalorder %s79, %s95
    %p97 = scmp.eq.s32.totalorder %s24, 0
    %p98 = por %p96, %p97
    %s99 = ssub.s32 %s18, %s25
    %p100 = scmp.eq.s32.totalorder %s99, 0
    %s102 = sadd.s32 %s101, 1
    %s103 = scalar_select %p100, %s101, %s102
    %p106 = pneg %p100
    %p107 = scmp.eq.s32.totalorder %s18, 1
    %p108 = por %p106, %p107
    %p109 = scmp.ne.s32.totalorder %s101, %s104
    %p110 = scmp.eq.s32.totalorder %s18, 0
    %p111 = por %p109, %p110
    %p112 = scmp.ne.s32.totalorder %s101, %s104
    %p113 = scmp.eq.s32.totalorder %s23, 1
    %p114 = por %p112, %p113
    %p115 = scmp.ne.s32.totalorder %s104, %s105
    %p116 = scmp.eq.s32.totalorder %s23, 0
    %p117 = por %p115, %p116
    %p118 = scmp.ne.s32.totalorder %s104, %s105
    %p119 = scmp.eq.s32.totalorder %s24, 1
    %p120 = por %p118, %p119
    %p122 = scmp.ne.s32.totalorder %s105, %s121
    %p123 = scmp.eq.s32.totalorder %s24, 0
    %p124 = por %p122, %p123
    %s125 = ssub.s32 %s18, %s25
    %p126 = scmp.eq.s32.totalorder %s125, 0
    %s128 = sadd.s32 %s127, 1
    %s129 = scalar_select %p126, %s127, %s128
    %p132 = pneg %p126
    %p133 = scmp.eq.s32.totalorder %s18, 1
    %p134 = por %p132, %p133
    %p135 = scmp.ne.s32.totalorder %s127, %s130
    %p136 = scmp.eq.s32.totalorder %s18, 0
    %p137 = por %p135, %p136
    %p138 = scmp.ne.s32.totalorder %s127, %s130
    %p139 = scmp.eq.s32.totalorder %s23, 1
    %p140 = por %p138, %p139
    %p141 = scmp.ne.s32.totalorder %s130, %s131
    %p142 = scmp.eq.s32.totalorder %s23, 0
    %p143 = por %p141, %p142
    %p144 = scmp.ne.s32.totalorder %s130, %s131
    %p145 = scmp.eq.s32.totalorder %s24, 1
    %p146 = por %p144, %p145
    %p148 = scmp.ne.s32.totalorder %s131, %s147
    %p149 = scmp.eq.s32.totalorder %s24, 0
    %p150 = por %p148, %p149
    %s151 = ssub.s32 %s18, %s25
    %p152 = scmp.eq.s32.totalorder %s151, 0
    %s154 = sadd.s32 %s153, 1
    %s155 = scalar_select %p152, %s153, %s154
    %p158 = pneg %p152
    %p159 = scmp.eq.s32.totalorder %s18, 1
    %p160 = por %p158, %p159
    %p161 = scmp.ne.s32.totalorder %s153, %s156
    %p162 = scmp.eq.s32.totalorder %s18, 0
    %p163 = por %p161, %p162
    %p164 = scmp.ne.s32.totalorder %s153, %s156
    %p165 = scmp.eq.s32.totalorder %s23, 1
    %p166 = por %p164, %p165
    %p167 = scmp.ne.s32.totalorder %s156, %s157
    %p168 = scmp.eq.s32.totalorder %s23, 0
    %p169 = por %p167, %p168
    %p170 = scmp.ne.s32.totalorder %s156, %s157
    %p171 = scmp.eq.s32.totalorder %s24, 1
    %p172 = por %p170, %p171
    %p174 = scmp.ne.s32.totalorder %s157, %s173
    %p175 = scmp.eq.s32.totalorder %s24, 0
    %p176 = por %p174, %p175
    %s177 = ssub.s32 %s18, %s25
    %p178 = scmp.eq.s32.totalorder %s177, 0
    %s180 = sadd.s32 %s179, 1
    %s181 = scalar_select %p178, %s179, %s180
    %p184 = pneg %p178
    %p185 = scmp.eq.s32.totalorder %s18, 1
    %p186 = por %p184, %p185
    %p187 = scmp.ne.s32.totalorder %s179, %s182
    %p188 = scmp.eq.s32.totalorder %s18, 0
    %p189 = por %p187, %p188
    %p190 = scmp.ne.s32.totalorder %s179, %s182
    %p191 = scmp.eq.s32.totalorder %s23, 1
    %p192 = por %p190, %p191
    %p193 = scmp.ne.s32.totalorder %s182, %s183
    %p194 = scmp.eq.s32.totalorder %s23, 0
    %p195 = por %p193, %p194
    %p196 = scmp.ne.s32.totalorder %s182, %s183
    %p197 = scmp.eq.s32.totalorder %s24, 1
    %p198 = por %p196, %p197
    %p200 = scmp.ne.s32.totalorder %s183, %s199
    %p201 = scmp.eq.s32.totalorder %s24, 0
    %p202 = por %p200, %p201
    %s203 = ssub.s32 %s18, %s25
    %p204 = scmp.eq.s32.totalorder %s203, 0
    %s206 = sadd.s32 %s205, 1
    %s207 = scalar_select %p204, %s205, %s206
    %p210 = pneg %p204
    %p211 = scmp.eq.s32.totalorder %s18, 1
    %p212 = por %p210, %p211
    %p213 = scmp.ne.s32.totalorder %s205, %s208
    %p214 = scmp.eq.s32.totalorder %s18, 0
    %p215 = por %p213, %p214
    %p216 = scmp.ne.s32.totalorder %s205, %s208
    %p217 = scmp.eq.s32.totalorder %s23, 1
    %p218 = por %p216, %p217
    %p219 = scmp.ne.s32.totalorder %s208, %s209
    %p220 = scmp.eq.s32.totalorder %s23, 0
    %p221 = por %p219, %p220
    %p222 = scmp.ne.s32.totalorder %s208, %s209
    %p223 = scmp.eq.s32.totalorder %s24, 1
    %p224 = por %p222, %p223
    %p226 = scmp.ne.s32.totalorder %s209, %s225
    %p227 = scmp.eq.s32.totalorder %s24, 0
    %p228 = por %p226, %p227
    %s229 = ssub.s32 %s18, %s25
    %p230 = scmp.eq.s32.totalorder %s229, 0
    %s232 = sadd.s32 %s231, 1
    %s233 = scalar_select %p230, %s231, %s232
    %p236 = pneg %p230
    %p237 = scmp.eq.s32.totalorder %s18, 1
    %p238 = por %p236, %p237
    %p239 = scmp.ne.s32.totalorder %s231, %s234
    %p240 = scmp.eq.s32.totalorder %s18, 0
    %p241 = por %p239, %p240
    %p242 = scmp.ne.s32.totalorder %s231, %s234
    %p243 = scmp.eq.s32.totalorder %s23, 1
    %p244 = por %p242, %p243
    %p245 = scmp.ne.s32.totalorder %s234, %s235
    %p246 = scmp.eq.s32.totalorder %s23, 0
    %p247 = por %p245, %p246
    %p248 = scmp.ne.s32.totalorder %s234, %s235
    %p249 = scmp.eq.s32.totalorder %s24, 1
    %p250 = por %p248, %p249
    %p252 = scmp.ne.s32.totalorder %s235, %s251
    %p253 = scmp.eq.s32.totalorder %s24, 0
    %p254 = por %p252, %p253
    %s255 = ssub.s32 %s18, %s25
    %p256 = scmp.eq.s32.totalorder %s255, 0
    %s258 = sadd.s32 %s257, 1
    %s259 = scalar_select %p256, %s257, %s258
    %p262 = pneg %p256
    %p263 = scmp.eq.s32.totalorder %s18, 1
    %p264 = por %p262, %p263
    %p265 = scmp.ne.s32.totalorder %s257, %s260
    %p266 = scmp.eq.s32.totalorder %s18, 0
    %p267 = por %p265, %p266
    %p268 = scmp.ne.s32.totalorder %s257, %s260
    %p269 = scmp.eq.s32.totalorder %s23, 1
    %p270 = por %p268, %p269
    %p271 = scmp.ne.s32.totalorder %s260, %s261
    %p272 = scmp.eq.s32.totalorder %s23, 0
    %p273 = por %p271, %p272
    %p274 = scmp.ne.s32.totalorder %s260, %s261
    %p275 = scmp.eq.s32.totalorder %s24, 1
    %p276 = por %p274, %p275
    %p278 = scmp.ne.s32.totalorder %s261, %s277
    %p279 = scmp.eq.s32.totalorder %s24, 0
    %p280 = por %p278, %p279
    %s281 = ssub.s32 %s18, %s25
    %p282 = scmp.eq.s32.totalorder %s281, 0
    %s284 = sadd.s32 %s283, 1
    %s285 = scalar_select %p282, %s283, %s284
    %p288 = pneg %p282
    %p289 = scmp.eq.s32.totalorder %s18, 1
    %p290 = por %p288, %p289
    %p291 = scmp.ne.s32.totalorder %s283, %s286
    %p292 = scmp.eq.s32.totalorder %s18, 0
    %p293 = por %p291, %p292
    %p294 = scmp.ne.s32.totalorder %s283, %s286
    %p295 = scmp.eq.s32.totalorder %s23, 1
    %p296 = por %p294, %p295
    %p297 = scmp.ne.s32.totalorder %s286, %s287
    %p298 = scmp.eq.s32.totalorder %s23, 0
    %p299 = por %p297, %p298
    %p300 = scmp.ne.s32.totalorder %s286, %s287
    %p301 = scmp.eq.s32.totalorder %s24, 1
    %p302 = por %p300, %p301
    %p304 = scmp.ne.s32.totalorder %s287, %s303
    %p305 = scmp.eq.s32.totalorder %s24, 0
    %p306 = por %p304, %p305
    %s307 = ssub.s32 %s18, %s25
    %p308 = scmp.eq.s32.totalorder %s307, 0
    %s310 = sadd.s32 %s309, 1
    %s311 = scalar_select %p308, %s309, %s310
    %p314 = pneg %p308
    %p315 = scmp.eq.s32.totalorder %s18, 1
    %p316 = por %p314, %p315
    %p317 = scmp.ne.s32.totalorder %s309, %s312
    %p318 = scmp.eq.s32.totalorder %s18, 0
    %p319 = por %p317, %p318
    %p320 = scmp.ne.s32.totalorder %s309, %s312
    %p321 = scmp.eq.s32.totalorder %s23, 1
    %p322 = por %p320, %p321
    %p323 = scmp.ne.s32.totalorder %s312, %s313
    %p324 = scmp.eq.s32.totalorder %s23, 0
    %p325 = por %p323, %p324
    %p326 = scmp.ne.s32.totalorder %s312, %s313
    %p327 = scmp.eq.s32.totalorder %s24, 1
    %p328 = por %p326, %p327
    %p330 = scmp.ne.s32.totalorder %s313, %s329
    %p331 = scmp.eq.s32.totalorder %s24, 0
    %p332 = por %p330, %p331
    %s333 = ssub.s32 %s18, %s25
    %p334 = scmp.eq.s32.totalorder %s333, 0
    %s336 = sadd.s32 %s335, 1
    %s337 = scalar_select %p334, %s335, %s336
    %p340 = pneg %p334
    %p341 = scmp.eq.s32.totalorder %s18, 1
    %p342 = por %p340, %p341
    %p343 = scmp.ne.s32.totalorder %s335, %s338
    %p344 = scmp.eq.s32.totalorder %s18, 0
    %p345 = por %p343, %p344
    %p346 = scmp.ne.s32.totalorder %s335, %s338
    %p347 = scmp.eq.s32.totalorder %s23, 1
    %p348 = por %p346, %p347
    %p349 = scmp.ne.s32.totalorder %s338, %s339
    %p350 = scmp.eq.s32.totalorder %s23, 0
    %p351 = por %p349, %p350
    %p352 = scmp.ne.s32.totalorder %s338, %s339
    %p353 = scmp.eq.s32.totalorder %s24, 1
    %p354 = por %p352, %p353
    %p356 = scmp.ne.s32.totalorder %s339, %s355
    %p357 = scmp.eq.s32.totalorder %s24, 0
    %p358 = por %p356, %p357
    %p359 = scmp.le.s32.totalorder 1, %s18
    %p360 = scmp.lt.s32.totalorder %s18, 3
    %p361 = pnand %p359, %p360
    %p362 = pneg %p361
    // Predicated region
    $region9: #{encoder_forward.5} parent=5 // pred_check
      _
    $region10: #{encoder_forward.5} parent=5 // pred_check_branch
      %364 = sbr.rel (%p361) target = $region12
    $region11: #{encoder_forward.5} parent=5 // pred_region
      %s365 = ssub.s32 %s18, 1
      // Predicated region
      $region13: #{encoder_forward.5} parent=11 // pred_check
        %p366 = pneg %p65
      $region14: #{encoder_forward.5} parent=11 // pred_check_branch
        %368 = sbr.rel (%p366) target = $region16
      $region15: #{encoder_forward.5} parent=11 // pred_region
        _
      $region16: #{encoder_forward.5} parent=11 // pred_fallthru
        _
    $region12: #{encoder_forward.5} parent=5 // pred_fallthru
      _
    %p369 = scmp.lt.s32.totalorder %s18, 2
    // Predicated region
    $region17: #{encoder_forward.5} parent=5 // pred_check
      %p370 = pneg %p369
    $region18: #{encoder_forward.5} parent=5 // pred_check_branch
      %372 = sbr.rel (%p370) target = $region20
    $region19: #{encoder_forward.5} parent=5 // pred_region
      // Predicated region
      $region21: #{encoder_forward.5} parent=19 // pred_check
        %p373 = pneg %p38
      $region22: #{encoder_forward.5} parent=19 // pred_check_branch
        %375 = sbr.rel (%p373) target = $region24
      $region23: #{encoder_forward.5} parent=19 // pred_region
        %p376 = scmp.lt.s32.totalorder %s18, 1
        %s377 = scalar_select %p376, %s18, 1
        %s378 = smul.addr %s377, 2
        %s379 = smul.addr %s378, 8
        %s380 = scalar_lea.vmem %s0, %s379
      $region24: #{encoder_forward.5} parent=19 // pred_fallthru
        _
      // Predicated region
      $region25: #{encoder_forward.5} parent=19 // pred_check
        %p381 = pneg %p85
      $region26: #{encoder_forward.5} parent=19 // pred_check_branch
        %383 = sbr.rel (%p381) target = $region28
      $region27: #{encoder_forward.5} parent=19 // pred_region
        %p384 = scmp.lt.s32.totalorder %s18, 1
        %s385 = scalar_select %p384, %s18, 1
        %s386 = smul.addr %s385, 4
        %s387 = smul.addr %s386, 8
        %s388 = scalar_lea.vmem %s2, %s387
      $region28: #{encoder_forward.5} parent=19 // pred_fallthru
        _
      // Predicated region
      $region29: #{encoder_forward.5} parent=19 // pred_check
        %p389 = pneg %p111
      $region30: #{encoder_forward.5} parent=19 // pred_check_branch
        %391 = sbr.rel (%p389) target = $region32
      $region31: #{encoder_forward.5} parent=19 // pred_region
        %p392 = scmp.lt.s32.totalorder %s18, 1
        %s393 = scalar_select %p392, %s18, 1
        %s394 = scalar_lea.vmem %s3, %s393
      $region32: #{encoder_forward.5} parent=19 // pred_fallthru
        _
      // Predicated region
      $region33: #{encoder_forward.5} parent=19 // pred_check
        %p395 = pneg %p137
      $region34: #{encoder_forward.5} parent=19 // pred_check_branch
        %397 = sbr.rel (%p395) target = $region36
      $region35: #{encoder_forward.5} parent=19 // pred_region
        %p398 = scmp.lt.s32.totalorder %s18, 1
        %s399 = scalar_select %p398, %s18, 1
        %s400 = scalar_lea.vmem %s4, %s399
      $region36: #{encoder_forward.5} parent=19 // pred_fallthru
        _
      // Predicated region
      $region37: #{encoder_forward.5} parent=19 // pred_check
        %p401 = pneg %p163
      $region38: #{encoder_forward.5} parent=19 // pred_check_branch
        %403 = sbr.rel (%p401) target = $region40
      $region39: #{encoder_forward.5} parent=19 // pred_region
        %p404 = scmp.lt.s32.totalorder %s18, 1
        %s405 = scalar_select %p404, %s18, 1
        %s406 = scalar_lea.vmem %s5, %s405
      $region40: #{encoder_forward.5} parent=19 // pred_fallthru
        _
      // Predicated region
      $region41: #{encoder_forward.5} parent=19 // pred_check
        %p407 = pneg %p189
      $region42: #{encoder_forward.5} parent=19 // pred_check_branch
        %409 = sbr.rel (%p407) target = $region44
      $region43: #{encoder_forward.5} parent=19 // pred_region
        %p410 = scmp.lt.s32.totalorder %s18, 1
        %s411 = scalar_select %p410, %s18, 1
        %s412 = smul.addr %s411, 4
        %s413 = smul.addr %s412, 8
        %s414 = scalar_lea.vmem %s6, %s413
      $region44: #{encoder_forward.5} parent=19 // pred_fallthru
        _
      // Predicated region
      $region45: #{encoder_forward.5} parent=19 // pred_check
        %p415 = pneg %p215
      $region46: #{encoder_forward.5} parent=19 // pred_check_branch
        %417 = sbr.rel (%p415) target = $region48
      $region47: #{encoder_forward.5} parent=19 // pred_region
        %p418 = scmp.lt.s32.totalorder %s18, 1
        %s419 = scalar_select %p418, %s18, 1
        %s420 = scalar_lea.vmem %s7, %s419
      $region48: #{encoder_forward.5} parent=19 // pred_fallthru
        _
      // Predicated region
      $region49: #{encoder_forward.5} parent=19 // pred_check
        %p421 = pneg %p241
      $region50: #{encoder_forward.5} parent=19 // pred_check_branch
        %423 = sbr.rel (%p421) target = $region52
      $region51: #{encoder_forward.5} parent=19 // pred_region
        %p424 = scmp.lt.s32.totalorder %s18, 1
        %s425 = scalar_select %p424, %s18, 1
        %s426 = smul.addr %s425, 8
        %s427 = smul.addr %s426, 8
        %s428 = scalar_lea.vmem %s8, %s427
      $region52: #{encoder_forward.5} parent=19 // pred_fallthru
        _
      // Predicated region
      $region53: #{encoder_forward.5} parent=19 // pred_check
        %p429 = pneg %p267
      $region54: #{encoder_forward.5} parent=19 // pred_check_branch
        %431 = sbr.rel (%p429) target = $region56
      $region55: #{encoder_forward.5} parent=19 // pred_region
        %p432 = scmp.lt.s32.totalorder %s18, 1
        %s433 = scalar_select %p432, %s18, 1
        %s434 = scalar_lea.vmem %s9, %s433
      $region56: #{encoder_forward.5} parent=19 // pred_fallthru
        _
      // Predicated region
      $region57: #{encoder_forward.5} parent=19 // pred_check
        %p435 = pneg %p293
      $region58: #{encoder_forward.5} parent=19 // pred_check_branch
        %437 = sbr.rel (%p435) target = $region60
      $region59: #{encoder_forward.5} parent=19 // pred_region
        %p438 = scmp.lt.s32.totalorder %s18, 1
        %s439 = scalar_select %p438, %s18, 1
        %s440 = scalar_lea.vmem %s10, %s439
      $region60: #{encoder_forward.5} parent=19 // pred_fallthru
        _
      // Predicated region
      $region61: #{encoder_forward.5} parent=19 // pred_check
        %p441 = pneg %p319
      $region62: #{encoder_forward.5} parent=19 // pred_check_branch
        %443 = sbr.rel (%p441) target = $region64
      $region63: #{encoder_forward.5} parent=19 // pred_region
        %p444 = scmp.lt.s32.totalorder %s18, 1
        %s445 = scalar_select %p444, %s18, 1
        %s446 = scalar_lea.vmem %s11, %s445
      $region64: #{encoder_forward.5} parent=19 // pred_fallthru
        _
    $region20: #{encoder_forward.5} parent=5 // pred_fallthru
      _
    %p447 = scmp.le.s32.totalorder 1, %s18
    %p448 = scmp.lt.s32.totalorder %s18, 3
    %p449 = pnand %p447, %p448
    %p450 = pneg %p449
    // Predicated region
    $region65: #{encoder_forward.5} parent=5 // pred_check
      _
    $region66: #{encoder_forward.5} parent=5 // pred_check_branch
      %452 = sbr.rel (%p449) target = $region68
    $region67: #{encoder_forward.5} parent=5 // pred_region
      %s453 = ssub.s32 %s18, 1
      %p454 = scmp.lt.s32.totalorder %s23, 1
      %s455 = scalar_select %p454, %s23, 1
      %s456 = smul.addr %s455, 2
      %s457 = smul.addr %s456, 8
      %s458 = scalar_lea.vmem %s0, %s457
      %p459 = pneg %p44
      %p460 = pneg %p41
      %p461 = pneg %p65
      %p462 = pneg %p62
      %p463 = scmp.lt.s32.totalorder %s23, 1
      %s464 = scalar_select %p463, %s23, 1
      %s465 = smul.addr %s464, 4
      %s466 = smul.addr %s465, 8
      %s467 = scalar_lea.vmem %s2, %s466
      %p468 = pneg %p91
      %p469 = pneg %p88
      %p470 = scmp.lt.s32.totalorder %s23, 1
      %s471 = scalar_select %p470, %s23, 1
      %s472 = scalar_lea.vmem %s3, %s471
      %p473 = pneg %p117
      %p474 = pneg %p114
      %p475 = scmp.lt.s32.totalorder %s23, 1
      %s476 = scalar_select %p475, %s23, 1
      %s477 = scalar_lea.vmem %s4, %s476
      %p478 = pneg %p143
      %p479 = pneg %p140
      %p480 = scmp.lt.s32.totalorder %s23, 1
      %s481 = scalar_select %p480, %s23, 1
      %s482 = scalar_lea.vmem %s5, %s481
      %p483 = pneg %p169
      %p484 = pneg %p166
      %p485 = scmp.lt.s32.totalorder %s23, 1
      %s486 = scalar_select %p485, %s23, 1
      %s487 = smul.addr %s486, 4
      %s488 = smul.addr %s487, 8
      %s489 = scalar_lea.vmem %s6, %s488
      %p490 = pneg %p195
      %p491 = pneg %p192
      %p492 = scmp.lt.s32.totalorder %s23, 1
      %s493 = scalar_select %p492, %s23, 1
      %s494 = scalar_lea.vmem %s7, %s493
      %p495 = pneg %p221
      %p496 = pneg %p218
      %p497 = scmp.lt.s32.totalorder %s23, 1
      %s498 = scalar_select %p497, %s23, 1
      %s499 = smul.addr %s498, 8
      %s500 = smul.addr %s499, 8
      %s501 = scalar_lea.vmem %s8, %s500
      %p502 = pneg %p247
      %p503 = pneg %p244
      %p504 = scmp.lt.s32.totalorder %s23, 1
      %s505 = scalar_select %p504, %s23, 1
      %s506 = scalar_lea.vmem %s9, %s505
      %p507 = pneg %p273
      %p508 = pneg %p270
      %p509 = scmp.lt.s32.totalorder %s23, 1
      %s510 = scalar_select %p509, %s23, 1
      %s511 = scalar_lea.vmem %s10, %s510
      %p512 = pneg %p299
      %p513 = pneg %p296
      %p514 = scmp.lt.s32.totalorder %s23, 1
      %s515 = scalar_select %p514, %s23, 1
      %s516 = scalar_lea.vmem %s11, %s515
      %p517 = pneg %p325
      %p518 = pneg %p322
      %p519 = pneg %p351
      %p520 = pneg %p348
      %p521 = scmp.lt.s32.totalorder %s23, 1
      %s522 = scalar_select %p521, %s23, 1
      %s523 = smul.addr %s522, 2
      %s524 = smul.addr %s523, 8
      %s525 = scalar_lea.vmem %s12, %s524
      %p526 = scmp.lt.s32.totalorder %s23, 1
      %s527 = scalar_select %p526, %s23, 1
      %s528 = smul.addr %s527, 2
      %s529 = smul.addr %s528, 8
      %s530 = scalar_lea.vmem %s0, %s529
      %p531 = scmp.lt.s32.totalorder %s23, 1
      %s532 = scalar_select %p531, %s23, 1
      %s533 = smul.addr %s532, 4
      %s534 = smul.addr %s533, 8
      %s535 = scalar_lea.vmem %s2, %s534
      %p536 = scmp.lt.s32.totalorder %s23, 1
      %s537 = scalar_select %p536, %s23, 1
      %s538 = scalar_lea.vmem %s3, %s537
      %p539 = scmp.lt.s32.totalorder %s23, 1
      %s540 = scalar_select %p539, %s23, 1
      %s541 = scalar_lea.vmem %s4, %s540
      %p542 = scmp.lt.s32.totalorder %s23, 1
      %s543 = scalar_select %p542, %s23, 1
      %s544 = scalar_lea.vmem %s5, %s543
      %p545 = scmp.lt.s32.totalorder %s23, 1
      %s546 = scalar_select %p545, %s23, 1
      %s547 = smul.addr %s546, 4
      %s548 = smul.addr %s547, 8
      %s549 = scalar_lea.vmem %s6, %s548
      %p550 = scmp.lt.s32.totalorder %s23, 1
      %s551 = scalar_select %p550, %s23, 1
      %s552 = scalar_lea.vmem %s7, %s551
      %p553 = scmp.lt.s32.totalorder %s23, 1
      %s554 = scalar_select %p553, %s23, 1
      %s555 = smul.addr %s554, 8
      %s556 = smul.addr %s555, 8
      %s557 = scalar_lea.vmem %s8, %s556
      %p558 = scmp.lt.s32.totalorder %s23, 1
      %s559 = scalar_select %p558, %s23, 1
      %s560 = scalar_lea.vmem %s9, %s559
      %p561 = scmp.lt.s32.totalorder %s23, 1
      %s562 = scalar_select %p561, %s23, 1
      %s563 = scalar_lea.vmem %s10, %s562
      %p564 = scmp.lt.s32.totalorder %s23, 1
      %s565 = scalar_select %p564, %s23, 1
      %s566 = scalar_lea.vmem %s11, %s565
      %p567 = scmp.lt.s32.totalorder %s23, 1
      %s568 = scalar_select %p567, %s23, 1
      %s569 = smul.addr %s568, 2
      %s570 = smul.addr %s569, 8
      %s571 = scalar_lea.vmem %s12, %s570
      %v572 = vld [vmem:[%s530] sm:$0xff]
      %v573 = vld [vmem:[%s530 + $0x8] sm:$0xff]
      %v574 = vld [vmem:[%s1] sm:$0xff]
      %v575 = vld [vmem:[%s1 + $0x8] sm:$0xff]
      %v576 = vld [vmem:[%s535] sm:$0xff]
      %v577 = vld [vmem:[%s535 + $0x8] sm:$0xff]
      %v578 = vld [vmem:[%s535 + $0x10] sm:$0xff]
      %v579 = vld [vmem:[%s535 + $0x18] sm:$0xff]
      %v580 = vld [vmem:[%s538] sm:$0x1]
      %v582 = vlaneseq
      %v583 = vshrl.u32 %v582, 7
      %v584 = vsub.s32 0, %v583
      %v585 = vrot.slane %v580, %v584
      %vm587 = vcmask 261120
      %v589 = vsel %vm587, %v572, 0
      %v592 = vsel %vm587, %v573, 0
      %594 = vmatprep.subr.mxu0 0.0
      %595 = vmatpush1.msra.mxu0 0.0
      %596 = vmatprep.subr.mxu0 0.0
      %597 = vmatpush1.msra.mxu0 0.0
      %598 = vmatprep.subr.mxu0 0.0
      %599 = vmatpush1.msra.mxu0 0.0
      %600 = vmatprep.subr.mxu0 0.0
      %601 = vmatpush1.msra.mxu0 0.0
      %602 = vmatprep.subr.mxu0 0.0
      %603 = vmatpush1.msra.mxu0 0.0
      %604 = vmatprep.subr.mxu0 0.0
      %605 = vmatpush1.msra.mxu0 0.0
      %606 = vmatprep.subr.mxu0 0.0
      %607 = vmatpush1.msra.mxu0 0.0
      %608 = vmatprep.subr.mxu0 0.0
      %609 = vmatpush1.msra.mxu0 0.0
      %610 = vmatprep.subr.mxu0 0.0
      %611 = vmatpush1.msra.mxu0 0.0
      %612 = vmatprep.subr.mxu0 0.0
      %613 = vmatpush1.msra.mxu0 0.0
      %614 = vmatprep.subr.mxu0 0.0
      %615 = vmatpush1.msra.mxu0 0.0
      %616 = vmatprep.subr.mxu0 0.0
      %617 = vmatpush1.msra.mxu0 0.0
      %618 = vmatprep.subr.mxu0 0.0
      %619 = vmatpush1.msra.mxu0 %v579
      %620 = vmatprep.subr.mxu0 0.0
      %621 = vmatpush1.msra.mxu0 %v578
      %622 = vmatprep.subr.mxu0 0.0
      %623 = vmatpush1.msra.mxu0 %v577
      %624 = vmatprep.subr.mxu0 0.0
      %625 = vmatpush1.msra.mxu0 %v576
      %626 = vmatprep.subr.mxu0 0.0
      %627 = vmatpush2.msra.mxu0 0.0
      %628 = vmatprep.subr.mxu0 0.0
      %629 = vmatpush2.msra.mxu0 0.0
      %630 = vmatprep.subr.mxu0 0.0
      %631 = vmatpush2.msra.mxu0 0.0
      %632 = vmatprep.subr.mxu0 0.0
      %633 = vmatpush2.msra.mxu0 0.0
      %634 = vmatprep.subr.mxu0 0.0
      %635 = vmatpush2.msra.mxu0 0.0
      %636 = vmatprep.subr.mxu0 0.0
      %637 = vmatpush2.msra.mxu0 0.0
      %638 = vmatprep.subr.mxu0 0.0
      %639 = vmatpush2.msra.mxu0 0.0
      %640 = vmatprep.subr.mxu0 0.0
      %641 = vmatpush2.msra.mxu0 0.0
      %642 = vmatprep.subr.mxu0 0.0
      %643 = vmatpush2.msra.mxu0 0.0
      %644 = vmatprep.subr.mxu0 0.0
      %645 = vmatpush2.msra.mxu0 0.0
      %646 = vmatprep.subr.mxu0 0.0
      %647 = vmatpush2.msra.mxu0 0.0
      %648 = vmatprep.subr.mxu0 0.0
      %649 = vmatpush2.msra.mxu0 0.0
      %650 = vmatprep.subr.mxu0 0.0
      %651 = vmatpush2.msra.mxu0 0.0
      %652 = vmatprep.subr.mxu0 0.0
      %653 = vmatpush2.msra.mxu0 0.0
      %654 = vmatprep.subr.mxu0 0.0
      %655 = vmatpush2.msra.mxu0 0.0
      %656 = vmatprep.subr.mxu0 0.0
      %657 = vmatpush2.msra.mxu0 0.0
      %658 = vmatprep.mubr.f32.mxu0 0.0
      %659 = vmatmul.mubr.f32.gmra.mxu0 %v589
      %v660 = vpop.f32.mrf.mxu0
      %v661 = vadd.f32 %v585, %v660
      %v662 = vpop.f32.mrf.mxu0
      %663 = vmatprep.mubr.f32.mxu0 0.0
      %664 = vmatmul.mubr.f32.gmra.mxu0 %v592
      %v665 = vpop.f32.mrf.mxu0
      %v666 = vadd.f32 %v585, %v665
      %v667 = vpop.f32.mrf.mxu0
      %668 = vdwg.mxu0
      %v669 = vadd.f32 %v574, %v661
      %v670 = vadd.f32 %v575, %v666
      %v671 = vld [vmem:[%s541] sm:$0x1]
      %v672 = vld [vmem:[%s544] sm:$0x1]
      %v673 = vsel %vm587, %v669, 0.0
      %674 = vadd.xlane.f32.xlu0 %v673
      %v675 = vpop.xlane.xlu0 %674
      %v676 = vsel %vm587, %v670, 0.0
      %677 = vadd.xlane.f32.xlu0 %v676
      %v678 = vpop.xlane.xlu0 %677
      %v679 = vrcp.pop 32.0
      %v680 = vmul.f32 %v675, %v679
      %v681 = vmul.f32 %v678, %v679
      %v682 = vsub.f32 %v669, %v680
      %v683 = vsub.f32 %v670, %v681
      %v684 = vmul.f32 %v682, %v682
      %v685 = vmul.f32 %v683, %v683
      %v686 = vsel %vm587, %v684, 0.0
      %687 = vadd.xlane.f32.xlu0 %v686
      %v688 = vpop.xlane.xlu0 %687
      %v689 = vsel %vm587, %v685, 0.0
      %690 = vadd.xlane.f32.xlu0 %v689
      %v691 = vpop.xlane.xlu0 %690
      %v692 = vmul.f32 %v688, %v679
      %v693 = vmul.f32 %v691, %v679
      %v694 = vadd.f32 %v692, 1e-05
      %v695 = vadd.f32 %v693, 1e-05
      %v696 = vrsqrt.pop %v694
      %v697 = vrsqrt.pop %v695
      %v698 = vmul.f32 %v682, %v696
      %v699 = vmul.f32 %v683, %v697
      %v701 = vlaneseq
      %v702 = vshrl.u32 %v701, 7
      %v703 = vsub.s32 0, %v702
      %v704 = vrot.slane %v671, %v703
      %v706 = vmul.f32 %v698, %v704
      %v707 = vmul.f32 %v699, %v704
      %v709 = vlaneseq
      %v710 = vshrl.u32 %v709, 7
      %v711 = vsub.s32 0, %v710
      %v712 = vrot.slane %v672, %v711
      %v714 = vadd.f32 %v706, %v712
      %v715 = vadd.f32 %v707, %v712
      %v716 = vld [vmem:[%s549] sm:$0xff]
      %v717 = vld [vmem:[%s549 + $0x8] sm:$0xff]
      %v718 = vld [vmem:[%s549 + $0x10] sm:$0xff]
      %v719 = vld [vmem:[%s549 + $0x18] sm:$0xff]
      %v720 = vld [vmem:[%s552] sm:$0x1]
      %v722 = vlaneseq
      %v723 = vshrl.u32 %v722, 7
      %v724 = vsub.s32 0, %v723
      %v725 = vrot.slane %v720, %v724
      %v728 = vsel %vm587, %v714, 0
      %v731 = vsel %vm587, %v715, 0
      %733 = vmatprep.subr.mxu0 0.0
      %734 = vmatpush1.msra.mxu0 0.0
      %735 = vmatprep.subr.mxu0 0.0
      %736 = vmatpush1.msra.mxu0 0.0
      %737 = vmatprep.subr.mxu0 0.0
      %738 = vmatpush1.msra.mxu0 0.0
      %739 = vmatprep.subr.mxu0 0.0
      %740 = vmatpush1.msra.mxu0 0.0
      %741 = vmatprep.subr.mxu0 0.0
      %742 = vmatpush1.msra.mxu0 0.0
      %743 = vmatprep.subr.mxu0 0.0
      %744 = vmatpush1.msra.mxu0 0.0
      %745 = vmatprep.subr.mxu0 0.0
      %746 = vmatpush1.msra.mxu0 0.0
      %747 = vmatprep.subr.mxu0 0.0
      %748 = vmatpush1.msra.mxu0 0.0
      %749 = vmatprep.subr.mxu0 0.0
      %750 = vmatpush1.msra.mxu0 0.0
      %751 = vmatprep.subr.mxu0 0.0
      %752 = vmatpush1.msra.mxu0 0.0
      %753 = vmatprep.subr.mxu0 0.0
      %754 = vmatpush1.msra.mxu0 0.0
      %755 = vmatprep.subr.mxu0 0.0
      %756 = vmatpush1.msra.mxu0 0.0
      %757 = vmatprep.subr.mxu0 0.0
      %758 = vmatpush1.msra.mxu0 %v719
      %759 = vmatprep.subr.mxu0 0.0
      %760 = vmatpush1.msra.mxu0 %v718
      %761 = vmatprep.subr.mxu0 0.0
      %762 = vmatpush1.msra.mxu0 %v717
      %763 = vmatprep.subr.mxu0 0.0
      %764 = vmatpush1.msra.mxu0 %v716
      %765 = vmatprep.subr.mxu0 0.0
      %766 = vmatpush2.msra.mxu0 0.0
      %767 = vmatprep.subr.mxu0 0.0
      %768 = vmatpush2.msra.mxu0 0.0
      %769 = vmatprep.subr.mxu0 0.0
      %770 = vmatpush2.msra.mxu0 0.0
      %771 = vmatprep.subr.mxu0 0.0
      %772 = vmatpush2.msra.mxu0 0.0
      %773 = vmatprep.subr.mxu0 0.0
      %774 = vmatpush2.msra.mxu0 0.0
      %775 = vmatprep.subr.mxu0 0.0
      %776 = vmatpush2.msra.mxu0 0.0
      %777 = vmatprep.subr.mxu0 0.0
      %778 = vmatpush2.msra.mxu0 0.0
      %779 = vmatprep.subr.mxu0 0.0
      %780 = vmatpush2.msra.mxu0 0.0
      %781 = vmatprep.subr.mxu0 0.0
      %782 = vmatpush2.msra.mxu0 0.0
      %783 = vmatprep.subr.mxu0 0.0
      %784 = vmatpush2.msra.mxu0 0.0
      %785 = vmatprep.subr.mxu0 0.0
      %786 = vmatpush2.msra.mxu0 0.0
      %787 = vmatprep.subr.mxu0 0.0
      %788 = vmatpush2.msra.mxu0 0.0
      %789 = vmatprep.subr.mxu0 0.0
      %790 = vmatpush2.msra.mxu0 0.0
      %791 = vmatprep.subr.mxu0 0.0
      %792 = vmatpush2.msra.mxu0 0.0
      %793 = vmatprep.subr.mxu0 0.0
      %794 = vmatpush2.msra.mxu0 0.0
      %795 = vmatprep.subr.mxu0 0.0
      %796 = vmatpush2.msra.mxu0 0.0
      %797 = vmatprep.mubr.f32.mxu0 0.0
      %798 = vmatmul.mubr.f32.gmra.mxu0 %v728
      %v799 = vpop.f32.mrf.mxu0
      %v800 = vadd.f32 %v725, %v799
      %v801 = vpop.f32.mrf.mxu0
      %802 = vmatprep.mubr.f32.mxu0 0.0
      %803 = vmatmul.mubr.f32.gmra.mxu0 %v731
      %v804 = vpop.f32.mrf.mxu0
      %v805 = vadd.f32 %v725, %v804
      %v806 = vpop.f32.mrf.mxu0
      %807 = vdwg.mxu0
      %v808 = vmax.f32 %v800, 0.0
      %v809 = vmax.f32 %v805, 0.0
      %v810 = vld [vmem:[%s557] sm:$0xff]
      %v811 = vld [vmem:[%s557 + $0x8] sm:$0xff]
      %v812 = vld [vmem:[%s557 + $0x10] sm:$0xff]
      %v813 = vld [vmem:[%s557 + $0x18] sm:$0xff]
      %v814 = vld [vmem:[%s557 + $0x20] sm:$0xff]
      %v815 = vld [vmem:[%s557 + $0x28] sm:$0xff]
      %v816 = vld [vmem:[%s557 + $0x30] sm:$0xff]
      %v817 = vld [vmem:[%s557 + $0x38] sm:$0xff]
      %v818 = vld [vmem:[%s560] sm:$0x1]
      %v820 = vlaneseq
      %v821 = vshrl.u32 %v820, 7
      %v822 = vsub.s32 0, %v821
      %v823 = vrot.slane %v818, %v822
      %vm825 = vcmask 523264
      %v827 = vsel %vm825, %v808, 0
      %v830 = vsel %vm825, %v809, 0
      %832 = vmatprep.subr.mxu0 0.0
      %833 = vmatpush1.msra.mxu0 0.0
      %834 = vmatprep.subr.mxu0 0.0
      %835 = vmatpush1.msra.mxu0 0.0
      %836 = vmatprep.subr.mxu0 0.0
      %837 = vmatpush1.msra.mxu0 0.0
      %838 = vmatprep.subr.mxu0 0.0
      %839 = vmatpush1.msra.mxu0 0.0
      %840 = vmatprep.subr.mxu0 0.0
      %841 = vmatpush1.msra.mxu0 0.0
      %842 = vmatprep.subr.mxu0 0.0
      %843 = vmatpush1.msra.mxu0 0.0
      %844 = vmatprep.subr.mxu0 0.0
      %845 = vmatpush1.msra.mxu0 0.0
      %846 = vmatprep.subr.mxu0 0.0
      %847 = vmatpush1.msra.mxu0 0.0
      %848 = vmatprep.subr.mxu0 0.0
      %849 = vmatpush1.msra.mxu0 %v817
      %850 = vmatprep.subr.mxu0 0.0
      %851 = vmatpush1.msra.mxu0 %v816
      %852 = vmatprep.subr.mxu0 0.0
      %853 = vmatpush1.msra.mxu0 %v815
      %854 = vmatprep.subr.mxu0 0.0
      %855 = vmatpush1.msra.mxu0 %v814
      %856 = vmatprep.subr.mxu0 0.0
      %857 = vmatpush1.msra.mxu0 %v813
      %858 = vmatprep.subr.mxu0 0.0
      %859 = vmatpush1.msra.mxu0 %v812
      %860 = vmatprep.subr.mxu0 0.0
      %861 = vmatpush1.msra.mxu0 %v811
      %862 = vmatprep.subr.mxu0 0.0
      %863 = vmatpush1.msra.mxu0 %v810
      %864 = vmatprep.subr.mxu0 0.0
      %865 = vmatpush2.msra.mxu0 0.0
      %866 = vmatprep.subr.mxu0 0.0
      %867 = vmatpush2.msra.mxu0 0.0
      %868 = vmatprep.subr.mxu0 0.0
      %869 = vmatpush2.msra.mxu0 0.0
      %870 = vmatprep.subr.mxu0 0.0
      %871 = vmatpush2.msra.mxu0 0.0
      %872 = vmatprep.subr.mxu0 0.0
      %873 = vmatpush2.msra.mxu0 0.0
      %874 = vmatprep.subr.mxu0 0.0
      %875 = vmatpush2.msra.mxu0 0.0
      %876 = vmatprep.subr.mxu0 0.0
      %877 = vmatpush2.msra.mxu0 0.0
      %878 = vmatprep.subr.mxu0 0.0
      %879 = vmatpush2.msra.mxu0 0.0
      %880 = vmatprep.subr.mxu0 0.0
      %881 = vmatpush2.msra.mxu0 0.0
      %882 = vmatprep.subr.mxu0 0.0
      %883 = vmatpush2.msra.mxu0 0.0
      %884 = vmatprep.subr.mxu0 0.0
      %885 = vmatpush2.msra.mxu0 0.0
      %886 = vmatprep.subr.mxu0 0.0
      %887 = vmatpush2.msra.mxu0 0.0
      %888 = vmatprep.subr.mxu0 0.0
      %889 = vmatpush2.msra.mxu0 0.0
      %890 = vmatprep.subr.mxu0 0.0
      %891 = vmatpush2.msra.mxu0 0.0
      %892 = vmatprep.subr.mxu0 0.0
      %893 = vmatpush2.msra.mxu0 0.0
      %894 = vmatprep.subr.mxu0 0.0
      %895 = vmatpush2.msra.mxu0 0.0
      %896 = vmatprep.mubr.f32.mxu0 0.0
      %897 = vmatmul.mubr.f32.gmra.mxu0 %v827
      %v898 = vpop.f32.mrf.mxu0
      %v899 = vadd.f32 %v823, %v898
      %v900 = vpop.f32.mrf.mxu0
      %901 = vmatprep.mubr.f32.mxu0 0.0
      %902 = vmatmul.mubr.f32.gmra.mxu0 %v830
      %v903 = vpop.f32.mrf.mxu0
      %v904 = vadd.f32 %v823, %v903
      %v905 = vpop.f32.mrf.mxu0
      %906 = vdwg.mxu0
      %v907 = vadd.f32 %v714, %v899
      %v908 = vadd.f32 %v715, %v904
      %v909 = vld [vmem:[%s563] sm:$0x1]
      %v910 = vld [vmem:[%s566] sm:$0x1]
      %v911 = vsel %vm587, %v907, 0.0
      %912 = vadd.xlane.f32.xlu0 %v911
      %v913 = vpop.xlane.xlu0 %912
      %v914 = vsel %vm587, %v908, 0.0
      %915 = vadd.xlane.f32.xlu0 %v914
      %v916 = vpop.xlane.xlu0 %915
      %v917 = vmul.f32 %v913, %v679
      %v918 = vmul.f32 %v916, %v679
      %v919 = vsub.f32 %v907, %v917
      %v920 = vsub.f32 %v908, %v918
      %v921 = vmul.f32 %v919, %v919
      %v922 = vmul.f32 %v920, %v920
      %v923 = vsel %vm587, %v921, 0.0
      %924 = vadd.xlane.f32.xlu0 %v923
      %v925 = vpop.xlane.xlu0 %924
      %v926 = vsel %vm587, %v922, 0.0
      %927 = vadd.xlane.f32.xlu0 %v926
      %v928 = vpop.xlane.xlu0 %927
      %v929 = vmul.f32 %v925, %v679
      %v930 = vmul.f32 %v928, %v679
      %v931 = vadd.f32 %v929, 1e-05
      %v932 = vadd.f32 %v930, 1e-05
      %v933 = vrsqrt.pop %v931
      %v934 = vrsqrt.pop %v932
      %v935 = vmul.f32 %v919, %v933
      %v936 = vmul.f32 %v920, %v934
      %v938 = vlaneseq
      %v939 = vshrl.u32 %v938, 7
      %v940 = vsub.s32 0, %v939
      %v941 = vrot.slane %v909, %v940
      %v943 = vmul.f32 %v935, %v941
      %v944 = vmul.f32 %v936, %v941
      %v946 = vlaneseq
      %v947 = vshrl.u32 %v946, 7
      %v948 = vsub.s32 0, %v947
      %v949 = vrot.slane %v910, %v948
      %v951 = vadd.f32 %v943, %v949
      %v952 = vadd.f32 %v944, %v949
      %953 = vst.msk [vmem:[%s571] sm:$0xff] %vm587, %v951
      %954 = vst.msk [vmem:[%s571 + $0x8] sm:$0xff] %vm587, %v952
      %p955 = scmp.lt.s32.totalorder %s23, 1
      %s956 = scalar_select %p955, %s23, 1
      %s957 = smul.addr %s956, 2
      %s958 = smul.addr %s957, 8
      %s959 = scalar_lea.vmem %s12, %s958
      // Predicated region
      $region69: #{encoder_forward.5} parent=67 // pred_check
        %p960 = pneg %p348
      $region70: #{encoder_forward.5} parent=67 // pred_check_branch
        %962 = sbr.rel (%p960) target = $region72
      $region71: #{encoder_forward.5} parent=67 // pred_region
        _
      $region72: #{encoder_forward.5} parent=67 // pred_fallthru
        _
    $region68: #{encoder_forward.5} parent=5 // pred_fallthru
      _
    %p963 = scmp.le.s32.totalorder 2, %s18
    // Predicated region
    $region73: #{encoder_forward.5} parent=5 // pred_check
      %p964 = pneg %p963
    $region74: #{encoder_forward.5} parent=5 // pred_check_branch
      %966 = sbr.rel (%p964) target = $region76
    $region75: #{encoder_forward.5} parent=5 // pred_region
      %s967 = ssub.s32 %s18, 2
      // Predicated region
      $region77: #{encoder_forward.5} parent=75 // pred_check
        %p968 = pneg %p354
      $region78: #{encoder_forward.5} parent=75 // pred_check_branch
        %970 = sbr.rel (%p968) target = $region80
      $region79: #{encoder_forward.5} parent=75 // pred_region
        %p971 = scmp.lt.s32.totalorder %s24, 1
        %s972 = scalar_select %p971, %s24, 1
        %s973 = smul.addr %s972, 2
        %s974 = smul.addr %s973, 8
        %s975 = scalar_lea.vmem %s12, %s974
      $region80: #{encoder_forward.5} parent=75 // pred_fallthru
        _
    $region76: #{encoder_forward.5} parent=5 // pred_fallthru
      _
  $region6: #{encoder_forward.5} parent=0 // loop_footer
    %s22 = sadd.s32 1, %s18
  $region7: #{encoder_forward.5} parent=0 // loop_footer_branch
    %17 = sbr.rel target = $region3
  $region8: #{encoder_forward.5} parent=0 // loop_exit
    _

// kernel: encoder_forward.4
$region0: #{encoder_forward.4}
  #allocation0 [shape = 'u32[]', space=smem, size = 0x4, offset = 0x4, fixed_abs, tag = 'smem constant byte address 0x4 - core index']
  #allocation1 [shape = 'u32[144,128]{1,0:T(1,128)}', space=vmem, size = 0x12000, scoped, tag = 'internal scratch']
  %s0 = inlined_call_operand.vmem [shape: f32[2,8,8,8], index: 0, kind: input, shape index: {}]
  %s1 = inlined_call_operand.vmem [shape: f32[2,8,8,8], index: 1, kind: input, shape index: {}]
  %s2 = inlined_call_operand.vmem [shape: f32[2,8,8,8], index: 2, kind: input, shape index: {}]
  %s3 = inlined_call_operand.vmem [shape: f32[2,8,8,8], index: 3, kind: output, shape index: {0}]
  %s4 = inlined_call_operand.vmem [shape: f32[2,8,8,8], index: 4, kind: output, shape index: {1}]
  %5 = xla_tuple %s3, %s4
  %s6 = sld [smem:[#allocation0]]
  $region53: #{encoder_forward.4} parent=0
    _
  %s8 = ssub.s32 1, %s6
  %s9 = scalar_select 0, %s8, %s6
  loop: start=0, step=1, limit=4
  $region2: #{encoder_forward.4} parent=0 // loop_pre_header
    _
  $region3: #{encoder_forward.4} parent=0 // loop_header
    %s11 = sphi 0, %s15
    %p12 = scmp.ge.s32.totalorder %s11, 4
    %s21 = sphi 0, %s23
    %s24 = sphi 0, %s21
    %s25 = sphi 0, %s24
    %s41 = sphi 0, %s25
    %s47 = sphi 0, %s49
    %s50 = sphi 0, %s47
    %s51 = sphi 0, %s50
    %s67 = sphi 0, %s51
    %s73 = sphi 0, %s75
    %s76 = sphi 0, %s73
    %s77 = sphi 0, %s76
    %s93 = sphi 0, %s77
    %s99 = sphi 0, %s101
    %s102 = sphi 0, %s99
    %s103 = sphi 0, %s102
    %s119 = sphi 0, %s103
    %s125 = sphi 0, %s127
    %s128 = sphi 0, %s125
    %s129 = sphi 0, %s128
    %s145 = sphi 0, %s129
  $region4: #{encoder_forward.4} parent=0 // loop_header_branch
    %14 = sbr.rel (%p12) target = $region8
  $region5: #{encoder_forward.4} parent=0 // loop_body
    %s16 = ssub.s32 %s11, 1
    %s17 = ssub.s32 %s11, 2
    %s18 = sadd.s32 %s11, 1
    %s19 = ssub.s32 %s11, %s18
    %p20 = scmp.eq.s32.totalorder %s19, 0
    %s22 = sadd.s32 %s21, 1
    %s23 = scalar_select %p20, %s21, %s22
    %p26 = pneg %p20
    %p27 = scmp.eq.s32.totalorder %s11, 1
    %p28 = por %p26, %p27
    %p29 = scmp.ne.s32.totalorder %s21, %s24
    %p30 = scmp.eq.s32.totalorder %s11, 0
    %p31 = por %p29, %p30
    %p32 = scmp.ne.s32.totalorder %s21, %s24
    %p33 = scmp.eq.s32.totalorder %s16, 1
    %p34 = por %p32, %p33
    %p35 = scmp.ne.s32.totalorder %s24, %s25
    %p36 = scmp.eq.s32.totalorder %s16, 0
    %p37 = por %p35, %p36
    %p38 = scmp.ne.s32.totalorder %s24, %s25
    %p39 = scmp.eq.s32.totalorder %s17, 1
    %p40 = por %p38, %p39
    %p42 = scmp.ne.s32.totalorder %s25, %s41
    %p43 = scmp.eq.s32.totalorder %s17, 0
    %p44 = por %p42, %p43
    %s45 = ssub.s32 %s11, %s18
    %p46 = scmp.eq.s32.totalorder %s45, 0
    %s48 = sadd.s32 %s47, 1
    %s49 = scalar_select %p46, %s47, %s48
    %p52 = pneg %p46
    %p53 = scmp.eq.s32.totalorder %s11, 1
    %p54 = por %p52, %p53
    %p55 = scmp.ne.s32.totalorder %s47, %s50
    %p56 = scmp.eq.s32.totalorder %s11, 0
    %p57 = por %p55, %p56
    %p58 = scmp.ne.s32.totalorder %s47, %s50
    %p59 = scmp.eq.s32.totalorder %s16, 1
    %p60 = por %p58, %p59
    %p61 = scmp.ne.s32.totalorder %s50, %s51
    %p62 = scmp.eq.s32.totalorder %s16, 0
    %p63 = por %p61, %p62
    %p64 = scmp.ne.s32.totalorder %s50, %s51
    %p65 = scmp.eq.s32.totalorder %s17, 1
    %p66 = por %p64, %p65
    %p68 = scmp.ne.s32.totalorder %s51, %s67
    %p69 = scmp.eq.s32.totalorder %s17, 0
    %p70 = por %p68, %p69
    %s71 = ssub.s32 %s11, %s18
    %p72 = scmp.eq.s32.totalorder %s71, 0
    %s74 = sadd.s32 %s73, 1
    %s75 = scalar_select %p72, %s73, %s74
    %p78 = pneg %p72
    %p79 = scmp.eq.s32.totalorder %s11, 1
    %p80 = por %p78, %p79
    %p81 = scmp.ne.s32.totalorder %s73, %s76
    %p82 = scmp.eq.s32.totalorder %s11, 0
    %p83 = por %p81, %p82
    %p84 = scmp.ne.s32.totalorder %s73, %s76
    %p85 = scmp.eq.s32.totalorder %s16, 1
    %p86 = por %p84, %p85
    %p87 = scmp.ne.s32.totalorder %s76, %s77
    %p88 = scmp.eq.s32.totalorder %s16, 0
    %p89 = por %p87, %p88
    %p90 = scmp.ne.s32.totalorder %s76, %s77
    %p91 = scmp.eq.s32.totalorder %s17, 1
    %p92 = por %p90, %p91
    %p94 = scmp.ne.s32.totalorder %s77, %s93
    %p95 = scmp.eq.s32.totalorder %s17, 0
    %p96 = por %p94, %p95
    %s97 = ssub.s32 %s11, %s18
    %p98 = scmp.eq.s32.totalorder %s97, 0
    %s100 = sadd.s32 %s99, 1
    %s101 = scalar_select %p98, %s99, %s100
    %p104 = pneg %p98
    %p105 = scmp.eq.s32.totalorder %s11, 1
    %p106 = por %p104, %p105
    %p107 = scmp.ne.s32.totalorder %s99, %s102
    %p108 = scmp.eq.s32.totalorder %s11, 0
    %p109 = por %p107, %p108
    %p110 = scmp.ne.s32.totalorder %s99, %s102
    %p111 = scmp.eq.s32.totalorder %s16, 1
    %p112 = por %p110, %p111
    %p113 = scmp.ne.s32.totalorder %s102, %s103
    %p114 = scmp.eq.s32.totalorder %s16, 0
    %p115 = por %p113, %p114
    %p116 = scmp.ne.s32.totalorder %s102, %s103
    %p117 = scmp.eq.s32.totalorder %s17, 1
    %p118 = por %p116, %p117
    %p120 = scmp.ne.s32.totalorder %s103, %s119
    %p121 = scmp.eq.s32.totalorder %s17, 0
    %p122 = por %p120, %p121
    %s123 = ssub.s32 %s11, %s18
    %p124 = scmp.eq.s32.totalorder %s123, 0
    %s126 = sadd.s32 %s125, 1
    %s127 = scalar_select %p124, %s125, %s126
    %p130 = pneg %p124
    %p131 = scmp.eq.s32.totalorder %s11, 1
    %p132 = por %p130, %p131
    %p133 = scmp.ne.s32.totalorder %s125, %s128
    %p134 = scmp.eq.s32.totalorder %s11, 0
    %p135 = por %p133, %p134
    %p136 = scmp.ne.s32.totalorder %s125, %s128
    %p137 = scmp.eq.s32.totalorder %s16, 1
    %p138 = por %p136, %p137
    %p139 = scmp.ne.s32.totalorder %s128, %s129
    %p140 = scmp.eq.s32.totalorder %s16, 0
    %p141 = por %p139, %p140
    %p142 = scmp.ne.s32.totalorder %s128, %s129
    %p143 = scmp.eq.s32.totalorder %s17, 1
    %p144 = por %p142, %p143
    %p146 = scmp.ne.s32.totalorder %s129, %s145
    %p147 = scmp.eq.s32.totalorder %s17, 0
    %p148 = por %p146, %p147
    %p149 = scmp.le.s32.totalorder 1, %s11
    %p150 = scmp.lt.s32.totalorder %s11, 3
    %p151 = pnand %p149, %p150
    %p152 = pneg %p151
    // Predicated region
    $region9: #{encoder_forward.4} parent=5 // pred_check
      _
    $region10: #{encoder_forward.4} parent=5 // pred_check_branch
      %154 = sbr.rel (%p151) target = $region12
    $region11: #{encoder_forward.4} parent=5 // pred_region
      %s155 = ssub.s32 %s11, 1
    $region12: #{encoder_forward.4} parent=5 // pred_fallthru
      _
    %p156 = scmp.lt.s32.totalorder %s11, 2
    // Predicated region
    $region13: #{encoder_forward.4} parent=5 // pred_check
      %p157 = pneg %p156
    $region14: #{encoder_forward.4} parent=5 // pred_check_branch
      %159 = sbr.rel (%p157) target = $region16
    $region15: #{encoder_forward.4} parent=5 // pred_region
      // Predicated region
      $region17: #{encoder_forward.4} parent=15 // pred_check
        %p160 = pneg %p31
      $region18: #{encoder_forward.4} parent=15 // pred_check_branch
        %162 = sbr.rel (%p160) target = $region20
      $region19: #{encoder_forward.4} parent=15 // pred_region
        %p163 = scmp.lt.s32.totalorder %s11, 1
        %s164 = scalar_select %p163, %s11, 1
        %s165 = smul.addr %s164, 8
        %s166 = smul.addr %s165, 8
        %s167 = scalar_lea.vmem %s0, %s166
      $region20: #{encoder_forward.4} parent=15 // pred_fallthru
        _
      // Predicated region
      $region21: #{encoder_forward.4} parent=15 // pred_check
        %p168 = pneg %p57
      $region22: #{encoder_forward.4} parent=15 // pred_check_branch
        %170 = sbr.rel (%p168) target = $region24
      $region23: #{encoder_forward.4} parent=15 // pred_region
        %p171 = scmp.lt.s32.totalorder %s11, 1
        %s172 = scalar_select %p171, %s11, 1
        %s173 = smul.addr %s172, 8
        %s174 = smul.addr %s173, 8
        %s175 = scalar_lea.vmem %s1, %s174
      $region24: #{encoder_forward.4} parent=15 // pred_fallthru
        _
      // Predicated region
      $region25: #{encoder_forward.4} parent=15 // pred_check
        %p176 = pneg %p83
      $region26: #{encoder_forward.4} parent=15 // pred_check_branch
        %178 = sbr.rel (%p176) target = $region28
      $region27: #{encoder_forward.4} parent=15 // pred_region
        %p179 = scmp.lt.s32.totalorder %s11, 1
        %s180 = scalar_select %p179, %s11, 1
        %s181 = smul.addr %s180, 8
        %s182 = smul.addr %s181, 8
        %s183 = scalar_lea.vmem %s2, %s182
      $region28: #{encoder_forward.4} parent=15 // pred_fallthru
        _
    $region16: #{encoder_forward.4} parent=5 // pred_fallthru
      _
    %p184 = scmp.le.s32.totalorder 1, %s11
    %p185 = scmp.lt.s32.totalorder %s11, 3
    %p186 = pnand %p184, %p185
    %p187 = pneg %p186
    // Predicated region
    $region29: #{encoder_forward.4} parent=5 // pred_check
      _
    $region30: #{encoder_forward.4} parent=5 // pred_check_branch
      %189 = sbr.rel (%p186) target = $region32
    $region31: #{encoder_forward.4} parent=5 // pred_region
      %s190 = ssub.s32 %s11, 1
      %p191 = scmp.lt.s32.totalorder %s16, 1
      %s192 = scalar_select %p191, %s16, 1
      %s193 = smul.addr %s192, 8
      %s194 = smul.addr %s193, 8
      %s195 = scalar_lea.vmem %s0, %s194
      %p196 = pneg %p37
      %p197 = pneg %p34
      %p198 = scmp.lt.s32.totalorder %s16, 1
      %s199 = scalar_select %p198, %s16, 1
      %s200 = smul.addr %s199, 8
      %s201 = smul.addr %s200, 8
      %s202 = scalar_lea.vmem %s1, %s201
      %p203 = pneg %p63
      %p204 = pneg %p60
      %p205 = scmp.lt.s32.totalorder %s16, 1
      %s206 = scalar_select %p205, %s16, 1
      %s207 = smul.addr %s206, 8
      %s208 = smul.addr %s207, 8
      %s209 = scalar_lea.vmem %s2, %s208
      %p210 = pneg %p89
      %p211 = pneg %p86
      %p212 = pneg %p115
      %p213 = pneg %p112
      %p214 = scmp.lt.s32.totalorder %s16, 1
      %s215 = scalar_select %p214, %s16, 1
      %s216 = smul.addr %s215, 8
      %s217 = smul.addr %s216, 8
      %s218 = scalar_lea.vmem %s3, %s217
      %p219 = pneg %p141
      %p220 = pneg %p138
      %p221 = scmp.lt.s32.totalorder %s16, 1
      %s222 = scalar_select %p221, %s16, 1
      %s223 = smul.addr %s222, 8
      %s224 = smul.addr %s223, 8
      %s225 = scalar_lea.vmem %s4, %s224
      %p226 = scmp.lt.s32.totalorder %s16, 1
      %s227 = scalar_select %p226, %s16, 1
      %s228 = smul.addr %s227, 8
      %s229 = smul.addr %s228, 8
      %s230 = scalar_lea.vmem %s0, %s229
      %p231 = scmp.lt.s32.totalorder %s16, 1
      %s232 = scalar_select %p231, %s16, 1
      %s233 = smul.addr %s232, 8
      %s234 = smul.addr %s233, 8
      %s235 = scalar_lea.vmem %s1, %s234
      %p236 = scmp.lt.s32.totalorder %s16, 1
      %s237 = scalar_select %p236, %s16, 1
      %s238 = smul.addr %s237, 8
      %s239 = smul.addr %s238, 8
      %s240 = scalar_lea.vmem %s2, %s239
      %p241 = scmp.lt.s32.totalorder %s16, 1
      %s242 = scalar_select %p241, %s16, 1
      %s243 = smul.addr %s242, 8
      %s244 = smul.addr %s243, 8
      %s245 = scalar_lea.vmem %s3, %s244
      %p246 = scmp.lt.s32.totalorder %s16, 1
      %s247 = scalar_select %p246, %s16, 1
      %s248 = smul.addr %s247, 8
      %s249 = smul.addr %s248, 8
      %s250 = scalar_lea.vmem %s4, %s249
      %v251 = vld [vmem:[%s230] sm:$0xff]
      %v252 = vld [vmem:[%s230 + $0x8] sm:$0xff]
      %v253 = vld [vmem:[%s230 + $0x10] sm:$0xff]
      %v254 = vld [vmem:[%s230 + $0x18] sm:$0xff]
      %v255 = vld [vmem:[%s230 + $0x20] sm:$0xff]
      %v256 = vld [vmem:[%s230 + $0x28] sm:$0xff]
      %v257 = vld [vmem:[%s230 + $0x30] sm:$0xff]
      %v258 = vld [vmem:[%s230 + $0x38] sm:$0xff]
      %v259 = vld [vmem:[%s235] sm:$0xff]
      %v260 = vld [vmem:[%s235 + $0x8] sm:$0xff]
      %v261 = vld [vmem:[%s235 + $0x10] sm:$0xff]
      %v262 = vld [vmem:[%s235 + $0x18] sm:$0xff]
      %v263 = vld [vmem:[%s235 + $0x20] sm:$0xff]
      %v264 = vld [vmem:[%s235 + $0x28] sm:$0xff]
      %v265 = vld [vmem:[%s235 + $0x30] sm:$0xff]
      %v266 = vld [vmem:[%s235 + $0x38] sm:$0xff]
      %v267 = vld [vmem:[%s240] sm:$0xff]
      %v268 = vld [vmem:[%s240 + $0x8] sm:$0xff]
      %v269 = vld [vmem:[%s240 + $0x10] sm:$0xff]
      %v270 = vld [vmem:[%s240 + $0x18] sm:$0xff]
      %v271 = vld [vmem:[%s240 + $0x20] sm:$0xff]
      %v272 = vld [vmem:[%s240 + $0x28] sm:$0xff]
      %v273 = vld [vmem:[%s240 + $0x30] sm:$0xff]
      %v274 = vld [vmem:[%s240 + $0x38] sm:$0xff]
      %vm275 = vcmask 64512
      %v277 = vsel %vm275, %v251, 0
      %v280 = vsel %vm275, %v259, 0
      %282 = vmatprep.subr.mxu0 0.0
      %283 = vmatpush1.xpose.msra.mxu0 0.0
      %284 = vmatprep.subr.mxu0 0.0
      %285 = vmatpush1.xpose.msra.mxu0 0.0
      %286 = vmatprep.subr.mxu0 0.0
      %287 = vmatpush1.xpose.msra.mxu0 0.0
      %288 = vmatprep.subr.mxu0 0.0
      %289 = vmatpush1.xpose.msra.mxu0 0.0
      %290 = vmatprep.subr.mxu0 0.0
      %291 = vmatpush1.xpose.msra.mxu0 0.0
      %292 = vmatprep.subr.mxu0 0.0
      %293 = vmatpush1.xpose.msra.mxu0 0.0
      %294 = vmatprep.subr.mxu0 0.0
      %295 = vmatpush1.xpose.msra.mxu0 0.0
      %296 = vmatprep.subr.mxu0 0.0
      %297 = vmatpush1.xpose.msra.mxu0 0.0
      %298 = vmatprep.subr.mxu0 0.0
      %299 = vmatpush1.xpose.msra.mxu0 0.0
      %300 = vmatprep.subr.mxu0 0.0
      %301 = vmatpush1.xpose.msra.mxu0 0.0
      %302 = vmatprep.subr.mxu0 0.0
      %303 = vmatpush1.xpose.msra.mxu0 0.0
      %304 = vmatprep.subr.mxu0 0.0
      %305 = vmatpush1.xpose.msra.mxu0 0.0
      %306 = vmatprep.subr.mxu0 0.0
      %307 = vmatpush1.xpose.msra.mxu0 0.0
      %308 = vmatprep.subr.mxu0 0.0
      %309 = vmatpush1.xpose.msra.mxu0 0.0
      %310 = vmatprep.subr.mxu0 0.0
      %311 = vmatpush1.xpose.msra.mxu0 0.0
      %312 = vmatprep.subr.mxu0 0.0
      %313 = vmatpush1.xpose.msra.mxu0 %v280
      %314 = vmatprep.subr.mxu0 0.0
      %315 = vmatpush2.xpose.msra.mxu0 0.0
      %316 = vmatprep.subr.mxu0 0.0
      %317 = vmatpush2.xpose.msra.mxu0 0.0
      %318 = vmatprep.subr.mxu0 0.0
      %319 = vmatpush2.xpose.msra.mxu0 0.0
      %320 = vmatprep.subr.mxu0 0.0
      %321 = vmatpush2.xpose.msra.mxu0 0.0
      %322 = vmatprep.subr.mxu0 0.0
      %323 = vmatpush2.xpose.msra.mxu0 0.0
      %324 = vmatprep.subr.mxu0 0.0
      %325 = vmatpush2.xpose.msra.mxu0 0.0
      %326 = vmatprep.subr.mxu0 0.0
      %327 = vmatpush2.xpose.msra.mxu0 0.0
      %328 = vmatprep.subr.mxu0 0.0
      %329 = vmatpush2.xpose.msra.mxu0 0.0
      %330 = vmatprep.subr.mxu0 0.0
      %331 = vmatpush2.xpose.msra.mxu0 0.0
      %332 = vmatprep.subr.mxu0 0.0
      %333 = vmatpush2.xpose.msra.mxu0 0.0
      %334 = vmatprep.subr.mxu0 0.0
      %335 = vmatpush2.xpose.msra.mxu0 0.0
      %336 = vmatprep.subr.mxu0 0.0
      %337 = vmatpush2.xpose.msra.mxu0 0.0
      %338 = vmatprep.subr.mxu0 0.0
      %339 = vmatpush2.xpose.msra.mxu0 0.0
      %340 = vmatprep.subr.mxu0 0.0
      %341 = vmatpush2.xpose.msra.mxu0 0.0
      %342 = vmatprep.subr.mxu0 0.0
      %343 = vmatpush2.xpose.msra.mxu0 0.0
      %344 = vmatprep.subr.mxu0 0.0
      %345 = vmatpush2.xpose.msra.mxu0 0.0
      %346 = vmatprep.mubr.f32.mxu0 0.0
      %347 = vmatmul.mubr.f32.gmra.mxu0 %v277
      %v348 = vpop.f32.mrf.mxu0
      %v349 = vadd.f32 0.0, %v348
      %v350 = vpop.f32.mrf.mxu0
      %351 = vdwg.mxu0
      %v353 = vsel %vm275, %v252, 0
      %v356 = vsel %vm275, %v260, 0
      %358 = vmatprep.subr.mxu0 0.0
      %359 = vmatpush1.xpose.msra.mxu0 0.0
      %360 = vmatprep.subr.mxu0 0.0
      %361 = vmatpush1.xpose.msra.mxu0 0.0
      %362 = vmatprep.subr.mxu0 0.0
      %363 = vmatpush1.xpose.msra.mxu0 0.0
      %364 = vmatprep.subr.mxu0 0.0
      %365 = vmatpush1.xpose.msra.mxu0 0.0
      %366 = vmatprep.subr.mxu0 0.0
      %367 = vmatpush1.xpose.msra.mxu0 0.0
      %368 = vmatprep.subr.mxu0 0.0
      %369 = vmatpush1.xpose.msra.mxu0 0.0
      %370 = vmatprep.subr.mxu0 0.0
      %371 = vmatpush1.xpose.msra.mxu0 0.0
      %372 = vmatprep.subr.mxu0 0.0
      %373 = vmatpush1.xpose.msra.mxu0 0.0
      %374 = vmatprep.subr.mxu0 0.0
      %375 = vmatpush1.xpose.msra.mxu0 0.0
      %376 = vmatprep.subr.mxu0 0.0
      %377 = vmatpush1.xpose.msra.mxu0 0.0
      %378 = vmatprep.subr.mxu0 0.0
      %379 = vmatpush1.xpose.msra.mxu0 0.0
      %380 = vmatprep.subr.mxu0 0.0
      %381 = vmatpush1.xpose.msra.mxu0 0.0
      %382 = vmatprep.subr.mxu0 0.0
      %383 = vmatpush1.xpose.msra.mxu0 0.0
      %384 = vmatprep.subr.mxu0 0.0
      %385 = vmatpush1.xpose.msra.mxu0 0.0
      %386 = vmatprep.subr.mxu0 0.0
      %387 = vmatpush1.xpose.msra.mxu0 0.0
      %388 = vmatprep.subr.mxu0 0.0
      %389 = vmatpush1.xpose.msra.mxu0 %v356
      %390 = vmatprep.subr.mxu0 0.0
      %391 = vmatpush2.xpose.msra.mxu0 0.0
      %392 = vmatprep.subr.mxu0 0.0
      %393 = vmatpush2.xpose.msra.mxu0 0.0
      %394 = vmatprep.subr.mxu0 0.0
      %395 = vmatpush2.xpose.msra.mxu0 0.0
      %396 = vmatprep.subr.mxu0 0.0
      %397 = vmatpush2.xpose.msra.mxu0 0.0
      %398 = vmatprep.subr.mxu0 0.0
      %399 = vmatpush2.xpose.msra.mxu0 0.0
      %400 = vmatprep.subr.mxu0 0.0
      %401 = vmatpush2.xpose.msra.mxu0 0.0
      %402 = vmatprep.subr.mxu0 0.0
      %403 = vmatpush2.xpose.msra.mxu0 0.0
      %404 = vmatprep.subr.mxu0 0.0
      %405 = vmatpush2.xpose.msra.mxu0 0.0
      %406 = vmatprep.subr.mxu0 0.0
      %407 = vmatpush2.xpose.msra.mxu0 0.0
      %408 = vmatprep.subr.mxu0 0.0
      %409 = vmatpush2.xpose.msra.mxu0 0.0
      %410 = vmatprep.subr.mxu0 0.0
      %411 = vmatpush2.xpose.msra.mxu0 0.0
      %412 = vmatprep.subr.mxu0 0.0
      %413 = vmatpush2.xpose.msra.mxu0 0.0
      %414 = vmatprep.subr.mxu0 0.0
      %415 = vmatpush2.xpose.msra.mxu0 0.0
      %416 = vmatprep.subr.mxu0 0.0
      %417 = vmatpush2.xpose.msra.mxu0 0.0
      %418 = vmatprep.subr.mxu0 0.0
      %419 = vmatpush2.xpose.msra.mxu0 0.0
      %420 = vmatprep.subr.mxu0 0.0
      %421 = vmatpush2.xpose.msra.mxu0 0.0
      %422 = vmatprep.mubr.f32.mxu0 0.0
      %423 = vmatmul.mubr.f32.gmra.mxu0 %v353
      %v424 = vpop.f32.mrf.mxu0
      %v425 = vadd.f32 0.0, %v424
      %v426 = vpop.f32.mrf.mxu0
      %427 = vdwg.mxu0
      %v429 = vsel %vm275, %v253, 0
      %v432 = vsel %vm275, %v261, 0
      %434 = vmatprep.subr.mxu0 0.0
      %435 = vmatpush1.xpose.msra.mxu0 0.0
      %436 = vmatprep.subr.mxu0 0.0
      %437 = vmatpush1.xpose.msra.mxu0 0.0
      %438 = vmatprep.subr.mxu0 0.0
      %439 = vmatpush1.xpose.msra.mxu0 0.0
      %440 = vmatprep.subr.mxu0 0.0
      %441 = vmatpush1.xpose.msra.mxu0 0.0
      %442 = vmatprep.subr.mxu0 0.0
      %443 = vmatpush1.xpose.msra.mxu0 0.0
      %444 = vmatprep.subr.mxu0 0.0
      %445 = vmatpush1.xpose.msra.mxu0 0.0
      %446 = vmatprep.subr.mxu0 0.0
      %447 = vmatpush1.xpose.msra.mxu0 0.0
      %448 = vmatprep.subr.mxu0 0.0
      %449 = vmatpush1.xpose.msra.mxu0 0.0
      %450 = vmatprep.subr.mxu0 0.0
      %451 = vmatpush1.xpose.msra.mxu0 0.0
      %452 = vmatprep.subr.mxu0 0.0
      %453 = vmatpush1.xpose.msra.mxu0 0.0
      %454 = vmatprep.subr.mxu0 0.0
      %455 = vmatpush1.xpose.msra.mxu0 0.0
      %456 = vmatprep.subr.mxu0 0.0
      %457 = vmatpush1.xpose.msra.mxu0 0.0
      %458 = vmatprep.subr.mxu0 0.0
      %459 = vmatpush1.xpose.msra.mxu0 0.0
      %460 = vmatprep.subr.mxu0 0.0
      %461 = vmatpush1.xpose.msra.mxu0 0.0
      %462 = vmatprep.subr.mxu0 0.0
      %463 = vmatpush1.xpose.msra.mxu0 0.0
      %464 = vmatprep.subr.mxu0 0.0
      %465 = vmatpush1.xpose.msra.mxu0 %v432
      %466 = vmatprep.subr.mxu0 0.0
      %467 = vmatpush2.xpose.msra.mxu0 0.0
      %468 = vmatprep.subr.mxu0 0.0
      %469 = vmatpush2.xpose.msra.mxu0 0.0
      %470 = vmatprep.subr.mxu0 0.0
      %471 = vmatpush2.xpose.msra.mxu0 0.0
      %472 = vmatprep.subr.mxu0 0.0
      %473 = vmatpush2.xpose.msra.mxu0 0.0
      %474 = vmatprep.subr.mxu0 0.0
      %475 = vmatpush2.xpose.msra.mxu0 0.0
      %476 = vmatprep.subr.mxu0 0.0
      %477 = vmatpush2.xpose.msra.mxu0 0.0
      %478 = vmatprep.subr.mxu0 0.0
      %479 = vmatpush2.xpose.msra.mxu0 0.0
      %480 = vmatprep.subr.mxu0 0.0
      %481 = vmatpush2.xpose.msra.mxu0 0.0
      %482 = vmatprep.subr.mxu0 0.0
      %483 = vmatpush2.xpose.msra.mxu0 0.0
      %484 = vmatprep.subr.mxu0 0.0
      %485 = vmatpush2.xpose.msra.mxu0 0.0
      %486 = vmatprep.subr.mxu0 0.0
      %487 = vmatpush2.xpose.msra.mxu0 0.0
      %488 = vmatprep.subr.mxu0 0.0
      %489 = vmatpush2.xpose.msra.mxu0 0.0
      %490 = vmatprep.subr.mxu0 0.0
      %491 = vmatpush2.xpose.msra.mxu0 0.0
      %492 = vmatprep.subr.mxu0 0.0
      %493 = vmatpush2.xpose.msra.mxu0 0.0
      %494 = vmatprep.subr.mxu0 0.0
      %495 = vmatpush2.xpose.msra.mxu0 0.0
      %496 = vmatprep.subr.mxu0 0.0
      %497 = vmatpush2.xpose.msra.mxu0 0.0
      %498 = vmatprep.mubr.f32.mxu0 0.0
      %499 = vmatmul.mubr.f32.gmra.mxu0 %v429
      %v500 = vpop.f32.mrf.mxu0
      %v501 = vadd.f32 0.0, %v500
      %v502 = vpop.f32.mrf.mxu0
      %503 = vdwg.mxu0
      %v505 = vsel %vm275, %v254, 0
      %v508 = vsel %vm275, %v262, 0
      %510 = vmatprep.subr.mxu0 0.0
      %511 = vmatpush1.xpose.msra.mxu0 0.0
      %512 = vmatprep.subr.mxu0 0.0
      %513 = vmatpush1.xpose.msra.mxu0 0.0
      %514 = vmatprep.subr.mxu0 0.0
      %515 = vmatpush1.xpose.msra.mxu0 0.0
      %516 = vmatprep.subr.mxu0 0.0
      %517 = vmatpush1.xpose.msra.mxu0 0.0
      %518 = vmatprep.subr.mxu0 0.0
      %519 = vmatpush1.xpose.msra.mxu0 0.0
      %520 = vmatprep.subr.mxu0 0.0
      %521 = vmatpush1.xpose.msra.mxu0 0.0
      %522 = vmatprep.subr.mxu0 0.0
      %523 = vmatpush1.xpose.msra.mxu0 0.0
      %524 = vmatprep.subr.mxu0 0.0
      %525 = vmatpush1.xpose.msra.mxu0 0.0
      %526 = vmatprep.subr.mxu0 0.0
      %527 = vmatpush1.xpose.msra.mxu0 0.0
      %528 = vmatprep.subr.mxu0 0.0
      %529 = vmatpush1.xpose.msra.mxu0 0.0
      %530 = vmatprep.subr.mxu0 0.0
      %531 = vmatpush1.xpose.msra.mxu0 0.0
      %532 = vmatprep.subr.mxu0 0.0
      %533 = vmatpush1.xpose.msra.mxu0 0.0
      %534 = vmatprep.subr.mxu0 0.0
      %535 = vmatpush1.xpose.msra.mxu0 0.0
      %536 = vmatprep.subr.mxu0 0.0
      %537 = vmatpush1.xpose.msra.mxu0 0.0
      %538 = vmatprep.subr.mxu0 0.0
      %539 = vmatpush1.xpose.msra.mxu0 0.0
      %540 = vmatprep.subr.mxu0 0.0
      %541 = vmatpush1.xpose.msra.mxu0 %v508
      %542 = vmatprep.subr.mxu0 0.0
      %543 = vmatpush2.xpose.msra.mxu0 0.0
      %544 = vmatprep.subr.mxu0 0.0
      %545 = vmatpush2.xpose.msra.mxu0 0.0
      %546 = vmatprep.subr.mxu0 0.0
      %547 = vmatpush2.xpose.msra.mxu0 0.0
      %548 = vmatprep.subr.mxu0 0.0
      %549 = vmatpush2.xpose.msra.mxu0 0.0
      %550 = vmatprep.subr.mxu0 0.0
      %551 = vmatpush2.xpose.msra.mxu0 0.0
      %552 = vmatprep.subr.mxu0 0.0
      %553 = vmatpush2.xpose.msra.mxu0 0.0
      %554 = vmatprep.subr.mxu0 0.0
      %555 = vmatpush2.xpose.msra.mxu0 0.0
      %556 = vmatprep.subr.mxu0 0.0
      %557 = vmatpush2.xpose.msra.mxu0 0.0
      %558 = vmatprep.subr.mxu0 0.0
      %559 = vmatpush2.xpose.msra.mxu0 0.0
      %560 = vmatprep.subr.mxu0 0.0
      %561 = vmatpush2.xpose.msra.mxu0 0.0
      %562 = vmatprep.subr.mxu0 0.0
      %563 = vmatpush2.xpose.msra.mxu0 0.0
      %564 = vmatprep.subr.mxu0 0.0
      %565 = vmatpush2.xpose.msra.mxu0 0.0
      %566 = vmatprep.subr.mxu0 0.0
      %567 = vmatpush2.xpose.msra.mxu0 0.0
      %568 = vmatprep.subr.mxu0 0.0
      %569 = vmatpush2.xpose.msra.mxu0 0.0
      %570 = vmatprep.subr.mxu0 0.0
      %571 = vmatpush2.xpose.msra.mxu0 0.0
      %572 = vmatprep.subr.mxu0 0.0
      %573 = vmatpush2.xpose.msra.mxu0 0.0
      %574 = vmatprep.mubr.f32.mxu0 0.0
      %575 = vmatmul.mubr.f32.gmra.mxu0 %v505
      %v576 = vpop.f32.mrf.mxu0
      %v577 = vadd.f32 0.0, %v576
      %v578 = vpop.f32.mrf.mxu0
      %579 = vdwg.mxu0
      %v581 = vsel %vm275, %v255, 0
      %v584 = vsel %vm275, %v263, 0
      %586 = vmatprep.subr.mxu0 0.0
      %587 = vmatpush1.xpose.msra.mxu0 0.0
      %588 = vmatprep.subr.mxu0 0.0
      %589 = vmatpush1.xpose.msra.mxu0 0.0
      %590 = vmatprep.subr.mxu0 0.0
      %591 = vmatpush1.xpose.msra.mxu0 0.0
      %592 = vmatprep.subr.mxu0 0.0
      %593 = vmatpush1.xpose.msra.mxu0 0.0
      %594 = vmatprep.subr.mxu0 0.0
      %595 = vmatpush1.xpose.msra.mxu0 0.0
      %596 = vmatprep.subr.mxu0 0.0
      %597 = vmatpush1.xpose.msra.mxu0 0.0
      %598 = vmatprep.subr.mxu0 0.0
      %599 = vmatpush1.xpose.msra.mxu0 0.0
      %600 = vmatprep.subr.mxu0 0.0
      %601 = vmatpush1.xpose.msra.mxu0 0.0
      %602 = vmatprep.subr.mxu0 0.0
      %603 = vmatpush1.xpose.msra.mxu0 0.0
      %604 = vmatprep.subr.mxu0 0.0
      %605 = vmatpush1.xpose.msra.mxu0 0.0
      %606 = vmatprep.subr.mxu0 0.0
      %607 = vmatpush1.xpose.msra.mxu0 0.0
      %608 = vmatprep.subr.mxu0 0.0
      %609 = vmatpush1.xpose.msra.mxu0 0.0
      %610 = vmatprep.subr.mxu0 0.0
      %611 = vmatpush1.xpose.msra.mxu0 0.0
      %612 = vmatprep.subr.mxu0 0.0
      %613 = vmatpush1.xpose.msra.mxu0 0.0
      %614 = vmatprep.subr.mxu0 0.0
      %615 = vmatpush1.xpose.msra.mxu0 0.0
      %616 = vmatprep.subr.mxu0 0.0
      %617 = vmatpush1.xpose.msra.mxu0 %v584
      %618 = vmatprep.subr.mxu0 0.0
      %619 = vmatpush2.xpose.msra.mxu0 0.0
      %620 = vmatprep.subr.mxu0 0.0
      %621 = vmatpush2.xpose.msra.mxu0 0.0
      %622 = vmatprep.subr.mxu0 0.0
      %623 = vmatpush2.xpose.msra.mxu0 0.0
      %624 = vmatprep.subr.mxu0 0.0
      %625 = vmatpush2.xpose.msra.mxu0 0.0
      %626 = vmatprep.subr.mxu0 0.0
      %627 = vmatpush2.xpose.msra.mxu0 0.0
      %628 = vmatprep.subr.mxu0 0.0
      %629 = vmatpush2.xpose.msra.mxu0 0.0
      %630 = vmatprep.subr.mxu0 0.0
      %631 = vmatpush2.xpose.msra.mxu0 0.0
      %632 = vmatprep.subr.mxu0 0.0
      %633 = vmatpush2.xpose.msra.mxu0 0.0
      %634 = vmatprep.subr.mxu0 0.0
      %635 = vmatpush2.xpose.msra.mxu0 0.0
      %636 = vmatprep.subr.mxu0 0.0
      %637 = vmatpush2.xpose.msra.mxu0 0.0
      %638 = vmatprep.subr.mxu0 0.0
      %639 = vmatpush2.xpose.msra.mxu0 0.0
      %640 = vmatprep.subr.mxu0 0.0
      %641 = vmatpush2.xpose.msra.mxu0 0.0
      %642 = vmatprep.subr.mxu0 0.0
      %643 = vmatpush2.xpose.msra.mxu0 0.0
      %644 = vmatprep.subr.mxu0 0.0
      %645 = vmatpush2.xpose.msra.mxu0 0.0
      %646 = vmatprep.subr.mxu0 0.0
      %647 = vmatpush2.xpose.msra.mxu0 0.0
      %648 = vmatprep.subr.mxu0 0.0
      %649 = vmatpush2.xpose.msra.mxu0 0.0
      %650 = vmatprep.mubr.f32.mxu0 0.0
      %651 = vmatmul.mubr.f32.gmra.mxu0 %v581
      %v652 = vpop.f32.mrf.mxu0
      %v653 = vadd.f32 0.0, %v652
      %v654 = vpop.f32.mrf.mxu0
      %655 = vdwg.mxu0
      %v657 = vsel %vm275, %v256, 0
      %v660 = vsel %vm275, %v264, 0
      %662 = vmatprep.subr.mxu0 0.0
      %663 = vmatpush1.xpose.msra.mxu0 0.0
      %664 = vmatprep.subr.mxu0 0.0
      %665 = vmatpush1.xpose.msra.mxu0 0.0
      %666 = vmatprep.subr.mxu0 0.0
      %667 = vmatpush1.xpose.msra.mxu0 0.0
      %668 = vmatprep.subr.mxu0 0.0
      %669 = vmatpush1.xpose.msra.mxu0 0.0
      %670 = vmatprep.subr.mxu0 0.0
      %671 = vmatpush1.xpose.msra.mxu0 0.0
      %672 = vmatprep.subr.mxu0 0.0
      %673 = vmatpush1.xpose.msra.mxu0 0.0
      %674 = vmatprep.subr.mxu0 0.0
      %675 = vmatpush1.xpose.msra.mxu0 0.0
      %676 = vmatprep.subr.mxu0 0.0
      %677 = vmatpush1.xpose.msra.mxu0 0.0
      %678 = vmatprep.subr.mxu0 0.0
      %679 = vmatpush1.xpose.msra.mxu0 0.0
      %680 = vmatprep.subr.mxu0 0.0
      %681 = vmatpush1.xpose.msra.mxu0 0.0
      %682 = vmatprep.subr.mxu0 0.0
      %683 = vmatpush1.xpose.msra.mxu0 0.0
      %684 = vmatprep.subr.mxu0 0.0
      %685 = vmatpush1.xpose.msra.mxu0 0.0
      %686 = vmatprep.subr.mxu0 0.0
      %687 = vmatpush1.xpose.msra.mxu0 0.0
      %688 = vmatprep.subr.mxu0 0.0
      %689 = vmatpush1.xpose.msra.mxu0 0.0
      %690 = vmatprep.subr.mxu0 0.0
      %691 = vmatpush1.xpose.msra.mxu0 0.0
      %692 = vmatprep.subr.mxu0 0.0
      %693 = vmatpush1.xpose.msra.mxu0 %v660
      %694 = vmatprep.subr.mxu0 0.0
      %695 = vmatpush2.xpose.msra.mxu0 0.0
      %696 = vmatprep.subr.mxu0 0.0
      %697 = vmatpush2.xpose.msra.mxu0 0.0
      %698 = vmatprep.subr.mxu0 0.0
      %699 = vmatpush2.xpose.msra.mxu0 0.0
      %700 = vmatprep.subr.mxu0 0.0
      %701 = vmatpush2.xpose.msra.mxu0 0.0
      %702 = vmatprep.subr.mxu0 0.0
      %703 = vmatpush2.xpose.msra.mxu0 0.0
      %704 = vmatprep.subr.mxu0 0.0
      %705 = vmatpush2.xpose.msra.mxu0 0.0
      %706 = vmatprep.subr.mxu0 0.0
      %707 = vmatpush2.xpose.msra.mxu0 0.0
      %708 = vmatprep.subr.mxu0 0.0
      %709 = vmatpush2.xpose.msra.mxu0 0.0
      %710 = vmatprep.subr.mxu0 0.0
      %711 = vmatpush2.xpose.msra.mxu0 0.0
      %712 = vmatprep.subr.mxu0 0.0
      %713 = vmatpush2.xpose.msra.mxu0 0.0
      %714 = vmatprep.subr.mxu0 0.0
      %715 = vmatpush2.xpose.msra.mxu0 0.0
      %716 = vmatprep.subr.mxu0 0.0
      %717 = vmatpush2.xpose.msra.mxu0 0.0
      %718 = vmatprep.subr.mxu0 0.0
      %719 = vmatpush2.xpose.msra.mxu0 0.0
      %720 = vmatprep.subr.mxu0 0.0
      %721 = vmatpush2.xpose.msra.mxu0 0.0
      %722 = vmatprep.subr.mxu0 0.0
      %723 = vmatpush2.xpose.msra.mxu0 0.0
      %724 = vmatprep.subr.mxu0 0.0
      %725 = vmatpush2.xpose.msra.mxu0 0.0
      %726 = vmatprep.mubr.f32.mxu0 0.0
      %727 = vmatmul.mubr.f32.gmra.mxu0 %v657
      %v728 = vpop.f32.mrf.mxu0
      %v729 = vadd.f32 0.0, %v728
      %v730 = vpop.f32.mrf.mxu0
      %731 = vdwg.mxu0
      %v733 = vsel %vm275, %v257, 0
      %v736 = vsel %vm275, %v265, 0
      %738 = vmatprep.subr.mxu0 0.0
      %739 = vmatpush1.xpose.msra.mxu0 0.0
      %740 = vmatprep.subr.mxu0 0.0
      %741 = vmatpush1.xpose.msra.mxu0 0.0
      %742 = vmatprep.subr.mxu0 0.0
      %743 = vmatpush1.xpose.msra.mxu0 0.0
      %744 = vmatprep.subr.mxu0 0.0
      %745 = vmatpush1.xpose.msra.mxu0 0.0
      %746 = vmatprep.subr.mxu0 0.0
      %747 = vmatpush1.xpose.msra.mxu0 0.0
      %748 = vmatprep.subr.mxu0 0.0
      %749 = vmatpush1.xpose.msra.mxu0 0.0
      %750 = vmatprep.subr.mxu0 0.0
      %751 = vmatpush1.xpose.msra.mxu0 0.0
      %752 = vmatprep.subr.mxu0 0.0
      %753 = vmatpush1.xpose.msra.mxu0 0.0
      %754 = vmatprep.subr.mxu0 0.0
      %755 = vmatpush1.xpose.msra.mxu0 0.0
      %756 = vmatprep.subr.mxu0 0.0
      %757 = vmatpush1.xpose.msra.mxu0 0.0
      %758 = vmatprep.subr.mxu0 0.0
      %759 = vmatpush1.xpose.msra.mxu0 0.0
      %760 = vmatprep.subr.mxu0 0.0
      %761 = vmatpush1.xpose.msra.mxu0 0.0
      %762 = vmatprep.subr.mxu0 0.0
      %763 = vmatpush1.xpose.msra.mxu0 0.0
      %764 = vmatprep.subr.mxu0 0.0
      %765 = vmatpush1.xpose.msra.mxu0 0.0
      %766 = vmatprep.subr.mxu0 0.0
      %767 = vmatpush1.xpose.msra.mxu0 0.0
      %768 = vmatprep.subr.mxu0 0.0
      %769 = vmatpush1.xpose.msra.mxu0 %v736
      %770 = vmatprep.subr.mxu0 0.0
      %771 = vmatpush2.xpose.msra.mxu0 0.0
      %772 = vmatprep.subr.mxu0 0.0
      %773 = vmatpush2.xpose.msra.mxu0 0.0
      %774 = vmatprep.subr.mxu0 0.0
      %775 = vmatpush2.xpose.msra.mxu0 0.0
      %776 = vmatprep.subr.mxu0 0.0
      %777 = vmatpush2.xpose.msra.mxu0 0.0
      %778 = vmatprep.subr.mxu0 0.0
      %779 = vmatpush2.xpose.msra.mxu0 0.0
      %780 = vmatprep.subr.mxu0 0.0
      %781 = vmatpush2.xpose.msra.mxu0 0.0
      %782 = vmatprep.subr.mxu0 0.0
      %783 = vmatpush2.xpose.msra.mxu0 0.0
      %784 = vmatprep.subr.mxu0 0.0
      %785 = vmatpush2.xpose.msra.mxu0 0.0
      %786 = vmatprep.subr.mxu0 0.0
      %787 = vmatpush2.xpose.msra.mxu0 0.0
      %788 = vmatprep.subr.mxu0 0.0
      %789 = vmatpush2.xpose.msra.mxu0 0.0
      %790 = vmatprep.subr.mxu0 0.0
      %791 = vmatpush2.xpose.msra.mxu0 0.0
      %792 = vmatprep.subr.mxu0 0.0
      %793 = vmatpush2.xpose.msra.mxu0 0.0
      %794 = vmatprep.subr.mxu0 0.0
      %795 = vmatpush2.xpose.msra.mxu0 0.0
      %796 = vmatprep.subr.mxu0 0.0
      %797 = vmatpush2.xpose.msra.mxu0 0.0
      %798 = vmatprep.subr.mxu0 0.0
      %799 = vmatpush2.xpose.msra.mxu0 0.0
      %800 = vmatprep.subr.mxu0 0.0
      %801 = vmatpush2.xpose.msra.mxu0 0.0
      %802 = vmatprep.mubr.f32.mxu0 0.0
      %803 = vmatmul.mubr.f32.gmra.mxu0 %v733
      %v804 = vpop.f32.mrf.mxu0
      %v805 = vadd.f32 0.0, %v804
      %v806 = vpop.f32.mrf.mxu0
      %807 = vdwg.mxu0
      %v809 = vsel %vm275, %v258, 0
      %v812 = vsel %vm275, %v266, 0
      %814 = vmatprep.subr.mxu0 0.0
      %815 = vmatpush1.xpose.msra.mxu0 0.0
      %816 = vmatprep.subr.mxu0 0.0
      %817 = vmatpush1.xpose.msra.mxu0 0.0
      %818 = vmatprep.subr.mxu0 0.0
      %819 = vmatpush1.xpose.msra.mxu0 0.0
      %820 = vmatprep.subr.mxu0 0.0
      %821 = vmatpush1.xpose.msra.mxu0 0.0
      %822 = vmatprep.subr.mxu0 0.0
      %823 = vmatpush1.xpose.msra.mxu0 0.0
      %824 = vmatprep.subr.mxu0 0.0
      %825 = vmatpush1.xpose.msra.mxu0 0.0
      %826 = vmatprep.subr.mxu0 0.0
      %827 = vmatpush1.xpose.msra.mxu0 0.0
      %828 = vmatprep.subr.mxu0 0.0
      %829 = vmatpush1.xpose.msra.mxu0 0.0
      %830 = vmatprep.subr.mxu0 0.0
      %831 = vmatpush1.xpose.msra.mxu0 0.0
      %832 = vmatprep.subr.mxu0 0.0
      %833 = vmatpush1.xpose.msra.mxu0 0.0
      %834 = vmatprep.subr.mxu0 0.0
      %835 = vmatpush1.xpose.msra.mxu0 0.0
      %836 = vmatprep.subr.mxu0 0.0
      %837 = vmatpush1.xpose.msra.mxu0 0.0
      %838 = vmatprep.subr.mxu0 0.0
      %839 = vmatpush1.xpose.msra.mxu0 0.0
      %840 = vmatprep.subr.mxu0 0.0
      %841 = vmatpush1.xpose.msra.mxu0 0.0
      %842 = vmatprep.subr.mxu0 0.0
      %843 = vmatpush1.xpose.msra.mxu0 0.0
      %844 = vmatprep.subr.mxu0 0.0
      %845 = vmatpush1.xpose.msra.mxu0 %v812
      %846 = vmatprep.subr.mxu0 0.0
      %847 = vmatpush2.xpose.msra.mxu0 0.0
      %848 = vmatprep.subr.mxu0 0.0
      %849 = vmatpush2.xpose.msra.mxu0 0.0
      %850 = vmatprep.subr.mxu0 0.0
      %851 = vmatpush2.xpose.msra.mxu0 0.0
      %852 = vmatprep.subr.mxu0 0.0
      %853 = vmatpush2.xpose.msra.mxu0 0.0
      %854 = vmatprep.subr.mxu0 0.0
      %855 = vmatpush2.xpose.msra.mxu0 0.0
      %856 = vmatprep.subr.mxu0 0.0
      %857 = vmatpush2.xpose.msra.mxu0 0.0
      %858 = vmatprep.subr.mxu0 0.0
      %859 = vmatpush2.xpose.msra.mxu0 0.0
      %860 = vmatprep.subr.mxu0 0.0
      %861 = vmatpush2.xpose.msra.mxu0 0.0
      %862 = vmatprep.subr.mxu0 0.0
      %863 = vmatpush2.xpose.msra.mxu0 0.0
      %864 = vmatprep.subr.mxu0 0.0
      %865 = vmatpush2.xpose.msra.mxu0 0.0
      %866 = vmatprep.subr.mxu0 0.0
      %867 = vmatpush2.xpose.msra.mxu0 0.0
      %868 = vmatprep.subr.mxu0 0.0
      %869 = vmatpush2.xpose.msra.mxu0 0.0
      %870 = vmatprep.subr.mxu0 0.0
      %871 = vmatpush2.xpose.msra.mxu0 0.0
      %872 = vmatprep.subr.mxu0 0.0
      %873 = vmatpush2.xpose.msra.mxu0 0.0
      %874 = vmatprep.subr.mxu0 0.0
      %875 = vmatpush2.xpose.msra.mxu0 0.0
      %876 = vmatprep.subr.mxu0 0.0
      %877 = vmatpush2.xpose.msra.mxu0 0.0
      %878 = vmatprep.mubr.f32.mxu0 0.0
      %879 = vmatmul.mubr.f32.gmra.mxu0 %v809
      %v880 = vpop.f32.mrf.mxu0
      %v881 = vadd.f32 0.0, %v880
      %v882 = vpop.f32.mrf.mxu0
      %883 = vdwg.mxu0
      %v884 = vmul.f32 %v349, 0.70710677
      %v885 = vmul.f32 %v425, 0.70710677
      %v886 = vmul.f32 %v501, 0.70710677
      %v887 = vmul.f32 %v577, 0.70710677
      %v888 = vmul.f32 %v653, 0.70710677
      %v889 = vmul.f32 %v729, 0.70710677
      %v890 = vmul.f32 %v805, 0.70710677
      %v891 = vmul.f32 %v881, 0.70710677
      %v892 = vsel %vm275, %v884, -inf
      %893 = vmax.xlane.f32.xlu0 %v892
      %v894 = vpop.xlane.xlu0 %893
      %v895 = vsel %vm275, %v885, -inf
      %896 = vmax.xlane.f32.xlu0 %v895
      %v897 = vpop.xlane.xlu0 %896
      %v898 = vsel %vm275, %v886, -inf
      %899 = vmax.xlane.f32.xlu0 %v898
      %v900 = vpop.xlane.xlu0 %899
      %v901 = vsel %vm275, %v887, -inf
      %902 = vmax.xlane.f32.xlu0 %v901
      %v903 = vpop.xlane.xlu0 %902
      %v904 = vsel %vm275, %v888, -inf
      %905 = vmax.xlane.f32.xlu0 %v904
      %v906 = vpop.xlane.xlu0 %905
      %v907 = vsel %vm275, %v889, -inf
      %908 = vmax.xlane.f32.xlu0 %v907
      %v909 = vpop.xlane.xlu0 %908
      %v910 = vsel %vm275, %v890, -inf
      %911 = vmax.xlane.f32.xlu0 %v910
      %v912 = vpop.xlane.xlu0 %911
      %v913 = vsel %vm275, %v891, -inf
      %914 = vmax.xlane.f32.xlu0 %v913
      %v915 = vpop.xlane.xlu0 %914
      %v916 = vsub.f32 %v884, %v894
      %v917 = vsub.f32 %v885, %v897
      %v918 = vsub.f32 %v886, %v900
      %v919 = vsub.f32 %v887, %v903
      %v920 = vsub.f32 %v888, %v906
      %v921 = vsub.f32 %v889, %v909
      %v922 = vsub.f32 %v890, %v912
      %v923 = vsub.f32 %v891, %v915
      %v924 = vmul.f32 %v916, 1.442695
      %v925 = vpow.pop %v924
      %v926 = vmul.f32 %v917, 1.442695
      %v927 = vpow.pop %v926
      %v928 = vmul.f32 %v918, 1.442695
      %v929 = vpow.pop %v928
      %v930 = vmul.f32 %v919, 1.442695
      %v931 = vpow.pop %v930
      %v932 = vmul.f32 %v920, 1.442695
      %v933 = vpow.pop %v932
      %v934 = vmul.f32 %v921, 1.442695
      %v935 = vpow.pop %v934
      %v936 = vmul.f32 %v922, 1.442695
      %v937 = vpow.pop %v936
      %v938 = vmul.f32 %v923, 1.442695
      %v939 = vpow.pop %v938
      %v940 = vsel %vm275, %v925, 0.0
      %941 = vadd.xlane.f32.xlu0 %v940
      %v942 = vpop.xlane.xlu0 %941
      %v943 = vsel %vm275, %v927, 0.0
      %944 = vadd.xlane.f32.xlu0 %v943
      %v945 = vpop.xlane.xlu0 %944
      %v946 = vsel %vm275, %v929, 0.0
      %947 = vadd.xlane.f32.xlu0 %v946
      %v948 = vpop.xlane.xlu0 %947
      %v949 = vsel %vm275, %v931, 0.0
      %950 = vadd.xlane.f32.xlu0 %v949
      %v951 = vpop.xlane.xlu0 %950
      %v952 = vsel %vm275, %v933, 0.0
      %953 = vadd.xlane.f32.xlu0 %v952
      %v954 = vpop.xlane.xlu0 %953
      %v955 = vsel %vm275, %v935, 0.0
      %956 = vadd.xlane.f32.xlu0 %v955
      %v957 = vpop.xlane.xlu0 %956
      %v958 = vsel %vm275, %v937, 0.0
      %959 = vadd.xlane.f32.xlu0 %v958
      %v960 = vpop.xlane.xlu0 %959
      %v961 = vsel %vm275, %v939, 0.0
      %962 = vadd.xlane.f32.xlu0 %v961
      %v963 = vpop.xlane.xlu0 %962
      %v964 = vrcp.pop %v942
      %v965 = vrcp.pop %v945
      %v966 = vrcp.pop %v948
      %v967 = vrcp.pop %v951
      %v968 = vrcp.pop %v954
      %v969 = vrcp.pop %v957
      %v970 = vrcp.pop %v960
      %v971 = vrcp.pop %v963
      %v972 = vmul.f32 %v925, %v964
      %v973 = vmul.f32 %v927, %v965
      %v974 = vmul.f32 %v929, %v966
      %v975 = vmul.f32 %v931, %v967
      %v976 = vmul.f32 %v933, %v968
      %v977 = vmul.f32 %v935, %v969
      %v978 = vmul.f32 %v937, %v970
      %v979 = vmul.f32 %v939, %v971
      %v981 = vsel %vm275, %v972, 0
      %983 = vmatprep.subr.mxu0 0.0
      %984 = vmatpush1.msra.mxu0 0.0
      %985 = vmatprep.subr.mxu0 0.0
      %986 = vmatpush1.msra.mxu0 0.0
      %987 = vmatprep.subr.mxu0 0.0
      %988 = vmatpush1.msra.mxu0 0.0
      %989 = vmatprep.subr.mxu0 0.0
      %990 = vmatpush1.msra.mxu0 0.0
      %991 = vmatprep.subr.mxu0 0.0
      %992 = vmatpush1.msra.mxu0 0.0
      %993 = vmatprep.subr.mxu0 0.0
      %994 = vmatpush1.msra.mxu0 0.0
      %995 = vmatprep.subr.mxu0 0.0
      %996 = vmatpush1.msra.mxu0 0.0
      %997 = vmatprep.subr.mxu0 0.0
      %998 = vmatpush1.msra.mxu0 0.0
      %999 = vmatprep.subr.mxu0 0.0
      %1000 = vmatpush1.msra.mxu0 0.0
      %1001 = vmatprep.subr.mxu0 0.0
      %1002 = vmatpush1.msra.mxu0 0.0
      %1003 = vmatprep.subr.mxu0 0.0
      %1004 = vmatpush1.msra.mxu0 0.0
      %1005 = vmatprep.subr.mxu0 0.0
      %1006 = vmatpush1.msra.mxu0 0.0
      %1007 = vmatprep.subr.mxu0 0.0
      %1008 = vmatpush1.msra.mxu0 0.0
      %1009 = vmatprep.subr.mxu0 0.0
      %1010 = vmatpush1.msra.mxu0 0.0
      %1011 = vmatprep.subr.mxu0 0.0
      %1012 = vmatpush1.msra.mxu0 0.0
      %1013 = vmatprep.subr.mxu0 0.0
      %1014 = vmatpush1.msra.mxu0 %v267
      %1015 = vmatprep.subr.mxu0 0.0
      %1016 = vmatpush2.msra.mxu0 0.0
      %1017 = vmatprep.subr.mxu0 0.0
      %1018 = vmatpush2.msra.mxu0 0.0
      %1019 = vmatprep.subr.mxu0 0.0
      %1020 = vmatpush2.msra.mxu0 0.0
      %1021 = vmatprep.subr.mxu0 0.0
      %1022 = vmatpush2.msra.mxu0 0.0
      %1023 = vmatprep.subr.mxu0 0.0
      %1024 = vmatpush2.msra.mxu0 0.0
      %1025 = vmatprep.subr.mxu0 0.0
      %1026 = vmatpush2.msra.mxu0 0.0
      %1027 = vmatprep.subr.mxu0 0.0
      %1028 = vmatpush2.msra.mxu0 0.0
      %1029 = vmatprep.subr.mxu0 0.0
      %1030 = vmatpush2.msra.mxu0 0.0
      %1031 = vmatprep.subr.mxu0 0.0
      %1032 = vmatpush2.msra.mxu0 0.0
      %1033 = vmatprep.subr.mxu0 0.0
      %1034 = vmatpush2.msra.mxu0 0.0
      %1035 = vmatprep.subr.mxu0 0.0
      %1036 = vmatpush2.msra.mxu0 0.0
      %1037 = vmatprep.subr.mxu0 0.0
      %1038 = vmatpush2.msra.mxu0 0.0
      %1039 = vmatprep.subr.mxu0 0.0
      %1040 = vmatpush2.msra.mxu0 0.0
      %1041 = vmatprep.subr.mxu0 0.0
      %1042 = vmatpush2.msra.mxu0 0.0
      %1043 = vmatprep.subr.mxu0 0.0
      %1044 = vmatpush2.msra.mxu0 0.0
      %1045 = vmatprep.subr.mxu0 0.0
      %1046 = vmatpush2.msra.mxu0 0.0
      %1047 = vmatprep.mubr.f32.mxu0 0.0
      %1048 = vmatmul.mubr.f32.gmra.mxu0 %v981
      %v1049 = vpop.f32.mrf.mxu0
      %v1050 = vadd.f32 0.0, %v1049
      %v1051 = vpop.f32.mrf.mxu0
      %1052 = vdwg.mxu0
      %v1054 = vsel %vm275, %v973, 0
      %1056 = vmatprep.subr.mxu0 0.0
      %1057 = vmatpush1.msra.mxu0 0.0
      %1058 = vmatprep.subr.mxu0 0.0
      %1059 = vmatpush1.msra.mxu0 0.0
      %1060 = vmatprep.subr.mxu0 0.0
      %1061 = vmatpush1.msra.mxu0 0.0
      %1062 = vmatprep.subr.mxu0 0.0
      %1063 = vmatpush1.msra.mxu0 0.0
      %1064 = vmatprep.subr.mxu0 0.0
      %1065 = vmatpush1.msra.mxu0 0.0
      %1066 = vmatprep.subr.mxu0 0.0
      %1067 = vmatpush1.msra.mxu0 0.0
      %1068 = vmatprep.subr.mxu0 0.0
      %1069 = vmatpush1.msra.mxu0 0.0
      %1070 = vmatprep.subr.mxu0 0.0
      %1071 = vmatpush1.msra.mxu0 0.0
      %1072 = vmatprep.subr.mxu0 0.0
      %1073 = vmatpush1.msra.mxu0 0.0
      %1074 = vmatprep.subr.mxu0 0.0
      %1075 = vmatpush1.msra.mxu0 0.0
      %1076 = vmatprep.subr.mxu0 0.0
      %1077 = vmatpush1.msra.mxu0 0.0
      %1078 = vmatprep.subr.mxu0 0.0
      %1079 = vmatpush1.msra.mxu0 0.0
      %1080 = vmatprep.subr.mxu0 0.0
      %1081 = vmatpush1.msra.mxu0 0.0
      %1082 = vmatprep.subr.mxu0 0.0
      %1083 = vmatpush1.msra.mxu0 0.0
      %1084 = vmatprep.subr.mxu0 0.0
      %1085 = vmatpush1.msra.mxu0 0.0
      %1086 = vmatprep.subr.mxu0 0.0
      %1087 = vmatpush1.msra.mxu0 %v268
      %1088 = vmatprep.subr.mxu0 0.0
      %1089 = vmatpush2.msra.mxu0 0.0
      %1090 = vmatprep.subr.mxu0 0.0
      %1091 = vmatpush2.msra.mxu0 0.0
      %1092 = vmatprep.subr.mxu0 0.0
      %1093 = vmatpush2.msra.mxu0 0.0
      %1094 = vmatprep.subr.mxu0 0.0
      %1095 = vmatpush2.msra.mxu0 0.0
      %1096 = vmatprep.subr.mxu0 0.0
      %1097 = vmatpush2.msra.mxu0 0.0
      %1098 = vmatprep.subr.mxu0 0.0
      %1099 = vmatpush2.msra.mxu0 0.0
      %1100 = vmatprep.subr.mxu0 0.0
      %1101 = vmatpush2.msra.mxu0 0.0
      %1102 = vmatprep.subr.mxu0 0.0
      %1103 = vmatpush2.msra.mxu0 0.0
      %1104 = vmatprep.subr.mxu0 0.0
      %1105 = vmatpush2.msra.mxu0 0.0
      %1106 = vmatprep.subr.mxu0 0.0
      %1107 = vmatpush2.msra.mxu0 0.0
      %1108 = vmatprep.subr.mxu0 0.0
      %1109 = vmatpush2.msra.mxu0 0.0
      %1110 = vmatprep.subr.mxu0 0.0
      %1111 = vmatpush2.msra.mxu0 0.0
      %1112 = vmatprep.subr.mxu0 0.0
      %1113 = vmatpush2.msra.mxu0 0.0
      %1114 = vmatprep.subr.mxu0 0.0
      %1115 = vmatpush2.msra.mxu0 0.0
      %1116 = vmatprep.subr.mxu0 0.0
      %1117 = vmatpush2.msra.mxu0 0.0
      %1118 = vmatprep.subr.mxu0 0.0
      %1119 = vmatpush2.msra.mxu0 0.0
      %1120 = vmatprep.mubr.f32.mxu0 0.0
      %1121 = vmatmul.mubr.f32.gmra.mxu0 %v1054
      %v1122 = vpop.f32.mrf.mxu0
      %v1123 = vadd.f32 0.0, %v1122
      %v1124 = vpop.f32.mrf.mxu0
      %1125 = vdwg.mxu0
      %v1127 = vsel %vm275, %v974, 0
      %1129 = vmatprep.subr.mxu0 0.0
      %1130 = vmatpush1.msra.mxu0 0.0
      %1131 = vmatprep.subr.mxu0 0.0
      %1132 = vmatpush1.msra.mxu0 0.0
      %1133 = vmatprep.subr.mxu0 0.0
      %1134 = vmatpush1.msra.mxu0 0.0
      %1135 = vmatprep.subr.mxu0 0.0
      %1136 = vmatpush1.msra.mxu0 0.0
      %1137 = vmatprep.subr.mxu0 0.0
      %1138 = vmatpush1.msra.mxu0 0.0
      %1139 = vmatprep.subr.mxu0 0.0
      %1140 = vmatpush1.msra.mxu0 0.0
      %1141 = vmatprep.subr.mxu0 0.0
      %1142 = vmatpush1.msra.mxu0 0.0
      %1143 = vmatprep.subr.mxu0 0.0
      %1144 = vmatpush1.msra.mxu0 0.0
      %1145 = vmatprep.subr.mxu0 0.0
      %1146 = vmatpush1.msra.mxu0 0.0
      %1147 = vmatprep.subr.mxu0 0.0
      %1148 = vmatpush1.msra.mxu0 0.0
      %1149 = vmatprep.subr.mxu0 0.0
      %1150 = vmatpush1.msra.mxu0 0.0
      %1151 = vmatprep.subr.mxu0 0.0
      %1152 = vmatpush1.msra.mxu0 0.0
      %1153 = vmatprep.subr.mxu0 0.0
      %1154 = vmatpush1.msra.mxu0 0.0
      %1155 = vmatprep.subr.mxu0 0.0
      %1156 = vmatpush1.msra.mxu0 0.0
      %1157 = vmatprep.subr.mxu0 0.0
      %1158 = vmatpush1.msra.mxu0 0.0
      %1159 = vmatprep.subr.mxu0 0.0
      %1160 = vmatpush1.msra.mxu0 %v269
      %1161 = vmatprep.subr.mxu0 0.0
      %1162 = vmatpush2.msra.mxu0 0.0
      %1163 = vmatprep.subr.mxu0 0.0
      %1164 = vmatpush2.msra.mxu0 0.0
      %1165 = vmatprep.subr.mxu0 0.0
      %1166 = vmatpush2.msra.mxu0 0.0
      %1167 = vmatprep.subr.mxu0 0.0
      %1168 = vmatpush2.msra.mxu0 0.0
      %1169 = vmatprep.subr.mxu0 0.0
      %1170 = vmatpush2.msra.mxu0 0.0
      %1171 = vmatprep.subr.mxu0 0.0
      %1172 = vmatpush2.msra.mxu0 0.0
      %1173 = vmatprep.subr.mxu0 0.0
      %1174 = vmatpush2.msra.mxu0 0.0
      %1175 = vmatprep.subr.mxu0 0.0
      %1176 = vmatpush2.msra.mxu0 0.0
      %1177 = vmatprep.subr.mxu0 0.0
      %1178 = vmatpush2.msra.mxu0 0.0
      %1179 = vmatprep.subr.mxu0 0.0
      %1180 = vmatpush2.msra.mxu0 0.0
      %1181 = vmatprep.subr.mxu0 0.0
      %1182 = vmatpush2.msra.mxu0 0.0
      %1183 = vmatprep.subr.mxu0 0.0
      %1184 = vmatpush2.msra.mxu0 0.0
      %1185 = vmatprep.subr.mxu0 0.0
      %1186 = vmatpush2.msra.mxu0 0.0
      %1187 = vmatprep.subr.mxu0 0.0
      %1188 = vmatpush2.msra.mxu0 0.0
      %1189 = vmatprep.subr.mxu0 0.0
      %1190 = vmatpush2.msra.mxu0 0.0
      %1191 = vmatprep.subr.mxu0 0.0
      %1192 = vmatpush2.msra.mxu0 0.0
      %1193 = vmatprep.mubr.f32.mxu0 0.0
      %1194 = vmatmul.mubr.f32.gmra.mxu0 %v1127
      %v1195 = vpop.f32.mrf.mxu0
      %v1196 = vadd.f32 0.0, %v1195
      %v1197 = vpop.f32.mrf.mxu0
      %1198 = vdwg.mxu0
      %v1200 = vsel %vm275, %v975, 0
      %1202 = vmatprep.subr.mxu0 0.0
      %1203 = vmatpush1.msra.mxu0 0.0
      %1204 = vmatprep.subr.mxu0 0.0
      %1205 = vmatpush1.msra.mxu0 0.0
      %1206 = vmatprep.subr.mxu0 0.0
      %1207 = vmatpush1.msra.mxu0 0.0
      %1208 = vmatprep.subr.mxu0 0.0
      %1209 = vmatpush1.msra.mxu0 0.0
      %1210 = vmatprep.subr.mxu0 0.0
      %1211 = vmatpush1.msra.mxu0 0.0
      %1212 = vmatprep.subr.mxu0 0.0
      %1213 = vmatpush1.msra.mxu0 0.0
      %1214 = vmatprep.subr.mxu0 0.0
      %1215 = vmatpush1.msra.mxu0 0.0
      %1216 = vmatprep.subr.mxu0 0.0
      %1217 = vmatpush1.msra.mxu0 0.0
      %1218 = vmatprep.subr.mxu0 0.0
      %1219 = vmatpush1.msra.mxu0 0.0
      %1220 = vmatprep.subr.mxu0 0.0
      %1221 = vmatpush1.msra.mxu0 0.0
      %1222 = vmatprep.subr.mxu0 0.0
      %1223 = vmatpush1.msra.mxu0 0.0
      %1224 = vmatprep.subr.mxu0 0.0
      %1225 = vmatpush1.msra.mxu0 0.0
      %1226 = vmatprep.subr.mxu0 0.0
      %1227 = vmatpush1.msra.mxu0 0.0
      %1228 = vmatprep.subr.mxu0 0.0
      %1229 = vmatpush1.msra.mxu0 0.0
      %1230 = vmatprep.subr.mxu0 0.0
      %1231 = vmatpush1.msra.mxu0 0.0
      %1232 = vmatprep.subr.mxu0 0.0
      %1233 = vmatpush1.msra.mxu0 %v270
      %1234 = vmatprep.subr.mxu0 0.0
      %1235 = vmatpush2.msra.mxu0 0.0
      %1236 = vmatprep.subr.mxu0 0.0
      %1237 = vmatpush2.msra.mxu0 0.0
      %1238 = vmatprep.subr.mxu0 0.0
      %1239 = vmatpush2.msra.mxu0 0.0
      %1240 = vmatprep.subr.mxu0 0.0
      %1241 = vmatpush2.msra.mxu0 0.0
      %1242 = vmatprep.subr.mxu0 0.0
      %1243 = vmatpush2.msra.mxu0 0.0
      %1244 = vmatprep.subr.mxu0 0.0
      %1245 = vmatpush2.msra.mxu0 0.0
      %1246 = vmatprep.subr.mxu0 0.0
      %1247 = vmatpush2.msra.mxu0 0.0
      %1248 = vmatprep.subr.mxu0 0.0
      %1249 = vmatpush2.msra.mxu0 0.0
      %1250 = vmatprep.subr.mxu0 0.0
      %1251 = vmatpush2.msra.mxu0 0.0
      %1252 = vmatprep.subr.mxu0 0.0
      %1253 = vmatpush2.msra.mxu0 0.0
      %1254 = vmatprep.subr.mxu0 0.0
      %1255 = vmatpush2.msra.mxu0 0.0
      %1256 = vmatprep.subr.mxu0 0.0
      %1257 = vmatpush2.msra.mxu0 0.0
      %1258 = vmatprep.subr.mxu0 0.0
      %1259 = vmatpush2.msra.mxu0 0.0
      %1260 = vmatprep.subr.mxu0 0.0
      %1261 = vmatpush2.msra.mxu0 0.0
      %1262 = vmatprep.subr.mxu0 0.0
      %1263 = vmatpush2.msra.mxu0 0.0
      %1264 = vmatprep.subr.mxu0 0.0
      %1265 = vmatpush2.msra.mxu0 0.0
      %1266 = vmatprep.mubr.f32.mxu0 0.0
      %1267 = vmatmul.mubr.f32.gmra.mxu0 %v1200
      %v1268 = vpop.f32.mrf.mxu0
      %v1269 = vadd.f32 0.0, %v1268
      %v1270 = vpop.f32.mrf.mxu0
      %1271 = vdwg.mxu0
      %v1273 = vsel %vm275, %v976, 0
      %1275 = vmatprep.subr.mxu0 0.0
      %1276 = vmatpush1.msra.mxu0 0.0
      %1277 = vmatprep.subr.mxu0 0.0
      %1278 = vmatpush1.msra.mxu0 0.0
      %1279 = vmatprep.subr.mxu0 0.0
      %1280 = vmatpush1.msra.mxu0 0.0
      %1281 = vmatprep.subr.mxu0 0.0
      %1282 = vmatpush1.msra.mxu0 0.0
      %1283 = vmatprep.subr.mxu0 0.0
      %1284 = vmatpush1.msra.mxu0 0.0
      %1285 = vmatprep.subr.mxu0 0.0
      %1286 = vmatpush1.msra.mxu0 0.0
      %1287 = vmatprep.subr.mxu0 0.0
      %1288 = vmatpush1.msra.mxu0 0.0
      %1289 = vmatprep.subr.mxu0 0.0
      %1290 = vmatpush1.msra.mxu0 0.0
      %1291 = vmatprep.subr.mxu0 0.0
      %1292 = vmatpush1.msra.mxu0 0.0
      %1293 = vmatprep.subr.mxu0 0.0
      %1294 = vmatpush1.msra.mxu0 0.0
      %1295 = vmatprep.subr.mxu0 0.0
      %1296 = vmatpush1.msra.mxu0 0.0
      %1297 = vmatprep.subr.mxu0 0.0
      %1298 = vmatpush1.msra.mxu0 0.0
      %1299 = vmatprep.subr.mxu0 0.0
      %1300 = vmatpush1.msra.mxu0 0.0
      %1301 = vmatprep.subr.mxu0 0.0
      %1302 = vmatpush1.msra.mxu0 0.0
      %1303 = vmatprep.subr.mxu0 0.0
      %1304 = vmatpush1.msra.mxu0 0.0
      %1305 = vmatprep.subr.mxu0 0.0
      %1306 = vmatpush1.msra.mxu0 %v271
      %1307 = vmatprep.subr.mxu0 0.0
      %1308 = vmatpush2.msra.mxu0 0.0
      %1309 = vmatprep.subr.mxu0 0.0
      %1310 = vmatpush2.msra.mxu0 0.0
      %1311 = vmatprep.subr.mxu0 0.0
      %1312 = vmatpush2.msra.mxu0 0.0
      %1313 = vmatprep.subr.mxu0 0.0
      %1314 = vmatpush2.msra.mxu0 0.0
      %1315 = vmatprep.subr.mxu0 0.0
      %1316 = vmatpush2.msra.mxu0 0.0
      %1317 = vmatprep.subr.mxu0 0.0
      %1318 = vmatpush2.msra.mxu0 0.0
      %1319 = vmatprep.subr.mxu0 0.0
      %1320 = vmatpush2.msra.mxu0 0.0
      %1321 = vmatprep.subr.mxu0 0.0
      %1322 = vmatpush2.msra.mxu0 0.0
      %1323 = vmatprep.subr.mxu0 0.0
      %1324 = vmatpush2.msra.mxu0 0.0
      %1325 = vmatprep.subr.mxu0 0.0
      %1326 = vmatpush2.msra.mxu0 0.0
      %1327 = vmatprep.subr.mxu0 0.0
      %1328 = vmatpush2.msra.mxu0 0.0
      %1329 = vmatprep.subr.mxu0 0.0
      %1330 = vmatpush2.msra.mxu0 0.0
      %1331 = vmatprep.subr.mxu0 0.0
      %1332 = vmatpush2.msra.mxu0 0.0
      %1333 = vmatprep.subr.mxu0 0.0
      %1334 = vmatpush2.msra.mxu0 0.0
      %1335 = vmatprep.subr.mxu0 0.0
      %1336 = vmatpush2.msra.mxu0 0.0
      %1337 = vmatprep.subr.mxu0 0.0
      %1338 = vmatpush2.msra.mxu0 0.0
      %1339 = vmatprep.mubr.f32.mxu0 0.0
      %1340 = vmatmul.mubr.f32.gmra.mxu0 %v1273
      %v1341 = vpop.f32.mrf.mxu0
      %v1342 = vadd.f32 0.0, %v1341
      %v1343 = vpop.f32.mrf.mxu0
      %1344 = vdwg.mxu0
      %v1346 = vsel %vm275, %v977, 0
      %1348 = vmatprep.subr.mxu0 0.0
      %1349 = vmatpush1.msra.mxu0 0.0
      %1350 = vmatprep.subr.mxu0 0.0
      %1351 = vmatpush1.msra.mxu0 0.0
      %1352 = vmatprep.subr.mxu0 0.0
      %1353 = vmatpush1.msra.mxu0 0.0
      %1354 = vmatprep.subr.mxu0 0.0
      %1355 = vmatpush1.msra.mxu0 0.0
      %1356 = vmatprep.subr.mxu0 0.0
      %1357 = vmatpush1.msra.mxu0 0.0
      %1358 = vmatprep.subr.mxu0 0.0
      %1359 = vmatpush1.msra.mxu0 0.0
      %1360 = vmatprep.subr.mxu0 0.0
      %1361 = vmatpush1.msra.mxu0 0.0
      %1362 = vmatprep.subr.mxu0 0.0
      %1363 = vmatpush1.msra.mxu0 0.0
      %1364 = vmatprep.subr.mxu0 0.0
      %1365 = vmatpush1.msra.mxu0 0.0
      %1366 = vmatprep.subr.mxu0 0.0
      %1367 = vmatpush1.msra.mxu0 0.0
      %1368 = vmatprep.subr.mxu0 0.0
      %1369 = vmatpush1.msra.mxu0 0.0
      %1370 = vmatprep.subr.mxu0 0.0
      %1371 = vmatpush1.msra.mxu0 0.0
      %1372 = vmatprep.subr.mxu0 0.0
      %1373 = vmatpush1.msra.mxu0 0.0
      %1374 = vmatprep.subr.mxu0 0.0
      %1375 = vmatpush1.msra.mxu0 0.0
      %1376 = vmatprep.subr.mxu0 0.0
      %1377 = vmatpush1.msra.mxu0 0.0
      %1378 = vmatprep.subr.mxu0 0.0
      %1379 = vmatpush1.msra.mxu0 %v272
      %1380 = vmatprep.subr.mxu0 0.0
      %1381 = vmatpush2.msra.mxu0 0.0
      %1382 = vmatprep.subr.mxu0 0.0
      %1383 = vmatpush2.msra.mxu0 0.0
      %1384 = vmatprep.subr.mxu0 0.0
      %1385 = vmatpush2.msra.mxu0 0.0
      %1386 = vmatprep.subr.mxu0 0.0
      %1387 = vmatpush2.msra.mxu0 0.0
      %1388 = vmatprep.subr.mxu0 0.0
      %1389 = vmatpush2.msra.mxu0 0.0
      %1390 = vmatprep.subr.mxu0 0.0
      %1391 = vmatpush2.msra.mxu0 0.0
      %1392 = vmatprep.subr.mxu0 0.0
      %1393 = vmatpush2.msra.mxu0 0.0
      %1394 = vmatprep.subr.mxu0 0.0
      %1395 = vmatpush2.msra.mxu0 0.0
      %1396 = vmatprep.subr.mxu0 0.0
      %1397 = vmatpush2.msra.mxu0 0.0
      %1398 = vmatprep.subr.mxu0 0.0
      %1399 = vmatpush2.msra.mxu0 0.0
      %1400 = vmatprep.subr.mxu0 0.0
      %1401 = vmatpush2.msra.mxu0 0.0
      %1402 = vmatprep.subr.mxu0 0.0
      %1403 = vmatpush2.msra.mxu0 0.0
      %1404 = vmatprep.subr.mxu0 0.0
      %1405 = vmatpush2.msra.mxu0 0.0
      %1406 = vmatprep.subr.mxu0 0.0
      %1407 = vmatpush2.msra.mxu0 0.0
      %1408 = vmatprep.subr.mxu0 0.0
      %1409 = vmatpush2.msra.mxu0 0.0
      %1410 = vmatprep.subr.mxu0 0.0
      %1411 = vmatpush2.msra.mxu0 0.0
      %1412 = vmatprep.mubr.f32.mxu0 0.0
      %1413 = vmatmul.mubr.f32.gmra.mxu0 %v1346
      %v1414 = vpop.f32.mrf.mxu0
      %v1415 = vadd.f32 0.0, %v1414
      %v1416 = vpop.f32.mrf.mxu0
      %1417 = vdwg.mxu0
      %v1419 = vsel %vm275, %v978, 0
      %1421 = vmatprep.subr.mxu0 0.0
      %1422 = vmatpush1.msra.mxu0 0.0
      %1423 = vmatprep.subr.mxu0 0.0
      %1424 = vmatpush1.msra.mxu0 0.0
      %1425 = vmatprep.subr.mxu0 0.0
      %1426 = vmatpush1.msra.mxu0 0.0
      %1427 = vmatprep.subr.mxu0 0.0
      %1428 = vmatpush1.msra.mxu0 0.0
      %1429 = vmatprep.subr.mxu0 0.0
      %1430 = vmatpush1.msra.mxu0 0.0
      %1431 = vmatprep.subr.mxu0 0.0
      %1432 = vmatpush1.msra.mxu0 0.0
      %1433 = vmatprep.subr.mxu0 0.0
      %1434 = vmatpush1.msra.mxu0 0.0
      %1435 = vmatprep.subr.mxu0 0.0
      %1436 = vmatpush1.msra.mxu0 0.0
      %1437 = vmatprep.subr.mxu0 0.0
      %1438 = vmatpush1.msra.mxu0 0.0
      %1439 = vmatprep.subr.mxu0 0.0
      %1440 = vmatpush1.msra.mxu0 0.0
      %1441 = vmatprep.subr.mxu0 0.0
      %1442 = vmatpush1.msra.mxu0 0.0
      %1443 = vmatprep.subr.mxu0 0.0
      %1444 = vmatpush1.msra.mxu0 0.0
      %1445 = vmatprep.subr.mxu0 0.0
      %1446 = vmatpush1.msra.mxu0 0.0
      %1447 = vmatprep.subr.mxu0 0.0
      %1448 = vmatpush1.msra.mxu0 0.0
      %1449 = vmatprep.subr.mxu0 0.0
      %1450 = vmatpush1.msra.mxu0 0.0
      %1451 = vmatprep.subr.mxu0 0.0
      %1452 = vmatpush1.msra.mxu0 %v273
      %1453 = vmatprep.subr.mxu0 0.0
      %1454 = vmatpush2.msra.mxu0 0.0
      %1455 = vmatprep.subr.mxu0 0.0
      %1456 = vmatpush2.msra.mxu0 0.0
      %1457 = vmatprep.subr.mxu0 0.0
      %1458 = vmatpush2.msra.mxu0 0.0
      %1459 = vmatprep.subr.mxu0 0.0
      %1460 = vmatpush2.msra.mxu0 0.0
      %1461 = vmatprep.subr.mxu0 0.0
      %1462 = vmatpush2.msra.mxu0 0.0
      %1463 = vmatprep.subr.mxu0 0.0
      %1464 = vmatpush2.msra.mxu0 0.0
      %1465 = vmatprep.subr.mxu0 0.0
      %1466 = vmatpush2.msra.mxu0 0.0
      %1467 = vmatprep.subr.mxu0 0.0
      %1468 = vmatpush2.msra.mxu0 0.0
      %1469 = vmatprep.subr.mxu0 0.0
      %1470 = vmatpush2.msra.mxu0 0.0
      %1471 = vmatprep.subr.mxu0 0.0
      %1472 = vmatpush2.msra.mxu0 0.0
      %1473 = vmatprep.subr.mxu0 0.0
      %1474 = vmatpush2.msra.mxu0 0.0
      %1475 = vmatprep.subr.mxu0 0.0
      %1476 = vmatpush2.msra.mxu0 0.0
      %1477 = vmatprep.subr.mxu0 0.0
      %1478 = vmatpush2.msra.mxu0 0.0
      %1479 = vmatprep.subr.mxu0 0.0
      %1480 = vmatpush2.msra.mxu0 0.0
      %1481 = vmatprep.subr.mxu0 0.0
      %1482 = vmatpush2.msra.mxu0 0.0
      %1483 = vmatprep.subr.mxu0 0.0
      %1484 = vmatpush2.msra.mxu0 0.0
      %1485 = vmatprep.mubr.f32.mxu0 0.0
      %1486 = vmatmul.mubr.f32.gmra.mxu0 %v1419
      %v1487 = vpop.f32.mrf.mxu0
      %v1488 = vadd.f32 0.0, %v1487
      %v1489 = vpop.f32.mrf.mxu0
      %1490 = vdwg.mxu0
      %v1492 = vsel %vm275, %v979, 0
      %1494 = vmatprep.subr.mxu0 0.0
      %1495 = vmatpush1.msra.mxu0 0.0
      %1496 = vmatprep.subr.mxu0 0.0
      %1497 = vmatpush1.msra.mxu0 0.0
      %1498 = vmatprep.subr.mxu0 0.0
      %1499 = vmatpush1.msra.mxu0 0.0
      %1500 = vmatprep.subr.mxu0 0.0
      %1501 = vmatpush1.msra.mxu0 0.0
      %1502 = vmatprep.subr.mxu0 0.0
      %1503 = vmatpush1.msra.mxu0 0.0
      %1504 = vmatprep.subr.mxu0 0.0
      %1505 = vmatpush1.msra.mxu0 0.0
      %1506 = vmatprep.subr.mxu0 0.0
      %1507 = vmatpush1.msra.mxu0 0.0
      %1508 = vmatprep.subr.mxu0 0.0
      %1509 = vmatpush1.msra.mxu0 0.0
      %1510 = vmatprep.subr.mxu0 0.0
      %1511 = vmatpush1.msra.mxu0 0.0
      %1512 = vmatprep.subr.mxu0 0.0
      %1513 = vmatpush1.msra.mxu0 0.0
      %1514 = vmatprep.subr.mxu0 0.0
      %1515 = vmatpush1.msra.mxu0 0.0
      %1516 = vmatprep.subr.mxu0 0.0
      %1517 = vmatpush1.msra.mxu0 0.0
      %1518 = vmatprep.subr.mxu0 0.0
      %1519 = vmatpush1.msra.mxu0 0.0
      %1520 = vmatprep.subr.mxu0 0.0
      %1521 = vmatpush1.msra.mxu0 0.0
      %1522 = vmatprep.subr.mxu0 0.0
      %1523 = vmatpush1.msra.mxu0 0.0
      %1524 = vmatprep.subr.mxu0 0.0
      %1525 = vmatpush1.msra.mxu0 %v274
      %1526 = vmatprep.subr.mxu0 0.0
      %1527 = vmatpush2.msra.mxu0 0.0
      %1528 = vmatprep.subr.mxu0 0.0
      %1529 = vmatpush2.msra.mxu0 0.0
      %1530 = vmatprep.subr.mxu0 0.0
      %1531 = vmatpush2.msra.mxu0 0.0
      %1532 = vmatprep.subr.mxu0 0.0
      %1533 = vmatpush2.msra.mxu0 0.0
      %1534 = vmatprep.subr.mxu0 0.0
      %1535 = vmatpush2.msra.mxu0 0.0
      %1536 = vmatprep.subr.mxu0 0.0
      %1537 = vmatpush2.msra.mxu0 0.0
      %1538 = vmatprep.subr.mxu0 0.0
      %1539 = vmatpush2.msra.mxu0 0.0
      %1540 = vmatprep.subr.mxu0 0.0
      %1541 = vmatpush2.msra.mxu0 0.0
      %1542 = vmatprep.subr.mxu0 0.0
      %1543 = vmatpush2.msra.mxu0 0.0
      %1544 = vmatprep.subr.mxu0 0.0
      %1545 = vmatpush2.msra.mxu0 0.0
      %1546 = vmatprep.subr.mxu0 0.0
      %1547 = vmatpush2.msra.mxu0 0.0
      %1548 = vmatprep.subr.mxu0 0.0
      %1549 = vmatpush2.msra.mxu0 0.0
      %1550 = vmatprep.subr.mxu0 0.0
      %1551 = vmatpush2.msra.mxu0 0.0
      %1552 = vmatprep.subr.mxu0 0.0
      %1553 = vmatpush2.msra.mxu0 0.0
      %1554 = vmatprep.subr.mxu0 0.0
      %1555 = vmatpush2.msra.mxu0 0.0
      %1556 = vmatprep.subr.mxu0 0.0
      %1557 = vmatpush2.msra.mxu0 0.0
      %1558 = vmatprep.mubr.f32.mxu0 0.0
      %1559 = vmatmul.mubr.f32.gmra.mxu0 %v1492
      %v1560 = vpop.f32.mrf.mxu0
      %v1561 = vadd.f32 0.0, %v1560
      %v1562 = vpop.f32.mrf.mxu0
      %1563 = vdwg.mxu0
      %1564 = vst.msk [vmem:[%s245] sm:$0xff] %vm275, %v1050
      %1565 = vst.msk [vmem:[%s245 + $0x8] sm:$0xff] %vm275, %v1123
      %1566 = vst.msk [vmem:[%s245 + $0x10] sm:$0xff] %vm275, %v1196
      %1567 = vst.msk [vmem:[%s245 + $0x18] sm:$0xff] %vm275, %v1269
      %1568 = vst.msk [vmem:[%s245 + $0x20] sm:$0xff] %vm275, %v1342
      %1569 = vst.msk [vmem:[%s245 + $0x28] sm:$0xff] %vm275, %v1415
      %1570 = vst.msk [vmem:[%s245 + $0x30] sm:$0xff] %vm275, %v1488
      %1571 = vst.msk [vmem:[%s245 + $0x38] sm:$0xff] %vm275, %v1561
      %1572 = vst.msk [vmem:[%s250] sm:$0xff] %vm275, %v972
      %1573 = vst.msk [vmem:[%s250 + $0x8] sm:$0xff] %vm275, %v973
      %1574 = vst.msk [vmem:[%s250 + $0x10] sm:$0xff] %vm275, %v974
      %1575 = vst.msk [vmem:[%s250 + $0x18] sm:$0xff] %vm275, %v975
      %1576 = vst.msk [vmem:[%s250 + $0x20] sm:$0xff] %vm275, %v976
      %1577 = vst.msk [vmem:[%s250 + $0x28] sm:$0xff] %vm275, %v977
      %1578 = vst.msk [vmem:[%s250 + $0x30] sm:$0xff] %vm275, %v978
      %1579 = vst.msk [vmem:[%s250 + $0x38] sm:$0xff] %vm275, %v979
      %p1580 = scmp.lt.s32.totalorder %s16, 1
      %s1581 = scalar_select %p1580, %s16, 1
      %s1582 = smul.addr %s1581, 8
      %s1583 = smul.addr %s1582, 8
      %s1584 = scalar_lea.vmem %s3, %s1583
      %p1585 = scmp.lt.s32.totalorder %s16, 1
      %s1586 = scalar_select %p1585, %s16, 1
      %s1587 = smul.addr %s1586, 8
      %s1588 = smul.addr %s1587, 8
      %s1589 = scalar_lea.vmem %s4, %s1588
      // Predicated region
      $region33: #{encoder_forward.4} parent=31 // pred_check
        %p1590 = pneg %p112
      $region34: #{encoder_forward.4} parent=31 // pred_check_branch
        %1592 = sbr.rel (%p1590) target = $region36
      $region35: #{encoder_forward.4} parent=31 // pred_region
        _
      $region36: #{encoder_forward.4} parent=31 // pred_fallthru
        _
      // Predicated region
      $region37: #{encoder_forward.4} parent=31 // pred_check
        %p1593 = pneg %p138
      $region38: #{encoder_forward.4} parent=31 // pred_check_branch
        %1595 = sbr.rel (%p1593) target = $region40
      $region39: #{encoder_forward.4} parent=31 // pred_region
        _
      $region40: #{encoder_forward.4} parent=31 // pred_fallthru
        _
    $region32: #{encoder_forward.4} parent=5 // pred_fallthru
      _
    %p1596 = scmp.le.s32.totalorder 2, %s11
    // Predicated region
    $region41: #{encoder_forward.4} parent=5 // pred_check
      %p1597 = pneg %p1596
    $region42: #{encoder_forward.4} parent=5 // pred_check_branch
      %1599 = sbr.rel (%p1597) target = $region44
    $region43: #{encoder_forward.4} parent=5 // pred_region
      %s1600 = ssub.s32 %s11, 2
      // Predicated region
      $region45: #{encoder_forward.4} parent=43 // pred_check
        %p1601 = pneg %p118
      $region46: #{encoder_forward.4} parent=43 // pred_check_branch
        %1603 = sbr.rel (%p1601) target = $region48
      $region47: #{encoder_forward.4} parent=43 // pred_region
        %p1604 = scmp.lt.s32.totalorder %s17, 1
        %s1605 = scalar_select %p1604, %s17, 1
        %s1606 = smul.addr %s1605, 8
        %s1607 = smul.addr %s1606, 8
        %s1608 = scalar_lea.vmem %s3, %s1607
      $region48: #{encoder_forward.4} parent=43 // pred_fallthru
        _
      // Predicated region
      $region49: #{encoder_forward.4} parent=43 // pred_check
        %p1609 = pneg %p144
      $region50: #{encoder_forward.4} parent=43 // pred_check_branch
        %1611 = sbr.rel (%p1609) target = $region52
      $region51: #{encoder_forward.4} parent=43 // pred_region
        %p1612 = scmp.lt.s32.totalorder %s17, 1
        %s1613 = scalar_select %p1612, %s17, 1
        %s1614 = smul.addr %s1613, 8
        %s1615 = smul.addr %s1614, 8
        %s1616 = scalar_lea.vmem %s4, %s1615
      $region52: #{encoder_forward.4} parent=43 // pred_fallthru
        _
    $region44: #{encoder_forward.4} parent=5 // pred_fallthru
      _
  $region6: #{encoder_forward.4} parent=0 // loop_footer
    %s15 = sadd.s32 1, %s11
  $region7: #{encoder_forward.4} parent=0 // loop_footer_branch
    %10 = sbr.rel target = $region3
  $region8: #{encoder_forward.4} parent=0 // loop_exit
    _

</llo_original>
